<compile_context>
chip_gen: v7x
topology: tpu7x:2x2x1
jax: 0.10.0
libtpu: 0.0.40
codegen_flags: <defaults>
</compile_context>

<pallas_src>
import math
from functools import partial

import jax
import jax.numpy as jnp
from jax.experimental import pallas as pl
from jax.experimental.pallas import tpu as pltpu


def _tensorcores_per_chip() -> int:
    """Best-effort count of TensorCores a 'parallel' grid axis can use per chip."""
    try:
        kind = jax.devices()[0].device_kind.lower()
    except Exception:
        return 1
    if "lite" in kind or "v5e" in kind or "v6e" in kind:
        return 1                      # single-TC inference chips
    if any(tag in kind for tag in ("v7", "7x", "v4", "v5p")):
        return 2                      # v7x: 2 TCs/chip; v4/v5p: megacore
    return 1


def _spconv_kernel(x_ref, w_ref, b_ref, o_ref, *,
                   Cin, Cout, r, kH, kW, Hout, Wout):
    # x_ref: (Bblk, Cin, H, W)   VMEM input block (raw, un-repeated)
    # w_ref: (Cout*r*Cin*kH*kW,) SMEM raw conv weights (row-major flatten)
    # b_ref: (Cout*r,)           SMEM raw conv bias
    # o_ref: (Bblk, Cout, Hout, Wout*r)  final shuffled output block
    Wr = Wout * r
    Bblk = o_ref.shape[0]

    # Sub-pixel scatter matrices: S_ri[w, w*r + ri] = 1.  Built in-registers once
    # per grid step; the ri->lane interleave then rides the otherwise-idle MXU.
    wrow = jax.lax.broadcasted_iota(jnp.int32, (Wout, Wr), 0)
    jcol = jax.lax.broadcasted_iota(jnp.int32, (Wout, Wr), 1)
    scatters = [(jcol == wrow * r + ri).astype(jnp.float32) for ri in range(r)]

    def per_batch(b):
        xb = x_ref[b]                                       # (Cin, H, W) into vregs
        # r*Cout accumulators of shape (Hout, Wout); bias folded into the init.
        acc = [[jnp.full((Hout, Wout), b_ref[ri * Cout + co], jnp.float32)
                for co in range(Cout)] for ri in range(r)]
        for kh in range(kH):
            # Hoisted: one sublane-offset window per kh (not one per tap/ci).
            x_kh = xb[:, kh:kh + Hout, :]                   # (Cin, Hout, W)
            for kw in range(kW):
                for ci in range(Cin):
                    xt = x_kh[ci, :, kw:kw + Wout]          # (Hout, Wout) lane slice
                    for ri in range(r):
                        for co in range(Cout):
                            widx = ((((ri * Cout + co) * Cin + ci) * kH + kh)
                                    * kW + kw)
                            acc[ri][co] = acc[ri][co] + w_ref[widx] * xt
        # Epilogue: out[co, h, w*r + ri] = acc[ri][co][h, w] via 0/1 scatter matmuls.
        outs = []
        for co in range(Cout):
            out_co = jnp.dot(acc[0][co], scatters[0],
                             preferred_element_type=jnp.float32)
            for ri in range(1, r):
                out_co = out_co + jnp.dot(acc[ri][co], scatters[ri],
                                          preferred_element_type=jnp.float32)
            outs.append(out_co)
        o_ref[b] = jnp.stack(outs, axis=0).astype(o_ref.dtype)

    if Bblk == 1:
        per_batch(0)
    else:
        # Non-unrolled loop over the folded batch block bounds live ranges.
        pl.loop(0, Bblk)(per_batch)


def sp_conv_transpose2d(x_nchw, weight, bias, r):
    """x_nchw: (B, Cin, H, W); weight: (Cout*r, Cin, kH, kW); bias: (Cout*r,)."""
    B, Cin, H, W = x_nchw.shape
    Cr, _, kH, kW = weight.shape
    Cout = Cr // r
    Hout, Wout = H - kH + 1, W - kW + 1
    Wr = Wout * r

    # Free row-major bitcast; all re-layout now happens inside the kernel.
    w_flat = weight.reshape(-1)

    # Generation-gated grid: fold B on single-TC parts, keep a parallel B-grid
    # where a second TensorCore (v7x) / megacore can pick it up.
    b_block = 1 if (_tensorcores_per_chip() > 1 and B > 1) else B
    grid = (B // b_block,)

    kernel = partial(_spconv_kernel, Cin=Cin, Cout=Cout, r=r,
                     kH=kH, kW=kW, Hout=Hout, Wout=Wout)
    return pl.pallas_call(
        kernel,
        out_shape=jax.ShapeDtypeStruct((B, Cout, Hout, Wr), x_nchw.dtype),
        grid=grid,
        in_specs=[
            pl.BlockSpec((b_block, Cin, H, W), lambda i: (i, 0, 0, 0)),
            pl.BlockSpec(memory_space=pltpu.MemorySpace.SMEM),   # raw weights
            pl.BlockSpec(memory_space=pltpu.MemorySpace.SMEM),   # raw bias
        ],
        out_specs=pl.BlockSpec((b_block, Cout, Hout, Wr), lambda i: (i, 0, 0, 0)),
        compiler_params=pltpu.CompilerParams(dimension_semantics=("parallel",)),
    )(x_nchw, w_flat, bias)


def _reference(x_nchw, weight, bias, r):
    """Pure-JAX reference replicating the PyTorch forward (NCHW conv + shuffle)."""
    y = jax.lax.conv_general_dilated(
        x_nchw, weight, window_strides=(1, 1), padding="VALID",
        dimension_numbers=("NCHW", "OIHW", "NCHW"),
        precision=jax.lax.Precision.HIGHEST)
    y = y + bias[None, :, None, None]
    B, Cr, Hc, Wc = y.shape
    Cout = Cr // r
    y = y.reshape(B, r, Cout, Hc, Wc)
    y = jnp.transpose(y, (0, 2, 3, 4, 1))
    return y.reshape(B, Cout, Hc, Wc * r)


if __name__ == "__main__":
    # Module config
    in_channels, out_channels, kernel_size, r = 4, 4, (3, 3), 2
    B, H, W = 2, 16, 16
    kH, kW = kernel_size
    Cr = out_channels * r

    key = jax.random.PRNGKey(0)
    kx, kwt, kb = jax.random.split(key, 3)

    # Deterministic PyTorch-style (kaiming-uniform-ish) init for Conv2d params.
    fan_in = in_channels * kH * kW
    bound = math.sqrt(1.0 / fan_in)
    weight = jax.random.uniform(kwt, (Cr, in_channels, kH, kW),
                                jnp.float32, -bound, bound)
    bias = jax.random.uniform(kb, (Cr,), jnp.float32, -bound, bound)
    x = jax.random.normal(kx, (B, in_channels, H, W), jnp.float32)

    fwd = jax.jit(sp_conv_transpose2d, static_argnums=(3,))
    out = jax.block_until_ready(fwd(x, weight, bias, r))

    ref = _reference(x, weight, bias, r)
    assert out.shape == (B, out_channels, H - kH + 1, (W - kW + 1) * r), out.shape
    max_err = float(jnp.max(jnp.abs(out - ref)))
    assert jnp.allclose(out, ref, atol=1e-4, rtol=1e-4), max_err

    print("KERNEL_OK")
</pallas_src>

<mosaic_0001>
module attributes {stable_mosaic.version = 11 : i64} {
  func.func @_spconv_kernel(%arg0: i32, %arg1: memref<2x4x16x16xf32, #tpu.memory_space<vmem>>, %arg2: memref<288xf32, #tpu.memory_space<smem>>, %arg3: memref<8xf32, #tpu.memory_space<smem>>, %arg4: memref<2x4x14x28xf32, #tpu.memory_space<vmem>>) attributes {dimension_semantics = [#tpu.dimension_semantics<parallel>], iteration_bounds = array<i64: 1>, scalar_prefetch = 0 : i64, scratch_operands = 0 : i64, tpu.core_type = #tpu.core_type<tc>, window_params = [{transform_indices = @transform_0, window_bounds = array<i64: 2, 4, 16, 16>}, {transform_indices = @transform_1, window_bounds = array<i64: 288>}, {transform_indices = @transform_2, window_bounds = array<i64: 8>}, {transform_indices = @transform_3, window_bounds = array<i64: 2, 4, 14, 28>}]} {
    %0 = tpu.iota {dimensions = array<i32: 0>} : vector<14x28xi32>
    %1 = tpu.iota {dimensions = array<i32: 1>} : vector<14x28xi32>
    %c2_i32 = arith.constant 2 : i32
    %2 = vector.broadcast %c2_i32 : i32 to vector<14x28xi32>
    %3 = arith.muli %0, %2 : vector<14x28xi32>
    %c0_i32 = arith.constant 0 : i32
    %4 = vector.broadcast %c0_i32 : i32 to vector<14x28xi32>
    %5 = arith.addi %3, %4 : vector<14x28xi32>
    %6 = arith.cmpi eq, %1, %5 : vector<14x28xi32>
    %7 = arith.extui %6 : vector<14x28xi1> to vector<14x28xi32>
    %8 = arith.sitofp %7 : vector<14x28xi32> to vector<14x28xf32>
    %c2_i32_0 = arith.constant 2 : i32
    %9 = vector.broadcast %c2_i32_0 : i32 to vector<14x28xi32>
    %10 = arith.muli %0, %9 : vector<14x28xi32>
    %c1_i32 = arith.constant 1 : i32
    %11 = vector.broadcast %c1_i32 : i32 to vector<14x28xi32>
    %12 = arith.addi %10, %11 : vector<14x28xi32>
    %13 = arith.cmpi eq, %1, %12 : vector<14x28xi32>
    %14 = arith.extui %13 : vector<14x28xi1> to vector<14x28xi32>
    %15 = arith.sitofp %14 : vector<14x28xi32> to vector<14x28xf32>
    %c0_i32_1 = arith.constant 0 : i32
    %c2_i32_2 = arith.constant 2 : i32
    %16 = arith.addi %c0_i32_1, %c2_i32_2 : i32
    %c1_i32_3 = arith.constant 1 : i32
    scf.for %arg5 = %c0_i32_1 to %16 step %c1_i32_3  : i32 {
      %c1_i32_5 = arith.constant 1 : i32
      %17 = arith.muli %arg5, %c1_i32_5 : i32
      %c0_i32_6 = arith.constant 0 : i32
      %18 = arith.addi %c0_i32_6, %17 : i32
      %19 = arith.index_cast %18 : i32 to index
      %c0 = arith.constant 0 : index
      %c0_7 = arith.constant 0 : index
      %c0_8 = arith.constant 0 : index
      %20 = vector.load %arg1[%19, %c0, %c0_7, %c0_8] : memref<2x4x16x16xf32, #tpu.memory_space<vmem>>, vector<1x4x16x16xf32>
      %21 = vector.shape_cast %20 : vector<1x4x16x16xf32> to vector<4x16x16xf32>
      %c0_9 = arith.constant 0 : index
      %22 = memref.load %arg3[%c0_9] : memref<8xf32, #tpu.memory_space<smem>>
      %23 = vector.broadcast %22 : f32 to vector<14x14xf32>
      %c1 = arith.constant 1 : index
      %24 = memref.load %arg3[%c1] : memref<8xf32, #tpu.memory_space<smem>>
      %25 = vector.broadcast %24 : f32 to vector<14x14xf32>
      %c2 = arith.constant 2 : index
      %26 = memref.load %arg3[%c2] : memref<8xf32, #tpu.memory_space<smem>>
      %27 = vector.broadcast %26 : f32 to vector<14x14xf32>
      %c3 = arith.constant 3 : index
      %28 = memref.load %arg3[%c3] : memref<8xf32, #tpu.memory_space<smem>>
      %29 = vector.broadcast %28 : f32 to vector<14x14xf32>
      %c4 = arith.constant 4 : index
      %30 = memref.load %arg3[%c4] : memref<8xf32, #tpu.memory_space<smem>>
      %31 = vector.broadcast %30 : f32 to vector<14x14xf32>
      %c5 = arith.constant 5 : index
      %32 = memref.load %arg3[%c5] : memref<8xf32, #tpu.memory_space<smem>>
      %33 = vector.broadcast %32 : f32 to vector<14x14xf32>
      %c6 = arith.constant 6 : index
      %34 = memref.load %arg3[%c6] : memref<8xf32, #tpu.memory_space<smem>>
      %35 = vector.broadcast %34 : f32 to vector<14x14xf32>
      %c7 = arith.constant 7 : index
      %36 = memref.load %arg3[%c7] : memref<8xf32, #tpu.memory_space<smem>>
      %37 = vector.broadcast %36 : f32 to vector<14x14xf32>
      %38 = vector.extract_strided_slice %21 {offsets = [0, 0, 0], sizes = [4, 14, 16], strides = [1, 1, 1]} : vector<4x16x16xf32> to vector<4x14x16xf32>
      %39 = vector.extract_strided_slice %38 {offsets = [0, 0, 0], sizes = [1, 14, 14], strides = [1, 1, 1]} : vector<4x14x16xf32> to vector<1x14x14xf32>
      %40 = vector.shape_cast %39 : vector<1x14x14xf32> to vector<14x14xf32>
      %c0_10 = arith.constant 0 : index
      %41 = memref.load %arg2[%c0_10] : memref<288xf32, #tpu.memory_space<smem>>
      %42 = vector.broadcast %41 : f32 to vector<14x14xf32>
      %43 = arith.mulf %42, %40 : vector<14x14xf32>
      %44 = arith.addf %23, %43 : vector<14x14xf32>
      %c36 = arith.constant 36 : index
      %45 = memref.load %arg2[%c36] : memref<288xf32, #tpu.memory_space<smem>>
      %46 = vector.broadcast %45 : f32 to vector<14x14xf32>
      %47 = arith.mulf %46, %40 : vector<14x14xf32>
      %48 = arith.addf %25, %47 : vector<14x14xf32>
      %c72 = arith.constant 72 : index
      %49 = memref.load %arg2[%c72] : memref<288xf32, #tpu.memory_space<smem>>
      %50 = vector.broadcast %49 : f32 to vector<14x14xf32>
      %51 = arith.mulf %50, %40 : vector<14x14xf32>
      %52 = arith.addf %27, %51 : vector<14x14xf32>
      %c108 = arith.constant 108 : index
      %53 = memref.load %arg2[%c108] : memref<288xf32, #tpu.memory_space<smem>>
      %54 = vector.broadcast %53 : f32 to vector<14x14xf32>
      %55 = arith.mulf %54, %40 : vector<14x14xf32>
      %56 = arith.addf %29, %55 : vector<14x14xf32>
      %c144 = arith.constant 144 : index
      %57 = memref.load %arg2[%c144] : memref<288xf32, #tpu.memory_space<smem>>
      %58 = vector.broadcast %57 : f32 to vector<14x14xf32>
      %59 = arith.mulf %58, %40 : vector<14x14xf32>
      %60 = arith.addf %31, %59 : vector<14x14xf32>
      %c180 = arith.constant 180 : index
      %61 = memref.load %arg2[%c180] : memref<288xf32, #tpu.memory_space<smem>>
      %62 = vector.broadcast %61 : f32 to vector<14x14xf32>
      %63 = arith.mulf %62, %40 : vector<14x14xf32>
      %64 = arith.addf %33, %63 : vector<14x14xf32>
      %c216 = arith.constant 216 : index
      %65 = memref.load %arg2[%c216] : memref<288xf32, #tpu.memory_space<smem>>
      %66 = vector.broadcast %65 : f32 to vector<14x14xf32>
      %67 = arith.mulf %66, %40 : vector<14x14xf32>
      %68 = arith.addf %35, %67 : vector<14x14xf32>
      %c252 = arith.constant 252 : index
      %69 = memref.load %arg2[%c252] : memref<288xf32, #tpu.memory_space<smem>>
      %70 = vector.broadcast %69 : f32 to vector<14x14xf32>
      %71 = arith.mulf %70, %40 : vector<14x14xf32>
      %72 = arith.addf %37, %71 : vector<14x14xf32>
      %73 = vector.extract_strided_slice %38 {offsets = [1, 0, 0], sizes = [1, 14, 14], strides = [1, 1, 1]} : vector<4x14x16xf32> to vector<1x14x14xf32>
      %74 = vector.shape_cast %73 : vector<1x14x14xf32> to vector<14x14xf32>
      %c9 = arith.constant 9 : index
      %75 = memref.load %arg2[%c9] : memref<288xf32, #tpu.memory_space<smem>>
      %76 = vector.broadcast %75 : f32 to vector<14x14xf32>
      %77 = arith.mulf %76, %74 : vector<14x14xf32>
      %78 = arith.addf %44, %77 : vector<14x14xf32>
      %c45 = arith.constant 45 : index
      %79 = memref.load %arg2[%c45] : memref<288xf32, #tpu.memory_space<smem>>
      %80 = vector.broadcast %79 : f32 to vector<14x14xf32>
      %81 = arith.mulf %80, %74 : vector<14x14xf32>
      %82 = arith.addf %48, %81 : vector<14x14xf32>
      %c81 = arith.constant 81 : index
      %83 = memref.load %arg2[%c81] : memref<288xf32, #tpu.memory_space<smem>>
      %84 = vector.broadcast %83 : f32 to vector<14x14xf32>
      %85 = arith.mulf %84, %74 : vector<14x14xf32>
      %86 = arith.addf %52, %85 : vector<14x14xf32>
      %c117 = arith.constant 117 : index
      %87 = memref.load %arg2[%c117] : memref<288xf32, #tpu.memory_space<smem>>
      %88 = vector.broadcast %87 : f32 to vector<14x14xf32>
      %89 = arith.mulf %88, %74 : vector<14x14xf32>
      %90 = arith.addf %56, %89 : vector<14x14xf32>
      %c153 = arith.constant 153 : index
      %91 = memref.load %arg2[%c153] : memref<288xf32, #tpu.memory_space<smem>>
      %92 = vector.broadcast %91 : f32 to vector<14x14xf32>
      %93 = arith.mulf %92, %74 : vector<14x14xf32>
      %94 = arith.addf %60, %93 : vector<14x14xf32>
      %c189 = arith.constant 189 : index
      %95 = memref.load %arg2[%c189] : memref<288xf32, #tpu.memory_space<smem>>
      %96 = vector.broadcast %95 : f32 to vector<14x14xf32>
      %97 = arith.mulf %96, %74 : vector<14x14xf32>
      %98 = arith.addf %64, %97 : vector<14x14xf32>
      %c225 = arith.constant 225 : index
      %99 = memref.load %arg2[%c225] : memref<288xf32, #tpu.memory_space<smem>>
      %100 = vector.broadcast %99 : f32 to vector<14x14xf32>
      %101 = arith.mulf %100, %74 : vector<14x14xf32>
      %102 = arith.addf %68, %101 : vector<14x14xf32>
      %c261 = arith.constant 261 : index
      %103 = memref.load %arg2[%c261] : memref<288xf32, #tpu.memory_space<smem>>
      %104 = vector.broadcast %103 : f32 to vector<14x14xf32>
      %105 = arith.mulf %104, %74 : vector<14x14xf32>
      %106 = arith.addf %72, %105 : vector<14x14xf32>
      %107 = vector.extract_strided_slice %38 {offsets = [2, 0, 0], sizes = [1, 14, 14], strides = [1, 1, 1]} : vector<4x14x16xf32> to vector<1x14x14xf32>
      %108 = vector.shape_cast %107 : vector<1x14x14xf32> to vector<14x14xf32>
      %c18 = arith.constant 18 : index
      %109 = memref.load %arg2[%c18] : memref<288xf32, #tpu.memory_space<smem>>
      %110 = vector.broadcast %109 : f32 to vector<14x14xf32>
      %111 = arith.mulf %110, %108 : vector<14x14xf32>
      %112 = arith.addf %78, %111 : vector<14x14xf32>
      %c54 = arith.constant 54 : index
      %113 = memref.load %arg2[%c54] : memref<288xf32, #tpu.memory_space<smem>>
      %114 = vector.broadcast %113 : f32 to vector<14x14xf32>
      %115 = arith.mulf %114, %108 : vector<14x14xf32>
      %116 = arith.addf %82, %115 : vector<14x14xf32>
      %c90 = arith.constant 90 : index
      %117 = memref.load %arg2[%c90] : memref<288xf32, #tpu.memory_space<smem>>
      %118 = vector.broadcast %117 : f32 to vector<14x14xf32>
      %119 = arith.mulf %118, %108 : vector<14x14xf32>
      %120 = arith.addf %86, %119 : vector<14x14xf32>
      %c126 = arith.constant 126 : index
      %121 = memref.load %arg2[%c126] : memref<288xf32, #tpu.memory_space<smem>>
      %122 = vector.broadcast %121 : f32 to vector<14x14xf32>
      %123 = arith.mulf %122, %108 : vector<14x14xf32>
      %124 = arith.addf %90, %123 : vector<14x14xf32>
      %c162 = arith.constant 162 : index
      %125 = memref.load %arg2[%c162] : memref<288xf32, #tpu.memory_space<smem>>
      %126 = vector.broadcast %125 : f32 to vector<14x14xf32>
      %127 = arith.mulf %126, %108 : vector<14x14xf32>
      %128 = arith.addf %94, %127 : vector<14x14xf32>
      %c198 = arith.constant 198 : index
      %129 = memref.load %arg2[%c198] : memref<288xf32, #tpu.memory_space<smem>>
      %130 = vector.broadcast %129 : f32 to vector<14x14xf32>
      %131 = arith.mulf %130, %108 : vector<14x14xf32>
      %132 = arith.addf %98, %131 : vector<14x14xf32>
      %c234 = arith.constant 234 : index
      %133 = memref.load %arg2[%c234] : memref<288xf32, #tpu.memory_space<smem>>
      %134 = vector.broadcast %133 : f32 to vector<14x14xf32>
      %135 = arith.mulf %134, %108 : vector<14x14xf32>
      %136 = arith.addf %102, %135 : vector<14x14xf32>
      %c270 = arith.constant 270 : index
      %137 = memref.load %arg2[%c270] : memref<288xf32, #tpu.memory_space<smem>>
      %138 = vector.broadcast %137 : f32 to vector<14x14xf32>
      %139 = arith.mulf %138, %108 : vector<14x14xf32>
      %140 = arith.addf %106, %139 : vector<14x14xf32>
      %141 = vector.extract_strided_slice %38 {offsets = [3, 0, 0], sizes = [1, 14, 14], strides = [1, 1, 1]} : vector<4x14x16xf32> to vector<1x14x14xf32>
      %142 = vector.shape_cast %141 : vector<1x14x14xf32> to vector<14x14xf32>
      %c27 = arith.constant 27 : index
      %143 = memref.load %arg2[%c27] : memref<288xf32, #tpu.memory_space<smem>>
      %144 = vector.broadcast %143 : f32 to vector<14x14xf32>
      %145 = arith.mulf %144, %142 : vector<14x14xf32>
      %146 = arith.addf %112, %145 : vector<14x14xf32>
      %c63 = arith.constant 63 : index
      %147 = memref.load %arg2[%c63] : memref<288xf32, #tpu.memory_space<smem>>
      %148 = vector.broadcast %147 : f32 to vector<14x14xf32>
      %149 = arith.mulf %148, %142 : vector<14x14xf32>
      %150 = arith.addf %116, %149 : vector<14x14xf32>
      %c99 = arith.constant 99 : index
      %151 = memref.load %arg2[%c99] : memref<288xf32, #tpu.memory_space<smem>>
      %152 = vector.broadcast %151 : f32 to vector<14x14xf32>
      %153 = arith.mulf %152, %142 : vector<14x14xf32>
      %154 = arith.addf %120, %153 : vector<14x14xf32>
      %c135 = arith.constant 135 : index
      %155 = memref.load %arg2[%c135] : memref<288xf32, #tpu.memory_space<smem>>
      %156 = vector.broadcast %155 : f32 to vector<14x14xf32>
      %157 = arith.mulf %156, %142 : vector<14x14xf32>
      %158 = arith.addf %124, %157 : vector<14x14xf32>
      %c171 = arith.constant 171 : index
      %159 = memref.load %arg2[%c171] : memref<288xf32, #tpu.memory_space<smem>>
      %160 = vector.broadcast %159 : f32 to vector<14x14xf32>
      %161 = arith.mulf %160, %142 : vector<14x14xf32>
      %162 = arith.addf %128, %161 : vector<14x14xf32>
      %c207 = arith.constant 207 : index
      %163 = memref.load %arg2[%c207] : memref<288xf32, #tpu.memory_space<smem>>
      %164 = vector.broadcast %163 : f32 to vector<14x14xf32>
      %165 = arith.mulf %164, %142 : vector<14x14xf32>
      %166 = arith.addf %132, %165 : vector<14x14xf32>
      %c243 = arith.constant 243 : index
      %167 = memref.load %arg2[%c243] : memref<288xf32, #tpu.memory_space<smem>>
      %168 = vector.broadcast %167 : f32 to vector<14x14xf32>
      %169 = arith.mulf %168, %142 : vector<14x14xf32>
      %170 = arith.addf %136, %169 : vector<14x14xf32>
      %c279 = arith.constant 279 : index
      %171 = memref.load %arg2[%c279] : memref<288xf32, #tpu.memory_space<smem>>
      %172 = vector.broadcast %171 : f32 to vector<14x14xf32>
      %173 = arith.mulf %172, %142 : vector<14x14xf32>
      %174 = arith.addf %140, %173 : vector<14x14xf32>
      %175 = vector.extract_strided_slice %38 {offsets = [0, 0, 1], sizes = [1, 14, 14], strides = [1, 1, 1]} : vector<4x14x16xf32> to vector<1x14x14xf32>
      %176 = vector.shape_cast %175 : vector<1x14x14xf32> to vector<14x14xf32>
      %c1_11 = arith.constant 1 : index
      %177 = memref.load %arg2[%c1_11] : memref<288xf32, #tpu.memory_space<smem>>
      %178 = vector.broadcast %177 : f32 to vector<14x14xf32>
      %179 = arith.mulf %178, %176 : vector<14x14xf32>
      %180 = arith.addf %146, %179 : vector<14x14xf32>
      %c37 = arith.constant 37 : index
      %181 = memref.load %arg2[%c37] : memref<288xf32, #tpu.memory_space<smem>>
      %182 = vector.broadcast %181 : f32 to vector<14x14xf32>
      %183 = arith.mulf %182, %176 : vector<14x14xf32>
      %184 = arith.addf %150, %183 : vector<14x14xf32>
      %c73 = arith.constant 73 : index
      %185 = memref.load %arg2[%c73] : memref<288xf32, #tpu.memory_space<smem>>
      %186 = vector.broadcast %185 : f32 to vector<14x14xf32>
      %187 = arith.mulf %186, %176 : vector<14x14xf32>
      %188 = arith.addf %154, %187 : vector<14x14xf32>
      %c109 = arith.constant 109 : index
      %189 = memref.load %arg2[%c109] : memref<288xf32, #tpu.memory_space<smem>>
      %190 = vector.broadcast %189 : f32 to vector<14x14xf32>
      %191 = arith.mulf %190, %176 : vector<14x14xf32>
      %192 = arith.addf %158, %191 : vector<14x14xf32>
      %c145 = arith.constant 145 : index
      %193 = memref.load %arg2[%c145] : memref<288xf32, #tpu.memory_space<smem>>
      %194 = vector.broadcast %193 : f32 to vector<14x14xf32>
      %195 = arith.mulf %194, %176 : vector<14x14xf32>
      %196 = arith.addf %162, %195 : vector<14x14xf32>
      %c181 = arith.constant 181 : index
      %197 = memref.load %arg2[%c181] : memref<288xf32, #tpu.memory_space<smem>>
      %198 = vector.broadcast %197 : f32 to vector<14x14xf32>
      %199 = arith.mulf %198, %176 : vector<14x14xf32>
      %200 = arith.addf %166, %199 : vector<14x14xf32>
      %c217 = arith.constant 217 : index
      %201 = memref.load %arg2[%c217] : memref<288xf32, #tpu.memory_space<smem>>
      %202 = vector.broadcast %201 : f32 to vector<14x14xf32>
      %203 = arith.mulf %202, %176 : vector<14x14xf32>
      %204 = arith.addf %170, %203 : vector<14x14xf32>
      %c253 = arith.constant 253 : index
      %205 = memref.load %arg2[%c253] : memref<288xf32, #tpu.memory_space<smem>>
      %206 = vector.broadcast %205 : f32 to vector<14x14xf32>
      %207 = arith.mulf %206, %176 : vector<14x14xf32>
      %208 = arith.addf %174, %207 : vector<14x14xf32>
      %209 = vector.extract_strided_slice %38 {offsets = [1, 0, 1], sizes = [1, 14, 14], strides = [1, 1, 1]} : vector<4x14x16xf32> to vector<1x14x14xf32>
      %210 = vector.shape_cast %209 : vector<1x14x14xf32> to vector<14x14xf32>
      %c10 = arith.constant 10 : index
      %211 = memref.load %arg2[%c10] : memref<288xf32, #tpu.memory_space<smem>>
      %212 = vector.broadcast %211 : f32 to vector<14x14xf32>
      %213 = arith.mulf %212, %210 : vector<14x14xf32>
      %214 = arith.addf %180, %213 : vector<14x14xf32>
      %c46 = arith.constant 46 : index
      %215 = memref.load %arg2[%c46] : memref<288xf32, #tpu.memory_space<smem>>
      %216 = vector.broadcast %215 : f32 to vector<14x14xf32>
      %217 = arith.mulf %216, %210 : vector<14x14xf32>
      %218 = arith.addf %184, %217 : vector<14x14xf32>
      %c82 = arith.constant 82 : index
      %219 = memref.load %arg2[%c82] : memref<288xf32, #tpu.memory_space<smem>>
      %220 = vector.broadcast %219 : f32 to vector<14x14xf32>
      %221 = arith.mulf %220, %210 : vector<14x14xf32>
      %222 = arith.addf %188, %221 : vector<14x14xf32>
      %c118 = arith.constant 118 : index
      %223 = memref.load %arg2[%c118] : memref<288xf32, #tpu.memory_space<smem>>
      %224 = vector.broadcast %223 : f32 to vector<14x14xf32>
      %225 = arith.mulf %224, %210 : vector<14x14xf32>
      %226 = arith.addf %192, %225 : vector<14x14xf32>
      %c154 = arith.constant 154 : index
      %227 = memref.load %arg2[%c154] : memref<288xf32, #tpu.memory_space<smem>>
      %228 = vector.broadcast %227 : f32 to vector<14x14xf32>
      %229 = arith.mulf %228, %210 : vector<14x14xf32>
      %230 = arith.addf %196, %229 : vector<14x14xf32>
      %c190 = arith.constant 190 : index
      %231 = memref.load %arg2[%c190] : memref<288xf32, #tpu.memory_space<smem>>
      %232 = vector.broadcast %231 : f32 to vector<14x14xf32>
      %233 = arith.mulf %232, %210 : vector<14x14xf32>
      %234 = arith.addf %200, %233 : vector<14x14xf32>
      %c226 = arith.constant 226 : index
      %235 = memref.load %arg2[%c226] : memref<288xf32, #tpu.memory_space<smem>>
      %236 = vector.broadcast %235 : f32 to vector<14x14xf32>
      %237 = arith.mulf %236, %210 : vector<14x14xf32>
      %238 = arith.addf %204, %237 : vector<14x14xf32>
      %c262 = arith.constant 262 : index
      %239 = memref.load %arg2[%c262] : memref<288xf32, #tpu.memory_space<smem>>
      %240 = vector.broadcast %239 : f32 to vector<14x14xf32>
      %241 = arith.mulf %240, %210 : vector<14x14xf32>
      %242 = arith.addf %208, %241 : vector<14x14xf32>
      %243 = vector.extract_strided_slice %38 {offsets = [2, 0, 1], sizes = [1, 14, 14], strides = [1, 1, 1]} : vector<4x14x16xf32> to vector<1x14x14xf32>
      %244 = vector.shape_cast %243 : vector<1x14x14xf32> to vector<14x14xf32>
      %c19 = arith.constant 19 : index
      %245 = memref.load %arg2[%c19] : memref<288xf32, #tpu.memory_space<smem>>
      %246 = vector.broadcast %245 : f32 to vector<14x14xf32>
      %247 = arith.mulf %246, %244 : vector<14x14xf32>
      %248 = arith.addf %214, %247 : vector<14x14xf32>
      %c55 = arith.constant 55 : index
      %249 = memref.load %arg2[%c55] : memref<288xf32, #tpu.memory_space<smem>>
      %250 = vector.broadcast %249 : f32 to vector<14x14xf32>
      %251 = arith.mulf %250, %244 : vector<14x14xf32>
      %252 = arith.addf %218, %251 : vector<14x14xf32>
      %c91 = arith.constant 91 : index
      %253 = memref.load %arg2[%c91] : memref<288xf32, #tpu.memory_space<smem>>
      %254 = vector.broadcast %253 : f32 to vector<14x14xf32>
      %255 = arith.mulf %254, %244 : vector<14x14xf32>
      %256 = arith.addf %222, %255 : vector<14x14xf32>
      %c127 = arith.constant 127 : index
      %257 = memref.load %arg2[%c127] : memref<288xf32, #tpu.memory_space<smem>>
      %258 = vector.broadcast %257 : f32 to vector<14x14xf32>
      %259 = arith.mulf %258, %244 : vector<14x14xf32>
      %260 = arith.addf %226, %259 : vector<14x14xf32>
      %c163 = arith.constant 163 : index
      %261 = memref.load %arg2[%c163] : memref<288xf32, #tpu.memory_space<smem>>
      %262 = vector.broadcast %261 : f32 to vector<14x14xf32>
      %263 = arith.mulf %262, %244 : vector<14x14xf32>
      %264 = arith.addf %230, %263 : vector<14x14xf32>
      %c199 = arith.constant 199 : index
      %265 = memref.load %arg2[%c199] : memref<288xf32, #tpu.memory_space<smem>>
      %266 = vector.broadcast %265 : f32 to vector<14x14xf32>
      %267 = arith.mulf %266, %244 : vector<14x14xf32>
      %268 = arith.addf %234, %267 : vector<14x14xf32>
      %c235 = arith.constant 235 : index
      %269 = memref.load %arg2[%c235] : memref<288xf32, #tpu.memory_space<smem>>
      %270 = vector.broadcast %269 : f32 to vector<14x14xf32>
      %271 = arith.mulf %270, %244 : vector<14x14xf32>
      %272 = arith.addf %238, %271 : vector<14x14xf32>
      %c271 = arith.constant 271 : index
      %273 = memref.load %arg2[%c271] : memref<288xf32, #tpu.memory_space<smem>>
      %274 = vector.broadcast %273 : f32 to vector<14x14xf32>
      %275 = arith.mulf %274, %244 : vector<14x14xf32>
      %276 = arith.addf %242, %275 : vector<14x14xf32>
      %277 = vector.extract_strided_slice %38 {offsets = [3, 0, 1], sizes = [1, 14, 14], strides = [1, 1, 1]} : vector<4x14x16xf32> to vector<1x14x14xf32>
      %278 = vector.shape_cast %277 : vector<1x14x14xf32> to vector<14x14xf32>
      %c28 = arith.constant 28 : index
      %279 = memref.load %arg2[%c28] : memref<288xf32, #tpu.memory_space<smem>>
      %280 = vector.broadcast %279 : f32 to vector<14x14xf32>
      %281 = arith.mulf %280, %278 : vector<14x14xf32>
      %282 = arith.addf %248, %281 : vector<14x14xf32>
      %c64 = arith.constant 64 : index
      %283 = memref.load %arg2[%c64] : memref<288xf32, #tpu.memory_space<smem>>
      %284 = vector.broadcast %283 : f32 to vector<14x14xf32>
      %285 = arith.mulf %284, %278 : vector<14x14xf32>
      %286 = arith.addf %252, %285 : vector<14x14xf32>
      %c100 = arith.constant 100 : index
      %287 = memref.load %arg2[%c100] : memref<288xf32, #tpu.memory_space<smem>>
      %288 = vector.broadcast %287 : f32 to vector<14x14xf32>
      %289 = arith.mulf %288, %278 : vector<14x14xf32>
      %290 = arith.addf %256, %289 : vector<14x14xf32>
      %c136 = arith.constant 136 : index
      %291 = memref.load %arg2[%c136] : memref<288xf32, #tpu.memory_space<smem>>
      %292 = vector.broadcast %291 : f32 to vector<14x14xf32>
      %293 = arith.mulf %292, %278 : vector<14x14xf32>
      %294 = arith.addf %260, %293 : vector<14x14xf32>
      %c172 = arith.constant 172 : index
      %295 = memref.load %arg2[%c172] : memref<288xf32, #tpu.memory_space<smem>>
      %296 = vector.broadcast %295 : f32 to vector<14x14xf32>
      %297 = arith.mulf %296, %278 : vector<14x14xf32>
      %298 = arith.addf %264, %297 : vector<14x14xf32>
      %c208 = arith.constant 208 : index
      %299 = memref.load %arg2[%c208] : memref<288xf32, #tpu.memory_space<smem>>
      %300 = vector.broadcast %299 : f32 to vector<14x14xf32>
      %301 = arith.mulf %300, %278 : vector<14x14xf32>
      %302 = arith.addf %268, %301 : vector<14x14xf32>
      %c244 = arith.constant 244 : index
      %303 = memref.load %arg2[%c244] : memref<288xf32, #tpu.memory_space<smem>>
      %304 = vector.broadcast %303 : f32 to vector<14x14xf32>
      %305 = arith.mulf %304, %278 : vector<14x14xf32>
      %306 = arith.addf %272, %305 : vector<14x14xf32>
      %c280 = arith.constant 280 : index
      %307 = memref.load %arg2[%c280] : memref<288xf32, #tpu.memory_space<smem>>
      %308 = vector.broadcast %307 : f32 to vector<14x14xf32>
      %309 = arith.mulf %308, %278 : vector<14x14xf32>
      %310 = arith.addf %276, %309 : vector<14x14xf32>
      %311 = vector.extract_strided_slice %38 {offsets = [0, 0, 2], sizes = [1, 14, 14], strides = [1, 1, 1]} : vector<4x14x16xf32> to vector<1x14x14xf32>
      %312 = vector.shape_cast %311 : vector<1x14x14xf32> to vector<14x14xf32>
      %c2_12 = arith.constant 2 : index
      %313 = memref.load %arg2[%c2_12] : memref<288xf32, #tpu.memory_space<smem>>
      %314 = vector.broadcast %313 : f32 to vector<14x14xf32>
      %315 = arith.mulf %314, %312 : vector<14x14xf32>
      %316 = arith.addf %282, %315 : vector<14x14xf32>
      %c38 = arith.constant 38 : index
      %317 = memref.load %arg2[%c38] : memref<288xf32, #tpu.memory_space<smem>>
      %318 = vector.broadcast %317 : f32 to vector<14x14xf32>
      %319 = arith.mulf %318, %312 : vector<14x14xf32>
      %320 = arith.addf %286, %319 : vector<14x14xf32>
      %c74 = arith.constant 74 : index
      %321 = memref.load %arg2[%c74] : memref<288xf32, #tpu.memory_space<smem>>
      %322 = vector.broadcast %321 : f32 to vector<14x14xf32>
      %323 = arith.mulf %322, %312 : vector<14x14xf32>
      %324 = arith.addf %290, %323 : vector<14x14xf32>
      %c110 = arith.constant 110 : index
      %325 = memref.load %arg2[%c110] : memref<288xf32, #tpu.memory_space<smem>>
      %326 = vector.broadcast %325 : f32 to vector<14x14xf32>
      %327 = arith.mulf %326, %312 : vector<14x14xf32>
      %328 = arith.addf %294, %327 : vector<14x14xf32>
      %c146 = arith.constant 146 : index
      %329 = memref.load %arg2[%c146] : memref<288xf32, #tpu.memory_space<smem>>
      %330 = vector.broadcast %329 : f32 to vector<14x14xf32>
      %331 = arith.mulf %330, %312 : vector<14x14xf32>
      %332 = arith.addf %298, %331 : vector<14x14xf32>
      %c182 = arith.constant 182 : index
      %333 = memref.load %arg2[%c182] : memref<288xf32, #tpu.memory_space<smem>>
      %334 = vector.broadcast %333 : f32 to vector<14x14xf32>
      %335 = arith.mulf %334, %312 : vector<14x14xf32>
      %336 = arith.addf %302, %335 : vector<14x14xf32>
      %c218 = arith.constant 218 : index
      %337 = memref.load %arg2[%c218] : memref<288xf32, #tpu.memory_space<smem>>
      %338 = vector.broadcast %337 : f32 to vector<14x14xf32>
      %339 = arith.mulf %338, %312 : vector<14x14xf32>
      %340 = arith.addf %306, %339 : vector<14x14xf32>
      %c254 = arith.constant 254 : index
      %341 = memref.load %arg2[%c254] : memref<288xf32, #tpu.memory_space<smem>>
      %342 = vector.broadcast %341 : f32 to vector<14x14xf32>
      %343 = arith.mulf %342, %312 : vector<14x14xf32>
      %344 = arith.addf %310, %343 : vector<14x14xf32>
      %345 = vector.extract_strided_slice %38 {offsets = [1, 0, 2], sizes = [1, 14, 14], strides = [1, 1, 1]} : vector<4x14x16xf32> to vector<1x14x14xf32>
      %346 = vector.shape_cast %345 : vector<1x14x14xf32> to vector<14x14xf32>
      %c11 = arith.constant 11 : index
      %347 = memref.load %arg2[%c11] : memref<288xf32, #tpu.memory_space<smem>>
      %348 = vector.broadcast %347 : f32 to vector<14x14xf32>
      %349 = arith.mulf %348, %346 : vector<14x14xf32>
      %350 = arith.addf %316, %349 : vector<14x14xf32>
      %c47 = arith.constant 47 : index
      %351 = memref.load %arg2[%c47] : memref<288xf32, #tpu.memory_space<smem>>
      %352 = vector.broadcast %351 : f32 to vector<14x14xf32>
      %353 = arith.mulf %352, %346 : vector<14x14xf32>
      %354 = arith.addf %320, %353 : vector<14x14xf32>
      %c83 = arith.constant 83 : index
      %355 = memref.load %arg2[%c83] : memref<288xf32, #tpu.memory_space<smem>>
      %356 = vector.broadcast %355 : f32 to vector<14x14xf32>
      %357 = arith.mulf %356, %346 : vector<14x14xf32>
      %358 = arith.addf %324, %357 : vector<14x14xf32>
      %c119 = arith.constant 119 : index
      %359 = memref.load %arg2[%c119] : memref<288xf32, #tpu.memory_space<smem>>
      %360 = vector.broadcast %359 : f32 to vector<14x14xf32>
      %361 = arith.mulf %360, %346 : vector<14x14xf32>
      %362 = arith.addf %328, %361 : vector<14x14xf32>
      %c155 = arith.constant 155 : index
      %363 = memref.load %arg2[%c155] : memref<288xf32, #tpu.memory_space<smem>>
      %364 = vector.broadcast %363 : f32 to vector<14x14xf32>
      %365 = arith.mulf %364, %346 : vector<14x14xf32>
      %366 = arith.addf %332, %365 : vector<14x14xf32>
      %c191 = arith.constant 191 : index
      %367 = memref.load %arg2[%c191] : memref<288xf32, #tpu.memory_space<smem>>
      %368 = vector.broadcast %367 : f32 to vector<14x14xf32>
      %369 = arith.mulf %368, %346 : vector<14x14xf32>
      %370 = arith.addf %336, %369 : vector<14x14xf32>
      %c227 = arith.constant 227 : index
      %371 = memref.load %arg2[%c227] : memref<288xf32, #tpu.memory_space<smem>>
      %372 = vector.broadcast %371 : f32 to vector<14x14xf32>
      %373 = arith.mulf %372, %346 : vector<14x14xf32>
      %374 = arith.addf %340, %373 : vector<14x14xf32>
      %c263 = arith.constant 263 : index
      %375 = memref.load %arg2[%c263] : memref<288xf32, #tpu.memory_space<smem>>
      %376 = vector.broadcast %375 : f32 to vector<14x14xf32>
      %377 = arith.mulf %376, %346 : vector<14x14xf32>
      %378 = arith.addf %344, %377 : vector<14x14xf32>
      %379 = vector.extract_strided_slice %38 {offsets = [2, 0, 2], sizes = [1, 14, 14], strides = [1, 1, 1]} : vector<4x14x16xf32> to vector<1x14x14xf32>
      %380 = vector.shape_cast %379 : vector<1x14x14xf32> to vector<14x14xf32>
      %c20 = arith.constant 20 : index
      %381 = memref.load %arg2[%c20] : memref<288xf32, #tpu.memory_space<smem>>
      %382 = vector.broadcast %381 : f32 to vector<14x14xf32>
      %383 = arith.mulf %382, %380 : vector<14x14xf32>
      %384 = arith.addf %350, %383 : vector<14x14xf32>
      %c56 = arith.constant 56 : index
      %385 = memref.load %arg2[%c56] : memref<288xf32, #tpu.memory_space<smem>>
      %386 = vector.broadcast %385 : f32 to vector<14x14xf32>
      %387 = arith.mulf %386, %380 : vector<14x14xf32>
      %388 = arith.addf %354, %387 : vector<14x14xf32>
      %c92 = arith.constant 92 : index
      %389 = memref.load %arg2[%c92] : memref<288xf32, #tpu.memory_space<smem>>
      %390 = vector.broadcast %389 : f32 to vector<14x14xf32>
      %391 = arith.mulf %390, %380 : vector<14x14xf32>
      %392 = arith.addf %358, %391 : vector<14x14xf32>
      %c128 = arith.constant 128 : index
      %393 = memref.load %arg2[%c128] : memref<288xf32, #tpu.memory_space<smem>>
      %394 = vector.broadcast %393 : f32 to vector<14x14xf32>
      %395 = arith.mulf %394, %380 : vector<14x14xf32>
      %396 = arith.addf %362, %395 : vector<14x14xf32>
      %c164 = arith.constant 164 : index
      %397 = memref.load %arg2[%c164] : memref<288xf32, #tpu.memory_space<smem>>
      %398 = vector.broadcast %397 : f32 to vector<14x14xf32>
      %399 = arith.mulf %398, %380 : vector<14x14xf32>
      %400 = arith.addf %366, %399 : vector<14x14xf32>
      %c200 = arith.constant 200 : index
      %401 = memref.load %arg2[%c200] : memref<288xf32, #tpu.memory_space<smem>>
      %402 = vector.broadcast %401 : f32 to vector<14x14xf32>
      %403 = arith.mulf %402, %380 : vector<14x14xf32>
      %404 = arith.addf %370, %403 : vector<14x14xf32>
      %c236 = arith.constant 236 : index
      %405 = memref.load %arg2[%c236] : memref<288xf32, #tpu.memory_space<smem>>
      %406 = vector.broadcast %405 : f32 to vector<14x14xf32>
      %407 = arith.mulf %406, %380 : vector<14x14xf32>
      %408 = arith.addf %374, %407 : vector<14x14xf32>
      %c272 = arith.constant 272 : index
      %409 = memref.load %arg2[%c272] : memref<288xf32, #tpu.memory_space<smem>>
      %410 = vector.broadcast %409 : f32 to vector<14x14xf32>
      %411 = arith.mulf %410, %380 : vector<14x14xf32>
      %412 = arith.addf %378, %411 : vector<14x14xf32>
      %413 = vector.extract_strided_slice %38 {offsets = [3, 0, 2], sizes = [1, 14, 14], strides = [1, 1, 1]} : vector<4x14x16xf32> to vector<1x14x14xf32>
      %414 = vector.shape_cast %413 : vector<1x14x14xf32> to vector<14x14xf32>
      %c29 = arith.constant 29 : index
      %415 = memref.load %arg2[%c29] : memref<288xf32, #tpu.memory_space<smem>>
      %416 = vector.broadcast %415 : f32 to vector<14x14xf32>
      %417 = arith.mulf %416, %414 : vector<14x14xf32>
      %418 = arith.addf %384, %417 : vector<14x14xf32>
      %c65 = arith.constant 65 : index
      %419 = memref.load %arg2[%c65] : memref<288xf32, #tpu.memory_space<smem>>
      %420 = vector.broadcast %419 : f32 to vector<14x14xf32>
      %421 = arith.mulf %420, %414 : vector<14x14xf32>
      %422 = arith.addf %388, %421 : vector<14x14xf32>
      %c101 = arith.constant 101 : index
      %423 = memref.load %arg2[%c101] : memref<288xf32, #tpu.memory_space<smem>>
      %424 = vector.broadcast %423 : f32 to vector<14x14xf32>
      %425 = arith.mulf %424, %414 : vector<14x14xf32>
      %426 = arith.addf %392, %425 : vector<14x14xf32>
      %c137 = arith.constant 137 : index
      %427 = memref.load %arg2[%c137] : memref<288xf32, #tpu.memory_space<smem>>
      %428 = vector.broadcast %427 : f32 to vector<14x14xf32>
      %429 = arith.mulf %428, %414 : vector<14x14xf32>
      %430 = arith.addf %396, %429 : vector<14x14xf32>
      %c173 = arith.constant 173 : index
      %431 = memref.load %arg2[%c173] : memref<288xf32, #tpu.memory_space<smem>>
      %432 = vector.broadcast %431 : f32 to vector<14x14xf32>
      %433 = arith.mulf %432, %414 : vector<14x14xf32>
      %434 = arith.addf %400, %433 : vector<14x14xf32>
      %c209 = arith.constant 209 : index
      %435 = memref.load %arg2[%c209] : memref<288xf32, #tpu.memory_space<smem>>
      %436 = vector.broadcast %435 : f32 to vector<14x14xf32>
      %437 = arith.mulf %436, %414 : vector<14x14xf32>
      %438 = arith.addf %404, %437 : vector<14x14xf32>
      %c245 = arith.constant 245 : index
      %439 = memref.load %arg2[%c245] : memref<288xf32, #tpu.memory_space<smem>>
      %440 = vector.broadcast %439 : f32 to vector<14x14xf32>
      %441 = arith.mulf %440, %414 : vector<14x14xf32>
      %442 = arith.addf %408, %441 : vector<14x14xf32>
      %c281 = arith.constant 281 : index
      %443 = memref.load %arg2[%c281] : memref<288xf32, #tpu.memory_space<smem>>
      %444 = vector.broadcast %443 : f32 to vector<14x14xf32>
      %445 = arith.mulf %444, %414 : vector<14x14xf32>
      %446 = arith.addf %412, %445 : vector<14x14xf32>
      %447 = vector.extract_strided_slice %21 {offsets = [0, 1, 0], sizes = [4, 14, 16], strides = [1, 1, 1]} : vector<4x16x16xf32> to vector<4x14x16xf32>
      %448 = vector.extract_strided_slice %447 {offsets = [0, 0, 0], sizes = [1, 14, 14], strides = [1, 1, 1]} : vector<4x14x16xf32> to vector<1x14x14xf32>
      %449 = vector.shape_cast %448 : vector<1x14x14xf32> to vector<14x14xf32>
      %c3_13 = arith.constant 3 : index
      %450 = memref.load %arg2[%c3_13] : memref<288xf32, #tpu.memory_space<smem>>
      %451 = vector.broadcast %450 : f32 to vector<14x14xf32>
      %452 = arith.mulf %451, %449 : vector<14x14xf32>
      %453 = arith.addf %418, %452 : vector<14x14xf32>
      %c39 = arith.constant 39 : index
      %454 = memref.load %arg2[%c39] : memref<288xf32, #tpu.memory_space<smem>>
      %455 = vector.broadcast %454 : f32 to vector<14x14xf32>
      %456 = arith.mulf %455, %449 : vector<14x14xf32>
      %457 = arith.addf %422, %456 : vector<14x14xf32>
      %c75 = arith.constant 75 : index
      %458 = memref.load %arg2[%c75] : memref<288xf32, #tpu.memory_space<smem>>
      %459 = vector.broadcast %458 : f32 to vector<14x14xf32>
      %460 = arith.mulf %459, %449 : vector<14x14xf32>
      %461 = arith.addf %426, %460 : vector<14x14xf32>
      %c111 = arith.constant 111 : index
      %462 = memref.load %arg2[%c111] : memref<288xf32, #tpu.memory_space<smem>>
      %463 = vector.broadcast %462 : f32 to vector<14x14xf32>
      %464 = arith.mulf %463, %449 : vector<14x14xf32>
      %465 = arith.addf %430, %464 : vector<14x14xf32>
      %c147 = arith.constant 147 : index
      %466 = memref.load %arg2[%c147] : memref<288xf32, #tpu.memory_space<smem>>
      %467 = vector.broadcast %466 : f32 to vector<14x14xf32>
      %468 = arith.mulf %467, %449 : vector<14x14xf32>
      %469 = arith.addf %434, %468 : vector<14x14xf32>
      %c183 = arith.constant 183 : index
      %470 = memref.load %arg2[%c183] : memref<288xf32, #tpu.memory_space<smem>>
      %471 = vector.broadcast %470 : f32 to vector<14x14xf32>
      %472 = arith.mulf %471, %449 : vector<14x14xf32>
      %473 = arith.addf %438, %472 : vector<14x14xf32>
      %c219 = arith.constant 219 : index
      %474 = memref.load %arg2[%c219] : memref<288xf32, #tpu.memory_space<smem>>
      %475 = vector.broadcast %474 : f32 to vector<14x14xf32>
      %476 = arith.mulf %475, %449 : vector<14x14xf32>
      %477 = arith.addf %442, %476 : vector<14x14xf32>
      %c255 = arith.constant 255 : index
      %478 = memref.load %arg2[%c255] : memref<288xf32, #tpu.memory_space<smem>>
      %479 = vector.broadcast %478 : f32 to vector<14x14xf32>
      %480 = arith.mulf %479, %449 : vector<14x14xf32>
      %481 = arith.addf %446, %480 : vector<14x14xf32>
      %482 = vector.extract_strided_slice %447 {offsets = [1, 0, 0], sizes = [1, 14, 14], strides = [1, 1, 1]} : vector<4x14x16xf32> to vector<1x14x14xf32>
      %483 = vector.shape_cast %482 : vector<1x14x14xf32> to vector<14x14xf32>
      %c12 = arith.constant 12 : index
      %484 = memref.load %arg2[%c12] : memref<288xf32, #tpu.memory_space<smem>>
      %485 = vector.broadcast %484 : f32 to vector<14x14xf32>
      %486 = arith.mulf %485, %483 : vector<14x14xf32>
      %487 = arith.addf %453, %486 : vector<14x14xf32>
      %c48 = arith.constant 48 : index
      %488 = memref.load %arg2[%c48] : memref<288xf32, #tpu.memory_space<smem>>
      %489 = vector.broadcast %488 : f32 to vector<14x14xf32>
      %490 = arith.mulf %489, %483 : vector<14x14xf32>
      %491 = arith.addf %457, %490 : vector<14x14xf32>
      %c84 = arith.constant 84 : index
      %492 = memref.load %arg2[%c84] : memref<288xf32, #tpu.memory_space<smem>>
      %493 = vector.broadcast %492 : f32 to vector<14x14xf32>
      %494 = arith.mulf %493, %483 : vector<14x14xf32>
      %495 = arith.addf %461, %494 : vector<14x14xf32>
      %c120 = arith.constant 120 : index
      %496 = memref.load %arg2[%c120] : memref<288xf32, #tpu.memory_space<smem>>
      %497 = vector.broadcast %496 : f32 to vector<14x14xf32>
      %498 = arith.mulf %497, %483 : vector<14x14xf32>
      %499 = arith.addf %465, %498 : vector<14x14xf32>
      %c156 = arith.constant 156 : index
      %500 = memref.load %arg2[%c156] : memref<288xf32, #tpu.memory_space<smem>>
      %501 = vector.broadcast %500 : f32 to vector<14x14xf32>
      %502 = arith.mulf %501, %483 : vector<14x14xf32>
      %503 = arith.addf %469, %502 : vector<14x14xf32>
      %c192 = arith.constant 192 : index
      %504 = memref.load %arg2[%c192] : memref<288xf32, #tpu.memory_space<smem>>
      %505 = vector.broadcast %504 : f32 to vector<14x14xf32>
      %506 = arith.mulf %505, %483 : vector<14x14xf32>
      %507 = arith.addf %473, %506 : vector<14x14xf32>
      %c228 = arith.constant 228 : index
      %508 = memref.load %arg2[%c228] : memref<288xf32, #tpu.memory_space<smem>>
      %509 = vector.broadcast %508 : f32 to vector<14x14xf32>
      %510 = arith.mulf %509, %483 : vector<14x14xf32>
      %511 = arith.addf %477, %510 : vector<14x14xf32>
      %c264 = arith.constant 264 : index
      %512 = memref.load %arg2[%c264] : memref<288xf32, #tpu.memory_space<smem>>
      %513 = vector.broadcast %512 : f32 to vector<14x14xf32>
      %514 = arith.mulf %513, %483 : vector<14x14xf32>
      %515 = arith.addf %481, %514 : vector<14x14xf32>
      %516 = vector.extract_strided_slice %447 {offsets = [2, 0, 0], sizes = [1, 14, 14], strides = [1, 1, 1]} : vector<4x14x16xf32> to vector<1x14x14xf32>
      %517 = vector.shape_cast %516 : vector<1x14x14xf32> to vector<14x14xf32>
      %c21 = arith.constant 21 : index
      %518 = memref.load %arg2[%c21] : memref<288xf32, #tpu.memory_space<smem>>
      %519 = vector.broadcast %518 : f32 to vector<14x14xf32>
      %520 = arith.mulf %519, %517 : vector<14x14xf32>
      %521 = arith.addf %487, %520 : vector<14x14xf32>
      %c57 = arith.constant 57 : index
      %522 = memref.load %arg2[%c57] : memref<288xf32, #tpu.memory_space<smem>>
      %523 = vector.broadcast %522 : f32 to vector<14x14xf32>
      %524 = arith.mulf %523, %517 : vector<14x14xf32>
      %525 = arith.addf %491, %524 : vector<14x14xf32>
      %c93 = arith.constant 93 : index
      %526 = memref.load %arg2[%c93] : memref<288xf32, #tpu.memory_space<smem>>
      %527 = vector.broadcast %526 : f32 to vector<14x14xf32>
      %528 = arith.mulf %527, %517 : vector<14x14xf32>
      %529 = arith.addf %495, %528 : vector<14x14xf32>
      %c129 = arith.constant 129 : index
      %530 = memref.load %arg2[%c129] : memref<288xf32, #tpu.memory_space<smem>>
      %531 = vector.broadcast %530 : f32 to vector<14x14xf32>
      %532 = arith.mulf %531, %517 : vector<14x14xf32>
      %533 = arith.addf %499, %532 : vector<14x14xf32>
      %c165 = arith.constant 165 : index
      %534 = memref.load %arg2[%c165] : memref<288xf32, #tpu.memory_space<smem>>
      %535 = vector.broadcast %534 : f32 to vector<14x14xf32>
      %536 = arith.mulf %535, %517 : vector<14x14xf32>
      %537 = arith.addf %503, %536 : vector<14x14xf32>
      %c201 = arith.constant 201 : index
      %538 = memref.load %arg2[%c201] : memref<288xf32, #tpu.memory_space<smem>>
      %539 = vector.broadcast %538 : f32 to vector<14x14xf32>
      %540 = arith.mulf %539, %517 : vector<14x14xf32>
      %541 = arith.addf %507, %540 : vector<14x14xf32>
      %c237 = arith.constant 237 : index
      %542 = memref.load %arg2[%c237] : memref<288xf32, #tpu.memory_space<smem>>
      %543 = vector.broadcast %542 : f32 to vector<14x14xf32>
      %544 = arith.mulf %543, %517 : vector<14x14xf32>
      %545 = arith.addf %511, %544 : vector<14x14xf32>
      %c273 = arith.constant 273 : index
      %546 = memref.load %arg2[%c273] : memref<288xf32, #tpu.memory_space<smem>>
      %547 = vector.broadcast %546 : f32 to vector<14x14xf32>
      %548 = arith.mulf %547, %517 : vector<14x14xf32>
      %549 = arith.addf %515, %548 : vector<14x14xf32>
      %550 = vector.extract_strided_slice %447 {offsets = [3, 0, 0], sizes = [1, 14, 14], strides = [1, 1, 1]} : vector<4x14x16xf32> to vector<1x14x14xf32>
      %551 = vector.shape_cast %550 : vector<1x14x14xf32> to vector<14x14xf32>
      %c30 = arith.constant 30 : index
      %552 = memref.load %arg2[%c30] : memref<288xf32, #tpu.memory_space<smem>>
      %553 = vector.broadcast %552 : f32 to vector<14x14xf32>
      %554 = arith.mulf %553, %551 : vector<14x14xf32>
      %555 = arith.addf %521, %554 : vector<14x14xf32>
      %c66 = arith.constant 66 : index
      %556 = memref.load %arg2[%c66] : memref<288xf32, #tpu.memory_space<smem>>
      %557 = vector.broadcast %556 : f32 to vector<14x14xf32>
      %558 = arith.mulf %557, %551 : vector<14x14xf32>
      %559 = arith.addf %525, %558 : vector<14x14xf32>
      %c102 = arith.constant 102 : index
      %560 = memref.load %arg2[%c102] : memref<288xf32, #tpu.memory_space<smem>>
      %561 = vector.broadcast %560 : f32 to vector<14x14xf32>
      %562 = arith.mulf %561, %551 : vector<14x14xf32>
      %563 = arith.addf %529, %562 : vector<14x14xf32>
      %c138 = arith.constant 138 : index
      %564 = memref.load %arg2[%c138] : memref<288xf32, #tpu.memory_space<smem>>
      %565 = vector.broadcast %564 : f32 to vector<14x14xf32>
      %566 = arith.mulf %565, %551 : vector<14x14xf32>
      %567 = arith.addf %533, %566 : vector<14x14xf32>
      %c174 = arith.constant 174 : index
      %568 = memref.load %arg2[%c174] : memref<288xf32, #tpu.memory_space<smem>>
      %569 = vector.broadcast %568 : f32 to vector<14x14xf32>
      %570 = arith.mulf %569, %551 : vector<14x14xf32>
      %571 = arith.addf %537, %570 : vector<14x14xf32>
      %c210 = arith.constant 210 : index
      %572 = memref.load %arg2[%c210] : memref<288xf32, #tpu.memory_space<smem>>
      %573 = vector.broadcast %572 : f32 to vector<14x14xf32>
      %574 = arith.mulf %573, %551 : vector<14x14xf32>
      %575 = arith.addf %541, %574 : vector<14x14xf32>
      %c246 = arith.constant 246 : index
      %576 = memref.load %arg2[%c246] : memref<288xf32, #tpu.memory_space<smem>>
      %577 = vector.broadcast %576 : f32 to vector<14x14xf32>
      %578 = arith.mulf %577, %551 : vector<14x14xf32>
      %579 = arith.addf %545, %578 : vector<14x14xf32>
      %c282 = arith.constant 282 : index
      %580 = memref.load %arg2[%c282] : memref<288xf32, #tpu.memory_space<smem>>
      %581 = vector.broadcast %580 : f32 to vector<14x14xf32>
      %582 = arith.mulf %581, %551 : vector<14x14xf32>
      %583 = arith.addf %549, %582 : vector<14x14xf32>
      %584 = vector.extract_strided_slice %447 {offsets = [0, 0, 1], sizes = [1, 14, 14], strides = [1, 1, 1]} : vector<4x14x16xf32> to vector<1x14x14xf32>
      %585 = vector.shape_cast %584 : vector<1x14x14xf32> to vector<14x14xf32>
      %c4_14 = arith.constant 4 : index
      %586 = memref.load %arg2[%c4_14] : memref<288xf32, #tpu.memory_space<smem>>
      %587 = vector.broadcast %586 : f32 to vector<14x14xf32>
      %588 = arith.mulf %587, %585 : vector<14x14xf32>
      %589 = arith.addf %555, %588 : vector<14x14xf32>
      %c40 = arith.constant 40 : index
      %590 = memref.load %arg2[%c40] : memref<288xf32, #tpu.memory_space<smem>>
      %591 = vector.broadcast %590 : f32 to vector<14x14xf32>
      %592 = arith.mulf %591, %585 : vector<14x14xf32>
      %593 = arith.addf %559, %592 : vector<14x14xf32>
      %c76 = arith.constant 76 : index
      %594 = memref.load %arg2[%c76] : memref<288xf32, #tpu.memory_space<smem>>
      %595 = vector.broadcast %594 : f32 to vector<14x14xf32>
      %596 = arith.mulf %595, %585 : vector<14x14xf32>
      %597 = arith.addf %563, %596 : vector<14x14xf32>
      %c112 = arith.constant 112 : index
      %598 = memref.load %arg2[%c112] : memref<288xf32, #tpu.memory_space<smem>>
      %599 = vector.broadcast %598 : f32 to vector<14x14xf32>
      %600 = arith.mulf %599, %585 : vector<14x14xf32>
      %601 = arith.addf %567, %600 : vector<14x14xf32>
      %c148 = arith.constant 148 : index
      %602 = memref.load %arg2[%c148] : memref<288xf32, #tpu.memory_space<smem>>
      %603 = vector.broadcast %602 : f32 to vector<14x14xf32>
      %604 = arith.mulf %603, %585 : vector<14x14xf32>
      %605 = arith.addf %571, %604 : vector<14x14xf32>
      %c184 = arith.constant 184 : index
      %606 = memref.load %arg2[%c184] : memref<288xf32, #tpu.memory_space<smem>>
      %607 = vector.broadcast %606 : f32 to vector<14x14xf32>
      %608 = arith.mulf %607, %585 : vector<14x14xf32>
      %609 = arith.addf %575, %608 : vector<14x14xf32>
      %c220 = arith.constant 220 : index
      %610 = memref.load %arg2[%c220] : memref<288xf32, #tpu.memory_space<smem>>
      %611 = vector.broadcast %610 : f32 to vector<14x14xf32>
      %612 = arith.mulf %611, %585 : vector<14x14xf32>
      %613 = arith.addf %579, %612 : vector<14x14xf32>
      %c256 = arith.constant 256 : index
      %614 = memref.load %arg2[%c256] : memref<288xf32, #tpu.memory_space<smem>>
      %615 = vector.broadcast %614 : f32 to vector<14x14xf32>
      %616 = arith.mulf %615, %585 : vector<14x14xf32>
      %617 = arith.addf %583, %616 : vector<14x14xf32>
      %618 = vector.extract_strided_slice %447 {offsets = [1, 0, 1], sizes = [1, 14, 14], strides = [1, 1, 1]} : vector<4x14x16xf32> to vector<1x14x14xf32>
      %619 = vector.shape_cast %618 : vector<1x14x14xf32> to vector<14x14xf32>
      %c13 = arith.constant 13 : index
      %620 = memref.load %arg2[%c13] : memref<288xf32, #tpu.memory_space<smem>>
      %621 = vector.broadcast %620 : f32 to vector<14x14xf32>
      %622 = arith.mulf %621, %619 : vector<14x14xf32>
      %623 = arith.addf %589, %622 : vector<14x14xf32>
      %c49 = arith.constant 49 : index
      %624 = memref.load %arg2[%c49] : memref<288xf32, #tpu.memory_space<smem>>
      %625 = vector.broadcast %624 : f32 to vector<14x14xf32>
      %626 = arith.mulf %625, %619 : vector<14x14xf32>
      %627 = arith.addf %593, %626 : vector<14x14xf32>
      %c85 = arith.constant 85 : index
      %628 = memref.load %arg2[%c85] : memref<288xf32, #tpu.memory_space<smem>>
      %629 = vector.broadcast %628 : f32 to vector<14x14xf32>
      %630 = arith.mulf %629, %619 : vector<14x14xf32>
      %631 = arith.addf %597, %630 : vector<14x14xf32>
      %c121 = arith.constant 121 : index
      %632 = memref.load %arg2[%c121] : memref<288xf32, #tpu.memory_space<smem>>
      %633 = vector.broadcast %632 : f32 to vector<14x14xf32>
      %634 = arith.mulf %633, %619 : vector<14x14xf32>
      %635 = arith.addf %601, %634 : vector<14x14xf32>
      %c157 = arith.constant 157 : index
      %636 = memref.load %arg2[%c157] : memref<288xf32, #tpu.memory_space<smem>>
      %637 = vector.broadcast %636 : f32 to vector<14x14xf32>
      %638 = arith.mulf %637, %619 : vector<14x14xf32>
      %639 = arith.addf %605, %638 : vector<14x14xf32>
      %c193 = arith.constant 193 : index
      %640 = memref.load %arg2[%c193] : memref<288xf32, #tpu.memory_space<smem>>
      %641 = vector.broadcast %640 : f32 to vector<14x14xf32>
      %642 = arith.mulf %641, %619 : vector<14x14xf32>
      %643 = arith.addf %609, %642 : vector<14x14xf32>
      %c229 = arith.constant 229 : index
      %644 = memref.load %arg2[%c229] : memref<288xf32, #tpu.memory_space<smem>>
      %645 = vector.broadcast %644 : f32 to vector<14x14xf32>
      %646 = arith.mulf %645, %619 : vector<14x14xf32>
      %647 = arith.addf %613, %646 : vector<14x14xf32>
      %c265 = arith.constant 265 : index
      %648 = memref.load %arg2[%c265] : memref<288xf32, #tpu.memory_space<smem>>
      %649 = vector.broadcast %648 : f32 to vector<14x14xf32>
      %650 = arith.mulf %649, %619 : vector<14x14xf32>
      %651 = arith.addf %617, %650 : vector<14x14xf32>
      %652 = vector.extract_strided_slice %447 {offsets = [2, 0, 1], sizes = [1, 14, 14], strides = [1, 1, 1]} : vector<4x14x16xf32> to vector<1x14x14xf32>
      %653 = vector.shape_cast %652 : vector<1x14x14xf32> to vector<14x14xf32>
      %c22 = arith.constant 22 : index
      %654 = memref.load %arg2[%c22] : memref<288xf32, #tpu.memory_space<smem>>
      %655 = vector.broadcast %654 : f32 to vector<14x14xf32>
      %656 = arith.mulf %655, %653 : vector<14x14xf32>
      %657 = arith.addf %623, %656 : vector<14x14xf32>
      %c58 = arith.constant 58 : index
      %658 = memref.load %arg2[%c58] : memref<288xf32, #tpu.memory_space<smem>>
      %659 = vector.broadcast %658 : f32 to vector<14x14xf32>
      %660 = arith.mulf %659, %653 : vector<14x14xf32>
      %661 = arith.addf %627, %660 : vector<14x14xf32>
      %c94 = arith.constant 94 : index
      %662 = memref.load %arg2[%c94] : memref<288xf32, #tpu.memory_space<smem>>
      %663 = vector.broadcast %662 : f32 to vector<14x14xf32>
      %664 = arith.mulf %663, %653 : vector<14x14xf32>
      %665 = arith.addf %631, %664 : vector<14x14xf32>
      %c130 = arith.constant 130 : index
      %666 = memref.load %arg2[%c130] : memref<288xf32, #tpu.memory_space<smem>>
      %667 = vector.broadcast %666 : f32 to vector<14x14xf32>
      %668 = arith.mulf %667, %653 : vector<14x14xf32>
      %669 = arith.addf %635, %668 : vector<14x14xf32>
      %c166 = arith.constant 166 : index
      %670 = memref.load %arg2[%c166] : memref<288xf32, #tpu.memory_space<smem>>
      %671 = vector.broadcast %670 : f32 to vector<14x14xf32>
      %672 = arith.mulf %671, %653 : vector<14x14xf32>
      %673 = arith.addf %639, %672 : vector<14x14xf32>
      %c202 = arith.constant 202 : index
      %674 = memref.load %arg2[%c202] : memref<288xf32, #tpu.memory_space<smem>>
      %675 = vector.broadcast %674 : f32 to vector<14x14xf32>
      %676 = arith.mulf %675, %653 : vector<14x14xf32>
      %677 = arith.addf %643, %676 : vector<14x14xf32>
      %c238 = arith.constant 238 : index
      %678 = memref.load %arg2[%c238] : memref<288xf32, #tpu.memory_space<smem>>
      %679 = vector.broadcast %678 : f32 to vector<14x14xf32>
      %680 = arith.mulf %679, %653 : vector<14x14xf32>
      %681 = arith.addf %647, %680 : vector<14x14xf32>
      %c274 = arith.constant 274 : index
      %682 = memref.load %arg2[%c274] : memref<288xf32, #tpu.memory_space<smem>>
      %683 = vector.broadcast %682 : f32 to vector<14x14xf32>
      %684 = arith.mulf %683, %653 : vector<14x14xf32>
      %685 = arith.addf %651, %684 : vector<14x14xf32>
      %686 = vector.extract_strided_slice %447 {offsets = [3, 0, 1], sizes = [1, 14, 14], strides = [1, 1, 1]} : vector<4x14x16xf32> to vector<1x14x14xf32>
      %687 = vector.shape_cast %686 : vector<1x14x14xf32> to vector<14x14xf32>
      %c31 = arith.constant 31 : index
      %688 = memref.load %arg2[%c31] : memref<288xf32, #tpu.memory_space<smem>>
      %689 = vector.broadcast %688 : f32 to vector<14x14xf32>
      %690 = arith.mulf %689, %687 : vector<14x14xf32>
      %691 = arith.addf %657, %690 : vector<14x14xf32>
      %c67 = arith.constant 67 : index
      %692 = memref.load %arg2[%c67] : memref<288xf32, #tpu.memory_space<smem>>
      %693 = vector.broadcast %692 : f32 to vector<14x14xf32>
      %694 = arith.mulf %693, %687 : vector<14x14xf32>
      %695 = arith.addf %661, %694 : vector<14x14xf32>
      %c103 = arith.constant 103 : index
      %696 = memref.load %arg2[%c103] : memref<288xf32, #tpu.memory_space<smem>>
      %697 = vector.broadcast %696 : f32 to vector<14x14xf32>
      %698 = arith.mulf %697, %687 : vector<14x14xf32>
      %699 = arith.addf %665, %698 : vector<14x14xf32>
      %c139 = arith.constant 139 : index
      %700 = memref.load %arg2[%c139] : memref<288xf32, #tpu.memory_space<smem>>
      %701 = vector.broadcast %700 : f32 to vector<14x14xf32>
      %702 = arith.mulf %701, %687 : vector<14x14xf32>
      %703 = arith.addf %669, %702 : vector<14x14xf32>
      %c175 = arith.constant 175 : index
      %704 = memref.load %arg2[%c175] : memref<288xf32, #tpu.memory_space<smem>>
      %705 = vector.broadcast %704 : f32 to vector<14x14xf32>
      %706 = arith.mulf %705, %687 : vector<14x14xf32>
      %707 = arith.addf %673, %706 : vector<14x14xf32>
      %c211 = arith.constant 211 : index
      %708 = memref.load %arg2[%c211] : memref<288xf32, #tpu.memory_space<smem>>
      %709 = vector.broadcast %708 : f32 to vector<14x14xf32>
      %710 = arith.mulf %709, %687 : vector<14x14xf32>
      %711 = arith.addf %677, %710 : vector<14x14xf32>
      %c247 = arith.constant 247 : index
      %712 = memref.load %arg2[%c247] : memref<288xf32, #tpu.memory_space<smem>>
      %713 = vector.broadcast %712 : f32 to vector<14x14xf32>
      %714 = arith.mulf %713, %687 : vector<14x14xf32>
      %715 = arith.addf %681, %714 : vector<14x14xf32>
      %c283 = arith.constant 283 : index
      %716 = memref.load %arg2[%c283] : memref<288xf32, #tpu.memory_space<smem>>
      %717 = vector.broadcast %716 : f32 to vector<14x14xf32>
      %718 = arith.mulf %717, %687 : vector<14x14xf32>
      %719 = arith.addf %685, %718 : vector<14x14xf32>
      %720 = vector.extract_strided_slice %447 {offsets = [0, 0, 2], sizes = [1, 14, 14], strides = [1, 1, 1]} : vector<4x14x16xf32> to vector<1x14x14xf32>
      %721 = vector.shape_cast %720 : vector<1x14x14xf32> to vector<14x14xf32>
      %c5_15 = arith.constant 5 : index
      %722 = memref.load %arg2[%c5_15] : memref<288xf32, #tpu.memory_space<smem>>
      %723 = vector.broadcast %722 : f32 to vector<14x14xf32>
      %724 = arith.mulf %723, %721 : vector<14x14xf32>
      %725 = arith.addf %691, %724 : vector<14x14xf32>
      %c41 = arith.constant 41 : index
      %726 = memref.load %arg2[%c41] : memref<288xf32, #tpu.memory_space<smem>>
      %727 = vector.broadcast %726 : f32 to vector<14x14xf32>
      %728 = arith.mulf %727, %721 : vector<14x14xf32>
      %729 = arith.addf %695, %728 : vector<14x14xf32>
      %c77 = arith.constant 77 : index
      %730 = memref.load %arg2[%c77] : memref<288xf32, #tpu.memory_space<smem>>
      %731 = vector.broadcast %730 : f32 to vector<14x14xf32>
      %732 = arith.mulf %731, %721 : vector<14x14xf32>
      %733 = arith.addf %699, %732 : vector<14x14xf32>
      %c113 = arith.constant 113 : index
      %734 = memref.load %arg2[%c113] : memref<288xf32, #tpu.memory_space<smem>>
      %735 = vector.broadcast %734 : f32 to vector<14x14xf32>
      %736 = arith.mulf %735, %721 : vector<14x14xf32>
      %737 = arith.addf %703, %736 : vector<14x14xf32>
      %c149 = arith.constant 149 : index
      %738 = memref.load %arg2[%c149] : memref<288xf32, #tpu.memory_space<smem>>
      %739 = vector.broadcast %738 : f32 to vector<14x14xf32>
      %740 = arith.mulf %739, %721 : vector<14x14xf32>
      %741 = arith.addf %707, %740 : vector<14x14xf32>
      %c185 = arith.constant 185 : index
      %742 = memref.load %arg2[%c185] : memref<288xf32, #tpu.memory_space<smem>>
      %743 = vector.broadcast %742 : f32 to vector<14x14xf32>
      %744 = arith.mulf %743, %721 : vector<14x14xf32>
      %745 = arith.addf %711, %744 : vector<14x14xf32>
      %c221 = arith.constant 221 : index
      %746 = memref.load %arg2[%c221] : memref<288xf32, #tpu.memory_space<smem>>
      %747 = vector.broadcast %746 : f32 to vector<14x14xf32>
      %748 = arith.mulf %747, %721 : vector<14x14xf32>
      %749 = arith.addf %715, %748 : vector<14x14xf32>
      %c257 = arith.constant 257 : index
      %750 = memref.load %arg2[%c257] : memref<288xf32, #tpu.memory_space<smem>>
      %751 = vector.broadcast %750 : f32 to vector<14x14xf32>
      %752 = arith.mulf %751, %721 : vector<14x14xf32>
      %753 = arith.addf %719, %752 : vector<14x14xf32>
      %754 = vector.extract_strided_slice %447 {offsets = [1, 0, 2], sizes = [1, 14, 14], strides = [1, 1, 1]} : vector<4x14x16xf32> to vector<1x14x14xf32>
      %755 = vector.shape_cast %754 : vector<1x14x14xf32> to vector<14x14xf32>
      %c14 = arith.constant 14 : index
      %756 = memref.load %arg2[%c14] : memref<288xf32, #tpu.memory_space<smem>>
      %757 = vector.broadcast %756 : f32 to vector<14x14xf32>
      %758 = arith.mulf %757, %755 : vector<14x14xf32>
      %759 = arith.addf %725, %758 : vector<14x14xf32>
      %c50 = arith.constant 50 : index
      %760 = memref.load %arg2[%c50] : memref<288xf32, #tpu.memory_space<smem>>
      %761 = vector.broadcast %760 : f32 to vector<14x14xf32>
      %762 = arith.mulf %761, %755 : vector<14x14xf32>
      %763 = arith.addf %729, %762 : vector<14x14xf32>
      %c86 = arith.constant 86 : index
      %764 = memref.load %arg2[%c86] : memref<288xf32, #tpu.memory_space<smem>>
      %765 = vector.broadcast %764 : f32 to vector<14x14xf32>
      %766 = arith.mulf %765, %755 : vector<14x14xf32>
      %767 = arith.addf %733, %766 : vector<14x14xf32>
      %c122 = arith.constant 122 : index
      %768 = memref.load %arg2[%c122] : memref<288xf32, #tpu.memory_space<smem>>
      %769 = vector.broadcast %768 : f32 to vector<14x14xf32>
      %770 = arith.mulf %769, %755 : vector<14x14xf32>
      %771 = arith.addf %737, %770 : vector<14x14xf32>
      %c158 = arith.constant 158 : index
      %772 = memref.load %arg2[%c158] : memref<288xf32, #tpu.memory_space<smem>>
      %773 = vector.broadcast %772 : f32 to vector<14x14xf32>
      %774 = arith.mulf %773, %755 : vector<14x14xf32>
      %775 = arith.addf %741, %774 : vector<14x14xf32>
      %c194 = arith.constant 194 : index
      %776 = memref.load %arg2[%c194] : memref<288xf32, #tpu.memory_space<smem>>
      %777 = vector.broadcast %776 : f32 to vector<14x14xf32>
      %778 = arith.mulf %777, %755 : vector<14x14xf32>
      %779 = arith.addf %745, %778 : vector<14x14xf32>
      %c230 = arith.constant 230 : index
      %780 = memref.load %arg2[%c230] : memref<288xf32, #tpu.memory_space<smem>>
      %781 = vector.broadcast %780 : f32 to vector<14x14xf32>
      %782 = arith.mulf %781, %755 : vector<14x14xf32>
      %783 = arith.addf %749, %782 : vector<14x14xf32>
      %c266 = arith.constant 266 : index
      %784 = memref.load %arg2[%c266] : memref<288xf32, #tpu.memory_space<smem>>
      %785 = vector.broadcast %784 : f32 to vector<14x14xf32>
      %786 = arith.mulf %785, %755 : vector<14x14xf32>
      %787 = arith.addf %753, %786 : vector<14x14xf32>
      %788 = vector.extract_strided_slice %447 {offsets = [2, 0, 2], sizes = [1, 14, 14], strides = [1, 1, 1]} : vector<4x14x16xf32> to vector<1x14x14xf32>
      %789 = vector.shape_cast %788 : vector<1x14x14xf32> to vector<14x14xf32>
      %c23 = arith.constant 23 : index
      %790 = memref.load %arg2[%c23] : memref<288xf32, #tpu.memory_space<smem>>
      %791 = vector.broadcast %790 : f32 to vector<14x14xf32>
      %792 = arith.mulf %791, %789 : vector<14x14xf32>
      %793 = arith.addf %759, %792 : vector<14x14xf32>
      %c59 = arith.constant 59 : index
      %794 = memref.load %arg2[%c59] : memref<288xf32, #tpu.memory_space<smem>>
      %795 = vector.broadcast %794 : f32 to vector<14x14xf32>
      %796 = arith.mulf %795, %789 : vector<14x14xf32>
      %797 = arith.addf %763, %796 : vector<14x14xf32>
      %c95 = arith.constant 95 : index
      %798 = memref.load %arg2[%c95] : memref<288xf32, #tpu.memory_space<smem>>
      %799 = vector.broadcast %798 : f32 to vector<14x14xf32>
      %800 = arith.mulf %799, %789 : vector<14x14xf32>
      %801 = arith.addf %767, %800 : vector<14x14xf32>
      %c131 = arith.constant 131 : index
      %802 = memref.load %arg2[%c131] : memref<288xf32, #tpu.memory_space<smem>>
      %803 = vector.broadcast %802 : f32 to vector<14x14xf32>
      %804 = arith.mulf %803, %789 : vector<14x14xf32>
      %805 = arith.addf %771, %804 : vector<14x14xf32>
      %c167 = arith.constant 167 : index
      %806 = memref.load %arg2[%c167] : memref<288xf32, #tpu.memory_space<smem>>
      %807 = vector.broadcast %806 : f32 to vector<14x14xf32>
      %808 = arith.mulf %807, %789 : vector<14x14xf32>
      %809 = arith.addf %775, %808 : vector<14x14xf32>
      %c203 = arith.constant 203 : index
      %810 = memref.load %arg2[%c203] : memref<288xf32, #tpu.memory_space<smem>>
      %811 = vector.broadcast %810 : f32 to vector<14x14xf32>
      %812 = arith.mulf %811, %789 : vector<14x14xf32>
      %813 = arith.addf %779, %812 : vector<14x14xf32>
      %c239 = arith.constant 239 : index
      %814 = memref.load %arg2[%c239] : memref<288xf32, #tpu.memory_space<smem>>
      %815 = vector.broadcast %814 : f32 to vector<14x14xf32>
      %816 = arith.mulf %815, %789 : vector<14x14xf32>
      %817 = arith.addf %783, %816 : vector<14x14xf32>
      %c275 = arith.constant 275 : index
      %818 = memref.load %arg2[%c275] : memref<288xf32, #tpu.memory_space<smem>>
      %819 = vector.broadcast %818 : f32 to vector<14x14xf32>
      %820 = arith.mulf %819, %789 : vector<14x14xf32>
      %821 = arith.addf %787, %820 : vector<14x14xf32>
      %822 = vector.extract_strided_slice %447 {offsets = [3, 0, 2], sizes = [1, 14, 14], strides = [1, 1, 1]} : vector<4x14x16xf32> to vector<1x14x14xf32>
      %823 = vector.shape_cast %822 : vector<1x14x14xf32> to vector<14x14xf32>
      %c32 = arith.constant 32 : index
      %824 = memref.load %arg2[%c32] : memref<288xf32, #tpu.memory_space<smem>>
      %825 = vector.broadcast %824 : f32 to vector<14x14xf32>
      %826 = arith.mulf %825, %823 : vector<14x14xf32>
      %827 = arith.addf %793, %826 : vector<14x14xf32>
      %c68 = arith.constant 68 : index
      %828 = memref.load %arg2[%c68] : memref<288xf32, #tpu.memory_space<smem>>
      %829 = vector.broadcast %828 : f32 to vector<14x14xf32>
      %830 = arith.mulf %829, %823 : vector<14x14xf32>
      %831 = arith.addf %797, %830 : vector<14x14xf32>
      %c104 = arith.constant 104 : index
      %832 = memref.load %arg2[%c104] : memref<288xf32, #tpu.memory_space<smem>>
      %833 = vector.broadcast %832 : f32 to vector<14x14xf32>
      %834 = arith.mulf %833, %823 : vector<14x14xf32>
      %835 = arith.addf %801, %834 : vector<14x14xf32>
      %c140 = arith.constant 140 : index
      %836 = memref.load %arg2[%c140] : memref<288xf32, #tpu.memory_space<smem>>
      %837 = vector.broadcast %836 : f32 to vector<14x14xf32>
      %838 = arith.mulf %837, %823 : vector<14x14xf32>
      %839 = arith.addf %805, %838 : vector<14x14xf32>
      %c176 = arith.constant 176 : index
      %840 = memref.load %arg2[%c176] : memref<288xf32, #tpu.memory_space<smem>>
      %841 = vector.broadcast %840 : f32 to vector<14x14xf32>
      %842 = arith.mulf %841, %823 : vector<14x14xf32>
      %843 = arith.addf %809, %842 : vector<14x14xf32>
      %c212 = arith.constant 212 : index
      %844 = memref.load %arg2[%c212] : memref<288xf32, #tpu.memory_space<smem>>
      %845 = vector.broadcast %844 : f32 to vector<14x14xf32>
      %846 = arith.mulf %845, %823 : vector<14x14xf32>
      %847 = arith.addf %813, %846 : vector<14x14xf32>
      %c248 = arith.constant 248 : index
      %848 = memref.load %arg2[%c248] : memref<288xf32, #tpu.memory_space<smem>>
      %849 = vector.broadcast %848 : f32 to vector<14x14xf32>
      %850 = arith.mulf %849, %823 : vector<14x14xf32>
      %851 = arith.addf %817, %850 : vector<14x14xf32>
      %c284 = arith.constant 284 : index
      %852 = memref.load %arg2[%c284] : memref<288xf32, #tpu.memory_space<smem>>
      %853 = vector.broadcast %852 : f32 to vector<14x14xf32>
      %854 = arith.mulf %853, %823 : vector<14x14xf32>
      %855 = arith.addf %821, %854 : vector<14x14xf32>
      %856 = vector.extract_strided_slice %21 {offsets = [0, 2, 0], sizes = [4, 14, 16], strides = [1, 1, 1]} : vector<4x16x16xf32> to vector<4x14x16xf32>
      %857 = vector.extract_strided_slice %856 {offsets = [0, 0, 0], sizes = [1, 14, 14], strides = [1, 1, 1]} : vector<4x14x16xf32> to vector<1x14x14xf32>
      %858 = vector.shape_cast %857 : vector<1x14x14xf32> to vector<14x14xf32>
      %c6_16 = arith.constant 6 : index
      %859 = memref.load %arg2[%c6_16] : memref<288xf32, #tpu.memory_space<smem>>
      %860 = vector.broadcast %859 : f32 to vector<14x14xf32>
      %861 = arith.mulf %860, %858 : vector<14x14xf32>
      %862 = arith.addf %827, %861 : vector<14x14xf32>
      %c42 = arith.constant 42 : index
      %863 = memref.load %arg2[%c42] : memref<288xf32, #tpu.memory_space<smem>>
      %864 = vector.broadcast %863 : f32 to vector<14x14xf32>
      %865 = arith.mulf %864, %858 : vector<14x14xf32>
      %866 = arith.addf %831, %865 : vector<14x14xf32>
      %c78 = arith.constant 78 : index
      %867 = memref.load %arg2[%c78] : memref<288xf32, #tpu.memory_space<smem>>
      %868 = vector.broadcast %867 : f32 to vector<14x14xf32>
      %869 = arith.mulf %868, %858 : vector<14x14xf32>
      %870 = arith.addf %835, %869 : vector<14x14xf32>
      %c114 = arith.constant 114 : index
      %871 = memref.load %arg2[%c114] : memref<288xf32, #tpu.memory_space<smem>>
      %872 = vector.broadcast %871 : f32 to vector<14x14xf32>
      %873 = arith.mulf %872, %858 : vector<14x14xf32>
      %874 = arith.addf %839, %873 : vector<14x14xf32>
      %c150 = arith.constant 150 : index
      %875 = memref.load %arg2[%c150] : memref<288xf32, #tpu.memory_space<smem>>
      %876 = vector.broadcast %875 : f32 to vector<14x14xf32>
      %877 = arith.mulf %876, %858 : vector<14x14xf32>
      %878 = arith.addf %843, %877 : vector<14x14xf32>
      %c186 = arith.constant 186 : index
      %879 = memref.load %arg2[%c186] : memref<288xf32, #tpu.memory_space<smem>>
      %880 = vector.broadcast %879 : f32 to vector<14x14xf32>
      %881 = arith.mulf %880, %858 : vector<14x14xf32>
      %882 = arith.addf %847, %881 : vector<14x14xf32>
      %c222 = arith.constant 222 : index
      %883 = memref.load %arg2[%c222] : memref<288xf32, #tpu.memory_space<smem>>
      %884 = vector.broadcast %883 : f32 to vector<14x14xf32>
      %885 = arith.mulf %884, %858 : vector<14x14xf32>
      %886 = arith.addf %851, %885 : vector<14x14xf32>
      %c258 = arith.constant 258 : index
      %887 = memref.load %arg2[%c258] : memref<288xf32, #tpu.memory_space<smem>>
      %888 = vector.broadcast %887 : f32 to vector<14x14xf32>
      %889 = arith.mulf %888, %858 : vector<14x14xf32>
      %890 = arith.addf %855, %889 : vector<14x14xf32>
      %891 = vector.extract_strided_slice %856 {offsets = [1, 0, 0], sizes = [1, 14, 14], strides = [1, 1, 1]} : vector<4x14x16xf32> to vector<1x14x14xf32>
      %892 = vector.shape_cast %891 : vector<1x14x14xf32> to vector<14x14xf32>
      %c15 = arith.constant 15 : index
      %893 = memref.load %arg2[%c15] : memref<288xf32, #tpu.memory_space<smem>>
      %894 = vector.broadcast %893 : f32 to vector<14x14xf32>
      %895 = arith.mulf %894, %892 : vector<14x14xf32>
      %896 = arith.addf %862, %895 : vector<14x14xf32>
      %c51 = arith.constant 51 : index
      %897 = memref.load %arg2[%c51] : memref<288xf32, #tpu.memory_space<smem>>
      %898 = vector.broadcast %897 : f32 to vector<14x14xf32>
      %899 = arith.mulf %898, %892 : vector<14x14xf32>
      %900 = arith.addf %866, %899 : vector<14x14xf32>
      %c87 = arith.constant 87 : index
      %901 = memref.load %arg2[%c87] : memref<288xf32, #tpu.memory_space<smem>>
      %902 = vector.broadcast %901 : f32 to vector<14x14xf32>
      %903 = arith.mulf %902, %892 : vector<14x14xf32>
      %904 = arith.addf %870, %903 : vector<14x14xf32>
      %c123 = arith.constant 123 : index
      %905 = memref.load %arg2[%c123] : memref<288xf32, #tpu.memory_space<smem>>
      %906 = vector.broadcast %905 : f32 to vector<14x14xf32>
      %907 = arith.mulf %906, %892 : vector<14x14xf32>
      %908 = arith.addf %874, %907 : vector<14x14xf32>
      %c159 = arith.constant 159 : index
      %909 = memref.load %arg2[%c159] : memref<288xf32, #tpu.memory_space<smem>>
      %910 = vector.broadcast %909 : f32 to vector<14x14xf32>
      %911 = arith.mulf %910, %892 : vector<14x14xf32>
      %912 = arith.addf %878, %911 : vector<14x14xf32>
      %c195 = arith.constant 195 : index
      %913 = memref.load %arg2[%c195] : memref<288xf32, #tpu.memory_space<smem>>
      %914 = vector.broadcast %913 : f32 to vector<14x14xf32>
      %915 = arith.mulf %914, %892 : vector<14x14xf32>
      %916 = arith.addf %882, %915 : vector<14x14xf32>
      %c231 = arith.constant 231 : index
      %917 = memref.load %arg2[%c231] : memref<288xf32, #tpu.memory_space<smem>>
      %918 = vector.broadcast %917 : f32 to vector<14x14xf32>
      %919 = arith.mulf %918, %892 : vector<14x14xf32>
      %920 = arith.addf %886, %919 : vector<14x14xf32>
      %c267 = arith.constant 267 : index
      %921 = memref.load %arg2[%c267] : memref<288xf32, #tpu.memory_space<smem>>
      %922 = vector.broadcast %921 : f32 to vector<14x14xf32>
      %923 = arith.mulf %922, %892 : vector<14x14xf32>
      %924 = arith.addf %890, %923 : vector<14x14xf32>
      %925 = vector.extract_strided_slice %856 {offsets = [2, 0, 0], sizes = [1, 14, 14], strides = [1, 1, 1]} : vector<4x14x16xf32> to vector<1x14x14xf32>
      %926 = vector.shape_cast %925 : vector<1x14x14xf32> to vector<14x14xf32>
      %c24 = arith.constant 24 : index
      %927 = memref.load %arg2[%c24] : memref<288xf32, #tpu.memory_space<smem>>
      %928 = vector.broadcast %927 : f32 to vector<14x14xf32>
      %929 = arith.mulf %928, %926 : vector<14x14xf32>
      %930 = arith.addf %896, %929 : vector<14x14xf32>
      %c60 = arith.constant 60 : index
      %931 = memref.load %arg2[%c60] : memref<288xf32, #tpu.memory_space<smem>>
      %932 = vector.broadcast %931 : f32 to vector<14x14xf32>
      %933 = arith.mulf %932, %926 : vector<14x14xf32>
      %934 = arith.addf %900, %933 : vector<14x14xf32>
      %c96 = arith.constant 96 : index
      %935 = memref.load %arg2[%c96] : memref<288xf32, #tpu.memory_space<smem>>
      %936 = vector.broadcast %935 : f32 to vector<14x14xf32>
      %937 = arith.mulf %936, %926 : vector<14x14xf32>
      %938 = arith.addf %904, %937 : vector<14x14xf32>
      %c132 = arith.constant 132 : index
      %939 = memref.load %arg2[%c132] : memref<288xf32, #tpu.memory_space<smem>>
      %940 = vector.broadcast %939 : f32 to vector<14x14xf32>
      %941 = arith.mulf %940, %926 : vector<14x14xf32>
      %942 = arith.addf %908, %941 : vector<14x14xf32>
      %c168 = arith.constant 168 : index
      %943 = memref.load %arg2[%c168] : memref<288xf32, #tpu.memory_space<smem>>
      %944 = vector.broadcast %943 : f32 to vector<14x14xf32>
      %945 = arith.mulf %944, %926 : vector<14x14xf32>
      %946 = arith.addf %912, %945 : vector<14x14xf32>
      %c204 = arith.constant 204 : index
      %947 = memref.load %arg2[%c204] : memref<288xf32, #tpu.memory_space<smem>>
      %948 = vector.broadcast %947 : f32 to vector<14x14xf32>
      %949 = arith.mulf %948, %926 : vector<14x14xf32>
      %950 = arith.addf %916, %949 : vector<14x14xf32>
      %c240 = arith.constant 240 : index
      %951 = memref.load %arg2[%c240] : memref<288xf32, #tpu.memory_space<smem>>
      %952 = vector.broadcast %951 : f32 to vector<14x14xf32>
      %953 = arith.mulf %952, %926 : vector<14x14xf32>
      %954 = arith.addf %920, %953 : vector<14x14xf32>
      %c276 = arith.constant 276 : index
      %955 = memref.load %arg2[%c276] : memref<288xf32, #tpu.memory_space<smem>>
      %956 = vector.broadcast %955 : f32 to vector<14x14xf32>
      %957 = arith.mulf %956, %926 : vector<14x14xf32>
      %958 = arith.addf %924, %957 : vector<14x14xf32>
      %959 = vector.extract_strided_slice %856 {offsets = [3, 0, 0], sizes = [1, 14, 14], strides = [1, 1, 1]} : vector<4x14x16xf32> to vector<1x14x14xf32>
      %960 = vector.shape_cast %959 : vector<1x14x14xf32> to vector<14x14xf32>
      %c33 = arith.constant 33 : index
      %961 = memref.load %arg2[%c33] : memref<288xf32, #tpu.memory_space<smem>>
      %962 = vector.broadcast %961 : f32 to vector<14x14xf32>
      %963 = arith.mulf %962, %960 : vector<14x14xf32>
      %964 = arith.addf %930, %963 : vector<14x14xf32>
      %c69 = arith.constant 69 : index
      %965 = memref.load %arg2[%c69] : memref<288xf32, #tpu.memory_space<smem>>
      %966 = vector.broadcast %965 : f32 to vector<14x14xf32>
      %967 = arith.mulf %966, %960 : vector<14x14xf32>
      %968 = arith.addf %934, %967 : vector<14x14xf32>
      %c105 = arith.constant 105 : index
      %969 = memref.load %arg2[%c105] : memref<288xf32, #tpu.memory_space<smem>>
      %970 = vector.broadcast %969 : f32 to vector<14x14xf32>
      %971 = arith.mulf %970, %960 : vector<14x14xf32>
      %972 = arith.addf %938, %971 : vector<14x14xf32>
      %c141 = arith.constant 141 : index
      %973 = memref.load %arg2[%c141] : memref<288xf32, #tpu.memory_space<smem>>
      %974 = vector.broadcast %973 : f32 to vector<14x14xf32>
      %975 = arith.mulf %974, %960 : vector<14x14xf32>
      %976 = arith.addf %942, %975 : vector<14x14xf32>
      %c177 = arith.constant 177 : index
      %977 = memref.load %arg2[%c177] : memref<288xf32, #tpu.memory_space<smem>>
      %978 = vector.broadcast %977 : f32 to vector<14x14xf32>
      %979 = arith.mulf %978, %960 : vector<14x14xf32>
      %980 = arith.addf %946, %979 : vector<14x14xf32>
      %c213 = arith.constant 213 : index
      %981 = memref.load %arg2[%c213] : memref<288xf32, #tpu.memory_space<smem>>
      %982 = vector.broadcast %981 : f32 to vector<14x14xf32>
      %983 = arith.mulf %982, %960 : vector<14x14xf32>
      %984 = arith.addf %950, %983 : vector<14x14xf32>
      %c249 = arith.constant 249 : index
      %985 = memref.load %arg2[%c249] : memref<288xf32, #tpu.memory_space<smem>>
      %986 = vector.broadcast %985 : f32 to vector<14x14xf32>
      %987 = arith.mulf %986, %960 : vector<14x14xf32>
      %988 = arith.addf %954, %987 : vector<14x14xf32>
      %c285 = arith.constant 285 : index
      %989 = memref.load %arg2[%c285] : memref<288xf32, #tpu.memory_space<smem>>
      %990 = vector.broadcast %989 : f32 to vector<14x14xf32>
      %991 = arith.mulf %990, %960 : vector<14x14xf32>
      %992 = arith.addf %958, %991 : vector<14x14xf32>
      %993 = vector.extract_strided_slice %856 {offsets = [0, 0, 1], sizes = [1, 14, 14], strides = [1, 1, 1]} : vector<4x14x16xf32> to vector<1x14x14xf32>
      %994 = vector.shape_cast %993 : vector<1x14x14xf32> to vector<14x14xf32>
      %c7_17 = arith.constant 7 : index
      %995 = memref.load %arg2[%c7_17] : memref<288xf32, #tpu.memory_space<smem>>
      %996 = vector.broadcast %995 : f32 to vector<14x14xf32>
      %997 = arith.mulf %996, %994 : vector<14x14xf32>
      %998 = arith.addf %964, %997 : vector<14x14xf32>
      %c43 = arith.constant 43 : index
      %999 = memref.load %arg2[%c43] : memref<288xf32, #tpu.memory_space<smem>>
      %1000 = vector.broadcast %999 : f32 to vector<14x14xf32>
      %1001 = arith.mulf %1000, %994 : vector<14x14xf32>
      %1002 = arith.addf %968, %1001 : vector<14x14xf32>
      %c79 = arith.constant 79 : index
      %1003 = memref.load %arg2[%c79] : memref<288xf32, #tpu.memory_space<smem>>
      %1004 = vector.broadcast %1003 : f32 to vector<14x14xf32>
      %1005 = arith.mulf %1004, %994 : vector<14x14xf32>
      %1006 = arith.addf %972, %1005 : vector<14x14xf32>
      %c115 = arith.constant 115 : index
      %1007 = memref.load %arg2[%c115] : memref<288xf32, #tpu.memory_space<smem>>
      %1008 = vector.broadcast %1007 : f32 to vector<14x14xf32>
      %1009 = arith.mulf %1008, %994 : vector<14x14xf32>
      %1010 = arith.addf %976, %1009 : vector<14x14xf32>
      %c151 = arith.constant 151 : index
      %1011 = memref.load %arg2[%c151] : memref<288xf32, #tpu.memory_space<smem>>
      %1012 = vector.broadcast %1011 : f32 to vector<14x14xf32>
      %1013 = arith.mulf %1012, %994 : vector<14x14xf32>
      %1014 = arith.addf %980, %1013 : vector<14x14xf32>
      %c187 = arith.constant 187 : index
      %1015 = memref.load %arg2[%c187] : memref<288xf32, #tpu.memory_space<smem>>
      %1016 = vector.broadcast %1015 : f32 to vector<14x14xf32>
      %1017 = arith.mulf %1016, %994 : vector<14x14xf32>
      %1018 = arith.addf %984, %1017 : vector<14x14xf32>
      %c223 = arith.constant 223 : index
      %1019 = memref.load %arg2[%c223] : memref<288xf32, #tpu.memory_space<smem>>
      %1020 = vector.broadcast %1019 : f32 to vector<14x14xf32>
      %1021 = arith.mulf %1020, %994 : vector<14x14xf32>
      %1022 = arith.addf %988, %1021 : vector<14x14xf32>
      %c259 = arith.constant 259 : index
      %1023 = memref.load %arg2[%c259] : memref<288xf32, #tpu.memory_space<smem>>
      %1024 = vector.broadcast %1023 : f32 to vector<14x14xf32>
      %1025 = arith.mulf %1024, %994 : vector<14x14xf32>
      %1026 = arith.addf %992, %1025 : vector<14x14xf32>
      %1027 = vector.extract_strided_slice %856 {offsets = [1, 0, 1], sizes = [1, 14, 14], strides = [1, 1, 1]} : vector<4x14x16xf32> to vector<1x14x14xf32>
      %1028 = vector.shape_cast %1027 : vector<1x14x14xf32> to vector<14x14xf32>
      %c16 = arith.constant 16 : index
      %1029 = memref.load %arg2[%c16] : memref<288xf32, #tpu.memory_space<smem>>
      %1030 = vector.broadcast %1029 : f32 to vector<14x14xf32>
      %1031 = arith.mulf %1030, %1028 : vector<14x14xf32>
      %1032 = arith.addf %998, %1031 : vector<14x14xf32>
      %c52 = arith.constant 52 : index
      %1033 = memref.load %arg2[%c52] : memref<288xf32, #tpu.memory_space<smem>>
      %1034 = vector.broadcast %1033 : f32 to vector<14x14xf32>
      %1035 = arith.mulf %1034, %1028 : vector<14x14xf32>
      %1036 = arith.addf %1002, %1035 : vector<14x14xf32>
      %c88 = arith.constant 88 : index
      %1037 = memref.load %arg2[%c88] : memref<288xf32, #tpu.memory_space<smem>>
      %1038 = vector.broadcast %1037 : f32 to vector<14x14xf32>
      %1039 = arith.mulf %1038, %1028 : vector<14x14xf32>
      %1040 = arith.addf %1006, %1039 : vector<14x14xf32>
      %c124 = arith.constant 124 : index
      %1041 = memref.load %arg2[%c124] : memref<288xf32, #tpu.memory_space<smem>>
      %1042 = vector.broadcast %1041 : f32 to vector<14x14xf32>
      %1043 = arith.mulf %1042, %1028 : vector<14x14xf32>
      %1044 = arith.addf %1010, %1043 : vector<14x14xf32>
      %c160 = arith.constant 160 : index
      %1045 = memref.load %arg2[%c160] : memref<288xf32, #tpu.memory_space<smem>>
      %1046 = vector.broadcast %1045 : f32 to vector<14x14xf32>
      %1047 = arith.mulf %1046, %1028 : vector<14x14xf32>
      %1048 = arith.addf %1014, %1047 : vector<14x14xf32>
      %c196 = arith.constant 196 : index
      %1049 = memref.load %arg2[%c196] : memref<288xf32, #tpu.memory_space<smem>>
      %1050 = vector.broadcast %1049 : f32 to vector<14x14xf32>
      %1051 = arith.mulf %1050, %1028 : vector<14x14xf32>
      %1052 = arith.addf %1018, %1051 : vector<14x14xf32>
      %c232 = arith.constant 232 : index
      %1053 = memref.load %arg2[%c232] : memref<288xf32, #tpu.memory_space<smem>>
      %1054 = vector.broadcast %1053 : f32 to vector<14x14xf32>
      %1055 = arith.mulf %1054, %1028 : vector<14x14xf32>
      %1056 = arith.addf %1022, %1055 : vector<14x14xf32>
      %c268 = arith.constant 268 : index
      %1057 = memref.load %arg2[%c268] : memref<288xf32, #tpu.memory_space<smem>>
      %1058 = vector.broadcast %1057 : f32 to vector<14x14xf32>
      %1059 = arith.mulf %1058, %1028 : vector<14x14xf32>
      %1060 = arith.addf %1026, %1059 : vector<14x14xf32>
      %1061 = vector.extract_strided_slice %856 {offsets = [2, 0, 1], sizes = [1, 14, 14], strides = [1, 1, 1]} : vector<4x14x16xf32> to vector<1x14x14xf32>
      %1062 = vector.shape_cast %1061 : vector<1x14x14xf32> to vector<14x14xf32>
      %c25 = arith.constant 25 : index
      %1063 = memref.load %arg2[%c25] : memref<288xf32, #tpu.memory_space<smem>>
      %1064 = vector.broadcast %1063 : f32 to vector<14x14xf32>
      %1065 = arith.mulf %1064, %1062 : vector<14x14xf32>
      %1066 = arith.addf %1032, %1065 : vector<14x14xf32>
      %c61 = arith.constant 61 : index
      %1067 = memref.load %arg2[%c61] : memref<288xf32, #tpu.memory_space<smem>>
      %1068 = vector.broadcast %1067 : f32 to vector<14x14xf32>
      %1069 = arith.mulf %1068, %1062 : vector<14x14xf32>
      %1070 = arith.addf %1036, %1069 : vector<14x14xf32>
      %c97 = arith.constant 97 : index
      %1071 = memref.load %arg2[%c97] : memref<288xf32, #tpu.memory_space<smem>>
      %1072 = vector.broadcast %1071 : f32 to vector<14x14xf32>
      %1073 = arith.mulf %1072, %1062 : vector<14x14xf32>
      %1074 = arith.addf %1040, %1073 : vector<14x14xf32>
      %c133 = arith.constant 133 : index
      %1075 = memref.load %arg2[%c133] : memref<288xf32, #tpu.memory_space<smem>>
      %1076 = vector.broadcast %1075 : f32 to vector<14x14xf32>
      %1077 = arith.mulf %1076, %1062 : vector<14x14xf32>
      %1078 = arith.addf %1044, %1077 : vector<14x14xf32>
      %c169 = arith.constant 169 : index
      %1079 = memref.load %arg2[%c169] : memref<288xf32, #tpu.memory_space<smem>>
      %1080 = vector.broadcast %1079 : f32 to vector<14x14xf32>
      %1081 = arith.mulf %1080, %1062 : vector<14x14xf32>
      %1082 = arith.addf %1048, %1081 : vector<14x14xf32>
      %c205 = arith.constant 205 : index
      %1083 = memref.load %arg2[%c205] : memref<288xf32, #tpu.memory_space<smem>>
      %1084 = vector.broadcast %1083 : f32 to vector<14x14xf32>
      %1085 = arith.mulf %1084, %1062 : vector<14x14xf32>
      %1086 = arith.addf %1052, %1085 : vector<14x14xf32>
      %c241 = arith.constant 241 : index
      %1087 = memref.load %arg2[%c241] : memref<288xf32, #tpu.memory_space<smem>>
      %1088 = vector.broadcast %1087 : f32 to vector<14x14xf32>
      %1089 = arith.mulf %1088, %1062 : vector<14x14xf32>
      %1090 = arith.addf %1056, %1089 : vector<14x14xf32>
      %c277 = arith.constant 277 : index
      %1091 = memref.load %arg2[%c277] : memref<288xf32, #tpu.memory_space<smem>>
      %1092 = vector.broadcast %1091 : f32 to vector<14x14xf32>
      %1093 = arith.mulf %1092, %1062 : vector<14x14xf32>
      %1094 = arith.addf %1060, %1093 : vector<14x14xf32>
      %1095 = vector.extract_strided_slice %856 {offsets = [3, 0, 1], sizes = [1, 14, 14], strides = [1, 1, 1]} : vector<4x14x16xf32> to vector<1x14x14xf32>
      %1096 = vector.shape_cast %1095 : vector<1x14x14xf32> to vector<14x14xf32>
      %c34 = arith.constant 34 : index
      %1097 = memref.load %arg2[%c34] : memref<288xf32, #tpu.memory_space<smem>>
      %1098 = vector.broadcast %1097 : f32 to vector<14x14xf32>
      %1099 = arith.mulf %1098, %1096 : vector<14x14xf32>
      %1100 = arith.addf %1066, %1099 : vector<14x14xf32>
      %c70 = arith.constant 70 : index
      %1101 = memref.load %arg2[%c70] : memref<288xf32, #tpu.memory_space<smem>>
      %1102 = vector.broadcast %1101 : f32 to vector<14x14xf32>
      %1103 = arith.mulf %1102, %1096 : vector<14x14xf32>
      %1104 = arith.addf %1070, %1103 : vector<14x14xf32>
      %c106 = arith.constant 106 : index
      %1105 = memref.load %arg2[%c106] : memref<288xf32, #tpu.memory_space<smem>>
      %1106 = vector.broadcast %1105 : f32 to vector<14x14xf32>
      %1107 = arith.mulf %1106, %1096 : vector<14x14xf32>
      %1108 = arith.addf %1074, %1107 : vector<14x14xf32>
      %c142 = arith.constant 142 : index
      %1109 = memref.load %arg2[%c142] : memref<288xf32, #tpu.memory_space<smem>>
      %1110 = vector.broadcast %1109 : f32 to vector<14x14xf32>
      %1111 = arith.mulf %1110, %1096 : vector<14x14xf32>
      %1112 = arith.addf %1078, %1111 : vector<14x14xf32>
      %c178 = arith.constant 178 : index
      %1113 = memref.load %arg2[%c178] : memref<288xf32, #tpu.memory_space<smem>>
      %1114 = vector.broadcast %1113 : f32 to vector<14x14xf32>
      %1115 = arith.mulf %1114, %1096 : vector<14x14xf32>
      %1116 = arith.addf %1082, %1115 : vector<14x14xf32>
      %c214 = arith.constant 214 : index
      %1117 = memref.load %arg2[%c214] : memref<288xf32, #tpu.memory_space<smem>>
      %1118 = vector.broadcast %1117 : f32 to vector<14x14xf32>
      %1119 = arith.mulf %1118, %1096 : vector<14x14xf32>
      %1120 = arith.addf %1086, %1119 : vector<14x14xf32>
      %c250 = arith.constant 250 : index
      %1121 = memref.load %arg2[%c250] : memref<288xf32, #tpu.memory_space<smem>>
      %1122 = vector.broadcast %1121 : f32 to vector<14x14xf32>
      %1123 = arith.mulf %1122, %1096 : vector<14x14xf32>
      %1124 = arith.addf %1090, %1123 : vector<14x14xf32>
      %c286 = arith.constant 286 : index
      %1125 = memref.load %arg2[%c286] : memref<288xf32, #tpu.memory_space<smem>>
      %1126 = vector.broadcast %1125 : f32 to vector<14x14xf32>
      %1127 = arith.mulf %1126, %1096 : vector<14x14xf32>
      %1128 = arith.addf %1094, %1127 : vector<14x14xf32>
      %1129 = vector.extract_strided_slice %856 {offsets = [0, 0, 2], sizes = [1, 14, 14], strides = [1, 1, 1]} : vector<4x14x16xf32> to vector<1x14x14xf32>
      %1130 = vector.shape_cast %1129 : vector<1x14x14xf32> to vector<14x14xf32>
      %c8 = arith.constant 8 : index
      %1131 = memref.load %arg2[%c8] : memref<288xf32, #tpu.memory_space<smem>>
      %1132 = vector.broadcast %1131 : f32 to vector<14x14xf32>
      %1133 = arith.mulf %1132, %1130 : vector<14x14xf32>
      %1134 = arith.addf %1100, %1133 : vector<14x14xf32>
      %c44 = arith.constant 44 : index
      %1135 = memref.load %arg2[%c44] : memref<288xf32, #tpu.memory_space<smem>>
      %1136 = vector.broadcast %1135 : f32 to vector<14x14xf32>
      %1137 = arith.mulf %1136, %1130 : vector<14x14xf32>
      %1138 = arith.addf %1104, %1137 : vector<14x14xf32>
      %c80 = arith.constant 80 : index
      %1139 = memref.load %arg2[%c80] : memref<288xf32, #tpu.memory_space<smem>>
      %1140 = vector.broadcast %1139 : f32 to vector<14x14xf32>
      %1141 = arith.mulf %1140, %1130 : vector<14x14xf32>
      %1142 = arith.addf %1108, %1141 : vector<14x14xf32>
      %c116 = arith.constant 116 : index
      %1143 = memref.load %arg2[%c116] : memref<288xf32, #tpu.memory_space<smem>>
      %1144 = vector.broadcast %1143 : f32 to vector<14x14xf32>
      %1145 = arith.mulf %1144, %1130 : vector<14x14xf32>
      %1146 = arith.addf %1112, %1145 : vector<14x14xf32>
      %c152 = arith.constant 152 : index
      %1147 = memref.load %arg2[%c152] : memref<288xf32, #tpu.memory_space<smem>>
      %1148 = vector.broadcast %1147 : f32 to vector<14x14xf32>
      %1149 = arith.mulf %1148, %1130 : vector<14x14xf32>
      %1150 = arith.addf %1116, %1149 : vector<14x14xf32>
      %c188 = arith.constant 188 : index
      %1151 = memref.load %arg2[%c188] : memref<288xf32, #tpu.memory_space<smem>>
      %1152 = vector.broadcast %1151 : f32 to vector<14x14xf32>
      %1153 = arith.mulf %1152, %1130 : vector<14x14xf32>
      %1154 = arith.addf %1120, %1153 : vector<14x14xf32>
      %c224 = arith.constant 224 : index
      %1155 = memref.load %arg2[%c224] : memref<288xf32, #tpu.memory_space<smem>>
      %1156 = vector.broadcast %1155 : f32 to vector<14x14xf32>
      %1157 = arith.mulf %1156, %1130 : vector<14x14xf32>
      %1158 = arith.addf %1124, %1157 : vector<14x14xf32>
      %c260 = arith.constant 260 : index
      %1159 = memref.load %arg2[%c260] : memref<288xf32, #tpu.memory_space<smem>>
      %1160 = vector.broadcast %1159 : f32 to vector<14x14xf32>
      %1161 = arith.mulf %1160, %1130 : vector<14x14xf32>
      %1162 = arith.addf %1128, %1161 : vector<14x14xf32>
      %1163 = vector.extract_strided_slice %856 {offsets = [1, 0, 2], sizes = [1, 14, 14], strides = [1, 1, 1]} : vector<4x14x16xf32> to vector<1x14x14xf32>
      %1164 = vector.shape_cast %1163 : vector<1x14x14xf32> to vector<14x14xf32>
      %c17 = arith.constant 17 : index
      %1165 = memref.load %arg2[%c17] : memref<288xf32, #tpu.memory_space<smem>>
      %1166 = vector.broadcast %1165 : f32 to vector<14x14xf32>
      %1167 = arith.mulf %1166, %1164 : vector<14x14xf32>
      %1168 = arith.addf %1134, %1167 : vector<14x14xf32>
      %c53 = arith.constant 53 : index
      %1169 = memref.load %arg2[%c53] : memref<288xf32, #tpu.memory_space<smem>>
      %1170 = vector.broadcast %1169 : f32 to vector<14x14xf32>
      %1171 = arith.mulf %1170, %1164 : vector<14x14xf32>
      %1172 = arith.addf %1138, %1171 : vector<14x14xf32>
      %c89 = arith.constant 89 : index
      %1173 = memref.load %arg2[%c89] : memref<288xf32, #tpu.memory_space<smem>>
      %1174 = vector.broadcast %1173 : f32 to vector<14x14xf32>
      %1175 = arith.mulf %1174, %1164 : vector<14x14xf32>
      %1176 = arith.addf %1142, %1175 : vector<14x14xf32>
      %c125 = arith.constant 125 : index
      %1177 = memref.load %arg2[%c125] : memref<288xf32, #tpu.memory_space<smem>>
      %1178 = vector.broadcast %1177 : f32 to vector<14x14xf32>
      %1179 = arith.mulf %1178, %1164 : vector<14x14xf32>
      %1180 = arith.addf %1146, %1179 : vector<14x14xf32>
      %c161 = arith.constant 161 : index
      %1181 = memref.load %arg2[%c161] : memref<288xf32, #tpu.memory_space<smem>>
      %1182 = vector.broadcast %1181 : f32 to vector<14x14xf32>
      %1183 = arith.mulf %1182, %1164 : vector<14x14xf32>
      %1184 = arith.addf %1150, %1183 : vector<14x14xf32>
      %c197 = arith.constant 197 : index
      %1185 = memref.load %arg2[%c197] : memref<288xf32, #tpu.memory_space<smem>>
      %1186 = vector.broadcast %1185 : f32 to vector<14x14xf32>
      %1187 = arith.mulf %1186, %1164 : vector<14x14xf32>
      %1188 = arith.addf %1154, %1187 : vector<14x14xf32>
      %c233 = arith.constant 233 : index
      %1189 = memref.load %arg2[%c233] : memref<288xf32, #tpu.memory_space<smem>>
      %1190 = vector.broadcast %1189 : f32 to vector<14x14xf32>
      %1191 = arith.mulf %1190, %1164 : vector<14x14xf32>
      %1192 = arith.addf %1158, %1191 : vector<14x14xf32>
      %c269 = arith.constant 269 : index
      %1193 = memref.load %arg2[%c269] : memref<288xf32, #tpu.memory_space<smem>>
      %1194 = vector.broadcast %1193 : f32 to vector<14x14xf32>
      %1195 = arith.mulf %1194, %1164 : vector<14x14xf32>
      %1196 = arith.addf %1162, %1195 : vector<14x14xf32>
      %1197 = vector.extract_strided_slice %856 {offsets = [2, 0, 2], sizes = [1, 14, 14], strides = [1, 1, 1]} : vector<4x14x16xf32> to vector<1x14x14xf32>
      %1198 = vector.shape_cast %1197 : vector<1x14x14xf32> to vector<14x14xf32>
      %c26 = arith.constant 26 : index
      %1199 = memref.load %arg2[%c26] : memref<288xf32, #tpu.memory_space<smem>>
      %1200 = vector.broadcast %1199 : f32 to vector<14x14xf32>
      %1201 = arith.mulf %1200, %1198 : vector<14x14xf32>
      %1202 = arith.addf %1168, %1201 : vector<14x14xf32>
      %c62 = arith.constant 62 : index
      %1203 = memref.load %arg2[%c62] : memref<288xf32, #tpu.memory_space<smem>>
      %1204 = vector.broadcast %1203 : f32 to vector<14x14xf32>
      %1205 = arith.mulf %1204, %1198 : vector<14x14xf32>
      %1206 = arith.addf %1172, %1205 : vector<14x14xf32>
      %c98 = arith.constant 98 : index
      %1207 = memref.load %arg2[%c98] : memref<288xf32, #tpu.memory_space<smem>>
      %1208 = vector.broadcast %1207 : f32 to vector<14x14xf32>
      %1209 = arith.mulf %1208, %1198 : vector<14x14xf32>
      %1210 = arith.addf %1176, %1209 : vector<14x14xf32>
      %c134 = arith.constant 134 : index
      %1211 = memref.load %arg2[%c134] : memref<288xf32, #tpu.memory_space<smem>>
      %1212 = vector.broadcast %1211 : f32 to vector<14x14xf32>
      %1213 = arith.mulf %1212, %1198 : vector<14x14xf32>
      %1214 = arith.addf %1180, %1213 : vector<14x14xf32>
      %c170 = arith.constant 170 : index
      %1215 = memref.load %arg2[%c170] : memref<288xf32, #tpu.memory_space<smem>>
      %1216 = vector.broadcast %1215 : f32 to vector<14x14xf32>
      %1217 = arith.mulf %1216, %1198 : vector<14x14xf32>
      %1218 = arith.addf %1184, %1217 : vector<14x14xf32>
      %c206 = arith.constant 206 : index
      %1219 = memref.load %arg2[%c206] : memref<288xf32, #tpu.memory_space<smem>>
      %1220 = vector.broadcast %1219 : f32 to vector<14x14xf32>
      %1221 = arith.mulf %1220, %1198 : vector<14x14xf32>
      %1222 = arith.addf %1188, %1221 : vector<14x14xf32>
      %c242 = arith.constant 242 : index
      %1223 = memref.load %arg2[%c242] : memref<288xf32, #tpu.memory_space<smem>>
      %1224 = vector.broadcast %1223 : f32 to vector<14x14xf32>
      %1225 = arith.mulf %1224, %1198 : vector<14x14xf32>
      %1226 = arith.addf %1192, %1225 : vector<14x14xf32>
      %c278 = arith.constant 278 : index
      %1227 = memref.load %arg2[%c278] : memref<288xf32, #tpu.memory_space<smem>>
      %1228 = vector.broadcast %1227 : f32 to vector<14x14xf32>
      %1229 = arith.mulf %1228, %1198 : vector<14x14xf32>
      %1230 = arith.addf %1196, %1229 : vector<14x14xf32>
      %1231 = vector.extract_strided_slice %856 {offsets = [3, 0, 2], sizes = [1, 14, 14], strides = [1, 1, 1]} : vector<4x14x16xf32> to vector<1x14x14xf32>
      %1232 = vector.shape_cast %1231 : vector<1x14x14xf32> to vector<14x14xf32>
      %c35 = arith.constant 35 : index
      %1233 = memref.load %arg2[%c35] : memref<288xf32, #tpu.memory_space<smem>>
      %1234 = vector.broadcast %1233 : f32 to vector<14x14xf32>
      %1235 = arith.mulf %1234, %1232 : vector<14x14xf32>
      %1236 = arith.addf %1202, %1235 : vector<14x14xf32>
      %c71 = arith.constant 71 : index
      %1237 = memref.load %arg2[%c71] : memref<288xf32, #tpu.memory_space<smem>>
      %1238 = vector.broadcast %1237 : f32 to vector<14x14xf32>
      %1239 = arith.mulf %1238, %1232 : vector<14x14xf32>
      %1240 = arith.addf %1206, %1239 : vector<14x14xf32>
      %c107 = arith.constant 107 : index
      %1241 = memref.load %arg2[%c107] : memref<288xf32, #tpu.memory_space<smem>>
      %1242 = vector.broadcast %1241 : f32 to vector<14x14xf32>
      %1243 = arith.mulf %1242, %1232 : vector<14x14xf32>
      %1244 = arith.addf %1210, %1243 : vector<14x14xf32>
      %c143 = arith.constant 143 : index
      %1245 = memref.load %arg2[%c143] : memref<288xf32, #tpu.memory_space<smem>>
      %1246 = vector.broadcast %1245 : f32 to vector<14x14xf32>
      %1247 = arith.mulf %1246, %1232 : vector<14x14xf32>
      %1248 = arith.addf %1214, %1247 : vector<14x14xf32>
      %c179 = arith.constant 179 : index
      %1249 = memref.load %arg2[%c179] : memref<288xf32, #tpu.memory_space<smem>>
      %1250 = vector.broadcast %1249 : f32 to vector<14x14xf32>
      %1251 = arith.mulf %1250, %1232 : vector<14x14xf32>
      %1252 = arith.addf %1218, %1251 : vector<14x14xf32>
      %c215 = arith.constant 215 : index
      %1253 = memref.load %arg2[%c215] : memref<288xf32, #tpu.memory_space<smem>>
      %1254 = vector.broadcast %1253 : f32 to vector<14x14xf32>
      %1255 = arith.mulf %1254, %1232 : vector<14x14xf32>
      %1256 = arith.addf %1222, %1255 : vector<14x14xf32>
      %c251 = arith.constant 251 : index
      %1257 = memref.load %arg2[%c251] : memref<288xf32, #tpu.memory_space<smem>>
      %1258 = vector.broadcast %1257 : f32 to vector<14x14xf32>
      %1259 = arith.mulf %1258, %1232 : vector<14x14xf32>
      %1260 = arith.addf %1226, %1259 : vector<14x14xf32>
      %c287 = arith.constant 287 : index
      %1261 = memref.load %arg2[%c287] : memref<288xf32, #tpu.memory_space<smem>>
      %1262 = vector.broadcast %1261 : f32 to vector<14x14xf32>
      %1263 = arith.mulf %1262, %1232 : vector<14x14xf32>
      %1264 = arith.addf %1230, %1263 : vector<14x14xf32>
      %cst = arith.constant dense<0.000000e+00> : vector<14x28xf32>
      %1265 = tpu.matmul %1236, %8, %cst {dimension_numbers = #tpu.dot_dimension_numbers<[1], [0], [0], [1], [0, 0, 1, 1], [], []>} : vector<14x14xf32>, vector<14x28xf32>, vector<14x28xf32> -> vector<14x28xf32>
      %cst_18 = arith.constant dense<0.000000e+00> : vector<14x28xf32>
      %1266 = tpu.matmul %1252, %15, %cst_18 {dimension_numbers = #tpu.dot_dimension_numbers<[1], [0], [0], [1], [0, 0, 1, 1], [], []>} : vector<14x14xf32>, vector<14x28xf32>, vector<14x28xf32> -> vector<14x28xf32>
      %1267 = arith.addf %1265, %1266 : vector<14x28xf32>
      %cst_19 = arith.constant dense<0.000000e+00> : vector<14x28xf32>
      %1268 = tpu.matmul %1240, %8, %cst_19 {dimension_numbers = #tpu.dot_dimension_numbers<[1], [0], [0], [1], [0, 0, 1, 1], [], []>} : vector<14x14xf32>, vector<14x28xf32>, vector<14x28xf32> -> vector<14x28xf32>
      %cst_20 = arith.constant dense<0.000000e+00> : vector<14x28xf32>
      %1269 = tpu.matmul %1256, %15, %cst_20 {dimension_numbers = #tpu.dot_dimension_numbers<[1], [0], [0], [1], [0, 0, 1, 1], [], []>} : vector<14x14xf32>, vector<14x28xf32>, vector<14x28xf32> -> vector<14x28xf32>
      %1270 = arith.addf %1268, %1269 : vector<14x28xf32>
      %cst_21 = arith.constant dense<0.000000e+00> : vector<14x28xf32>
      %1271 = tpu.matmul %1244, %8, %cst_21 {dimension_numbers = #tpu.dot_dimension_numbers<[1], [0], [0], [1], [0, 0, 1, 1], [], []>} : vector<14x14xf32>, vector<14x28xf32>, vector<14x28xf32> -> vector<14x28xf32>
      %cst_22 = arith.constant dense<0.000000e+00> : vector<14x28xf32>
      %1272 = tpu.matmul %1260, %15, %cst_22 {dimension_numbers = #tpu.dot_dimension_numbers<[1], [0], [0], [1], [0, 0, 1, 1], [], []>} : vector<14x14xf32>, vector<14x28xf32>, vector<14x28xf32> -> vector<14x28xf32>
      %1273 = arith.addf %1271, %1272 : vector<14x28xf32>
      %cst_23 = arith.constant dense<0.000000e+00> : vector<14x28xf32>
      %1274 = tpu.matmul %1248, %8, %cst_23 {dimension_numbers = #tpu.dot_dimension_numbers<[1], [0], [0], [1], [0, 0, 1, 1], [], []>} : vector<14x14xf32>, vector<14x28xf32>, vector<14x28xf32> -> vector<14x28xf32>
      %cst_24 = arith.constant dense<0.000000e+00> : vector<14x28xf32>
      %1275 = tpu.matmul %1264, %15, %cst_24 {dimension_numbers = #tpu.dot_dimension_numbers<[1], [0], [0], [1], [0, 0, 1, 1], [], []>} : vector<14x14xf32>, vector<14x28xf32>, vector<14x28xf32> -> vector<14x28xf32>
      %1276 = arith.addf %1274, %1275 : vector<14x28xf32>
      %1277 = vector.shape_cast %1267 : vector<14x28xf32> to vector<1x14x28xf32>
      %1278 = vector.shape_cast %1270 : vector<14x28xf32> to vector<1x14x28xf32>
      %1279 = vector.shape_cast %1273 : vector<14x28xf32> to vector<1x14x28xf32>
      %1280 = vector.shape_cast %1276 : vector<14x28xf32> to vector<1x14x28xf32>
      %1281 = tpu.concatenate %1277, %1278, %1279, %1280 in 0 : vector<1x14x28xf32>, vector<1x14x28xf32>, vector<1x14x28xf32>, vector<1x14x28xf32> -> vector<4x14x28xf32>
      %1282 = arith.index_cast %18 : i32 to index
      %c0_25 = arith.constant 0 : index
      %c0_26 = arith.constant 0 : index
      %c0_27 = arith.constant 0 : index
      %1283 = vector.load %arg4[%1282, %c0_25, %c0_26, %c0_27] : memref<2x4x14x28xf32, #tpu.memory_space<vmem>>, vector<1x4x14x28xf32>
      %1284 = vector.shape_cast %1283 : vector<1x4x14x28xf32> to vector<4x14x28xf32>
      %1285 = vector.shape_cast %1281 : vector<4x14x28xf32> to vector<1x4x14x28xf32>
      tpu.vector_store %arg4[%1282, %c0_25, %c0_26, %c0_27], %1285 {strides = array<i32>} : memref<2x4x14x28xf32, #tpu.memory_space<vmem>>, vector<1x4x14x28xf32>,
    }
    %c2_i32_4 = arith.constant 2 : i32
    return
  }
  func.func @transform_0(%arg0: i32) -> (i32, i32, i32, i32) {
    %c0_i32 = arith.constant 0 : i32
    %c0_i32_0 = arith.constant 0 : i32
    %c0_i32_1 = arith.constant 0 : i32
    %c0_i32_2 = arith.constant 0 : i32
    return %arg0, %c0_i32, %c0_i32_0, %c0_i32_1 : i32, i32, i32, i32
  }
  func.func @transform_1(%arg0: i32) -> i32 {
    %c0_i32 = arith.constant 0 : i32
    %c0_i32_0 = arith.constant 0 : i32
    return %c0_i32 : i32
  }
  func.func @transform_2(%arg0: i32) -> i32 {
    %c0_i32 = arith.constant 0 : i32
    %c0_i32_0 = arith.constant 0 : i32
    return %c0_i32 : i32
  }
  func.func @transform_3(%arg0: i32) -> (i32, i32, i32, i32) {
    %c0_i32 = arith.constant 0 : i32
    %c0_i32_0 = arith.constant 0 : i32
    %c0_i32_1 = arith.constant 0 : i32
    %c0_i32_2 = arith.constant 0 : i32
    return %arg0, %c0_i32, %c0_i32_0, %c0_i32_1 : i32, i32, i32, i32
  }
}

</mosaic_0001>

<llo_original>
// kernel: sp_conv_transpose2d.1
$region0: #{sp_conv_transpose2d.1}
  #allocation0 [shape = 'u32[]', space=smem, size = 0x4, offset = 0x4, fixed_abs, tag = 'smem constant byte address 0x4 - core index']
  #allocation1 [shape = 'u32[144,128]{1,0:T(1,128)}', space=vmem, size = 0x12000, scoped, tag = 'internal scratch']
  %s0 = inlined_call_operand.vmem [shape: f32[2,4,16,16], index: 0, kind: input, shape index: {}]
  %s1 = inlined_call_operand.vmem [shape: f32[288], index: 1, kind: input, shape index: {}]
  %s2 = inlined_call_operand.vmem [shape: f32[8], index: 2, kind: input, shape index: {}]
  %s3 = inlined_call_operand.vmem [shape: f32[2,4,14,28], index: 3, kind: output, shape index: {}]
  %s4 = sld [smem:[#allocation0]]
  $region37: #{sp_conv_transpose2d.1} parent=0
    _
  %s6 = ssub.s32 1, %s4
  %s7 = scalar_select 0, %s6, %s4
  $region1: #{sp_conv_transpose2d.1} parent=0
    #allocation2 [shape = 'u8[1536]{0}', space=smem, size = 0x600, scoped, tag = 'input window, operand 1, single buffered']
    #allocation3 [shape = 's32[1]{0}', space=sflag, size = 0x4, scoped, tag = 'scoped memory for sp_conv_transpose2d.1']
    #allocation4 [shape = 'u8[512]{0}', space=smem, size = 0x200, scoped, tag = 'input window, operand 2, single buffered']
    #allocation5 [shape = 's32[1]{0}', space=sflag, size = 0x4, scoped, tag = 'scoped memory for sp_conv_transpose2d.1']
    %8 = vsyncpa [#allocation3], 0
    %9 = vsyncpa [#allocation5], 0
    // Predicated region
    $region2: #{sp_conv_transpose2d.1} parent=1 // pred_check
      _
    $region3: #{sp_conv_transpose2d.1} parent=1 // pred_check_branch
      %11 = sbr.rel (0) target = $region5
    $region4: #{sp_conv_transpose2d.1} parent=1 // pred_region
      _
    $region5: #{sp_conv_transpose2d.1} parent=1 // pred_fallthru
      _
    // Predicated region
    $region6: #{sp_conv_transpose2d.1} parent=1 // pred_check
      _
    $region7: #{sp_conv_transpose2d.1} parent=1 // pred_check_branch
      %13 = sbr.rel (0) target = $region9
    $region8: #{sp_conv_transpose2d.1} parent=1 // pred_region
      %s15 = ssub.s32 48, 48
      %16 = vsyncadd [#allocation3], %s15
      %s18 = sshll.u32 %s1, 4
      %s19 = int_to_ptr.vmem [resolvable:$true] %s18
      %21 = dma.vmem_to_smem %s19, 48, [#allocation2], [#allocation3]
    $region9: #{sp_conv_transpose2d.1} parent=1 // pred_fallthru
      _
    // Predicated region
    $region10: #{sp_conv_transpose2d.1} parent=1 // pred_check
      _
    $region11: #{sp_conv_transpose2d.1} parent=1 // pred_check_branch
      %23 = sbr.rel (0) target = $region13
    $region12: #{sp_conv_transpose2d.1} parent=1 // pred_region
      %s25 = ssub.s32 16, 16
      %26 = vsyncadd [#allocation5], %s25
      %s28 = sshll.u32 %s2, 4
      %s29 = int_to_ptr.vmem [resolvable:$true] %s28
      %31 = dma.vmem_to_smem %s29, 16, [#allocation4], [#allocation5]
    $region13: #{sp_conv_transpose2d.1} parent=1 // pred_fallthru
      _
    // Predicated region
    $region14: #{sp_conv_transpose2d.1} parent=1 // pred_check
      _
    $region15: #{sp_conv_transpose2d.1} parent=1 // pred_check_branch
      %33 = sbr.rel (0) target = $region17
    $region16: #{sp_conv_transpose2d.1} parent=1 // pred_region
      %34 = dma.done [#allocation3], 48
    $region17: #{sp_conv_transpose2d.1} parent=1 // pred_fallthru
      _
    // Predicated region
    $region18: #{sp_conv_transpose2d.1} parent=1 // pred_check
      _
    $region19: #{sp_conv_transpose2d.1} parent=1 // pred_check_branch
      %36 = sbr.rel (0) target = $region21
    $region20: #{sp_conv_transpose2d.1} parent=1 // pred_region
      %37 = dma.done [#allocation5], 16
    $region21: #{sp_conv_transpose2d.1} parent=1 // pred_fallthru
      _
    %38 = sfence
    %v39 = vlaneseq
    %v40 = vshrl.u32 %v39, 7
    %v41 = vadd.s32 %v40, 8
    %v42 = vlaneseq
    %v43 = vand.u32 %v42, 127
    %v44 = vmul.u32 %v40, 2
    %v45 = vmul.u32 %v41, 2
    %vm46 = vcmp.eq.s32.totalorder %v43, %v44
    %vm47 = vcmp.eq.s32.totalorder %v43, %v45
    %v48 = vsel %vm46, 1, 0
    %v49 = vsel %vm47, 1, 0
    %v50 = vcvt.s32.f32 %v48
    %v51 = vcvt.s32.f32 %v49
    %v52 = vadd.s32 %v44, 1
    %v53 = vadd.s32 %v45, 1
    %vm54 = vcmp.eq.s32.totalorder %v43, %v52
    %vm55 = vcmp.eq.s32.totalorder %v43, %v53
    %v56 = vsel %vm54, 1, 0
    %v57 = vsel %vm55, 1, 0
    %v58 = vcvt.s32.f32 %v56
    %v59 = vcvt.s32.f32 %v57
    loop: start=0, step=1, limit=2
    $region22: #{sp_conv_transpose2d.1} parent=1 // loop_pre_header
      _
    $region23: #{sp_conv_transpose2d.1} parent=1 // loop_header
      %s61 = sphi 0, %s65
      %p62 = scmp.ge.s32.totalorder %s61, 2
    $region24: #{sp_conv_transpose2d.1} parent=1 // loop_header_branch
      %64 = sbr.rel (%p62) target = $region28
    $region25: #{sp_conv_transpose2d.1} parent=1 // loop_body
      %s66 = smul.u32 %s61, 64
      %s67 = scalar_lea.vmem %s0, %s66
      %v68 = vld [vmem:[%s67] sm:$0xff]
      %v69 = vld [vmem:[%s67 + $0x8] sm:$0xff]
      %v70 = vld [vmem:[%s67 + $0x10] sm:$0xff]
      %v71 = vld [vmem:[%s67 + $0x18] sm:$0xff]
      %v72 = vld [vmem:[%s67 + $0x20] sm:$0xff]
      %v73 = vld [vmem:[%s67 + $0x28] sm:$0xff]
      %v74 = vld [vmem:[%s67 + $0x30] sm:$0xff]
      %v75 = vld [vmem:[%s67 + $0x38] sm:$0xff]
      %s76 = sld [smem:[#allocation4]]
      %v77 = vstv %s76
      %s78 = sld [smem:[#allocation4 + $0x1]]
      %v79 = vstv %s78
      %s80 = sld [smem:[#allocation4 + $0x2]]
      %v81 = vstv %s80
      %s82 = sld [smem:[#allocation4 + $0x3]]
      %v83 = vstv %s82
      %s84 = sld [smem:[#allocation4 + $0x4]]
      %v85 = vstv %s84
      %s86 = sld [smem:[#allocation4 + $0x5]]
      %v87 = vstv %s86
      %s88 = sld [smem:[#allocation4 + $0x6]]
      %v89 = vstv %s88
      %s90 = sld [smem:[#allocation4 + $0x7]]
      %v91 = vstv %s90
      %s92 = sld [smem:[#allocation2]]
      %v93 = vstv %s92
      %v94 = vmul.f32 %v93, %v68
      %v95 = vmul.f32 %v93, %v69
      %v96 = vadd.f32 %v77, %v94
      %v97 = vadd.f32 %v77, %v95
      %s98 = sld [smem:[#allocation2 + $0x24]]
      %v99 = vstv %s98
      %v100 = vmul.f32 %v99, %v68
      %v101 = vmul.f32 %v99, %v69
      %v102 = vadd.f32 %v79, %v100
      %v103 = vadd.f32 %v79, %v101
      %s104 = sld [smem:[#allocation2 + $0x48]]
      %v105 = vstv %s104
      %v106 = vmul.f32 %v105, %v68
      %v107 = vmul.f32 %v105, %v69
      %v108 = vadd.f32 %v81, %v106
      %v109 = vadd.f32 %v81, %v107
      %s110 = sld [smem:[#allocation2 + $0x6c]]
      %v111 = vstv %s110
      %v112 = vmul.f32 %v111, %v68
      %v113 = vmul.f32 %v111, %v69
      %v114 = vadd.f32 %v83, %v112
      %v115 = vadd.f32 %v83, %v113
      %s116 = sld [smem:[#allocation2 + $0x90]]
      %v117 = vstv %s116
      %v118 = vmul.f32 %v117, %v68
      %v119 = vmul.f32 %v117, %v69
      %v120 = vadd.f32 %v85, %v118
      %v121 = vadd.f32 %v85, %v119
      %s122 = sld [smem:[#allocation2 + $0xb4]]
      %v123 = vstv %s122
      %v124 = vmul.f32 %v123, %v68
      %v125 = vmul.f32 %v123, %v69
      %v126 = vadd.f32 %v87, %v124
      %v127 = vadd.f32 %v87, %v125
      %s128 = sld [smem:[#allocation2 + $0xd8]]
      %v129 = vstv %s128
      %v130 = vmul.f32 %v129, %v68
      %v131 = vmul.f32 %v129, %v69
      %v132 = vadd.f32 %v89, %v130
      %v133 = vadd.f32 %v89, %v131
      %s134 = sld [smem:[#allocation2 + $0xfc]]
      %v135 = vstv %s134
      %v136 = vmul.f32 %v135, %v68
      %v137 = vmul.f32 %v135, %v69
      %v138 = vadd.f32 %v91, %v136
      %v139 = vadd.f32 %v91, %v137
      %s140 = sld [smem:[#allocation2 + $0x9]]
      %v141 = vstv %s140
      %v142 = vmul.f32 %v141, %v70
      %v143 = vmul.f32 %v141, %v71
      %v144 = vadd.f32 %v96, %v142
      %v145 = vadd.f32 %v97, %v143
      %s146 = sld [smem:[#allocation2 + $0x2d]]
      %v147 = vstv %s146
      %v148 = vmul.f32 %v147, %v70
      %v149 = vmul.f32 %v147, %v71
      %v150 = vadd.f32 %v102, %v148
      %v151 = vadd.f32 %v103, %v149
      %s152 = sld [smem:[#allocation2 + $0x51]]
      %v153 = vstv %s152
      %v154 = vmul.f32 %v153, %v70
      %v155 = vmul.f32 %v153, %v71
      %v156 = vadd.f32 %v108, %v154
      %v157 = vadd.f32 %v109, %v155
      %s158 = sld [smem:[#allocation2 + $0x75]]
      %v159 = vstv %s158
      %v160 = vmul.f32 %v159, %v70
      %v161 = vmul.f32 %v159, %v71
      %v162 = vadd.f32 %v114, %v160
      %v163 = vadd.f32 %v115, %v161
      %s164 = sld [smem:[#allocation2 + $0x99]]
      %v165 = vstv %s164
      %v166 = vmul.f32 %v165, %v70
      %v167 = vmul.f32 %v165, %v71
      %v168 = vadd.f32 %v120, %v166
      %v169 = vadd.f32 %v121, %v167
      %s170 = sld [smem:[#allocation2 + $0xbd]]
      %v171 = vstv %s170
      %v172 = vmul.f32 %v171, %v70
      %v173 = vmul.f32 %v171, %v71
      %v174 = vadd.f32 %v126, %v172
      %v175 = vadd.f32 %v127, %v173
      %s176 = sld [smem:[#allocation2 + $0xe1]]
      %v177 = vstv %s176
      %v178 = vmul.f32 %v177, %v70
      %v179 = vmul.f32 %v177, %v71
      %v180 = vadd.f32 %v132, %v178
      %v181 = vadd.f32 %v133, %v179
      %s182 = sld [smem:[#allocation2 + $0x105]]
      %v183 = vstv %s182
      %v184 = vmul.f32 %v183, %v70
      %v185 = vmul.f32 %v183, %v71
      %v186 = vadd.f32 %v138, %v184
      %v187 = vadd.f32 %v139, %v185
      %s188 = sld [smem:[#allocation2 + $0x12]]
      %v189 = vstv %s188
      %v190 = vmul.f32 %v189, %v72
      %v191 = vmul.f32 %v189, %v73
      %v192 = vadd.f32 %v144, %v190
      %v193 = vadd.f32 %v145, %v191
      %s194 = sld [smem:[#allocation2 + $0x36]]
      %v195 = vstv %s194
      %v196 = vmul.f32 %v195, %v72
      %v197 = vmul.f32 %v195, %v73
      %v198 = vadd.f32 %v150, %v196
      %v199 = vadd.f32 %v151, %v197
      %s200 = sld [smem:[#allocation2 + $0x5a]]
      %v201 = vstv %s200
      %v202 = vmul.f32 %v201, %v72
      %v203 = vmul.f32 %v201, %v73
      %v204 = vadd.f32 %v156, %v202
      %v205 = vadd.f32 %v157, %v203
      %s206 = sld [smem:[#allocation2 + $0x7e]]
      %v207 = vstv %s206
      %v208 = vmul.f32 %v207, %v72
      %v209 = vmul.f32 %v207, %v73
      %v210 = vadd.f32 %v162, %v208
      %v211 = vadd.f32 %v163, %v209
      %s212 = sld [smem:[#allocation2 + $0xa2]]
      %v213 = vstv %s212
      %v214 = vmul.f32 %v213, %v72
      %v215 = vmul.f32 %v213, %v73
      %v216 = vadd.f32 %v168, %v214
      %v217 = vadd.f32 %v169, %v215
      %s218 = sld [smem:[#allocation2 + $0xc6]]
      %v219 = vstv %s218
      %v220 = vmul.f32 %v219, %v72
      %v221 = vmul.f32 %v219, %v73
      %v222 = vadd.f32 %v174, %v220
      %v223 = vadd.f32 %v175, %v221
      %s224 = sld [smem:[#allocation2 + $0xea]]
      %v225 = vstv %s224
      %v226 = vmul.f32 %v225, %v72
      %v227 = vmul.f32 %v225, %v73
      %v228 = vadd.f32 %v180, %v226
      %v229 = vadd.f32 %v181, %v227
      %s230 = sld [smem:[#allocation2 + $0x10e]]
      %v231 = vstv %s230
      %v232 = vmul.f32 %v231, %v72
      %v233 = vmul.f32 %v231, %v73
      %v234 = vadd.f32 %v186, %v232
      %v235 = vadd.f32 %v187, %v233
      %s236 = sld [smem:[#allocation2 + $0x1b]]
      %v237 = vstv %s236
      %v238 = vmul.f32 %v237, %v74
      %v239 = vmul.f32 %v237, %v75
      %v240 = vadd.f32 %v192, %v238
      %v241 = vadd.f32 %v193, %v239
      %s242 = sld [smem:[#allocation2 + $0x3f]]
      %v243 = vstv %s242
      %v244 = vmul.f32 %v243, %v74
      %v245 = vmul.f32 %v243, %v75
      %v246 = vadd.f32 %v198, %v244
      %v247 = vadd.f32 %v199, %v245
      %s248 = sld [smem:[#allocation2 + $0x63]]
      %v249 = vstv %s248
      %v250 = vmul.f32 %v249, %v74
      %v251 = vmul.f32 %v249, %v75
      %v252 = vadd.f32 %v204, %v250
      %v253 = vadd.f32 %v205, %v251
      %s254 = sld [smem:[#allocation2 + $0x87]]
      %v255 = vstv %s254
      %v256 = vmul.f32 %v255, %v74
      %v257 = vmul.f32 %v255, %v75
      %v258 = vadd.f32 %v210, %v256
      %v259 = vadd.f32 %v211, %v257
      %s260 = sld [smem:[#allocation2 + $0xab]]
      %v261 = vstv %s260
      %v262 = vmul.f32 %v261, %v74
      %v263 = vmul.f32 %v261, %v75
      %v264 = vadd.f32 %v216, %v262
      %v265 = vadd.f32 %v217, %v263
      %s266 = sld [smem:[#allocation2 + $0xcf]]
      %v267 = vstv %s266
      %v268 = vmul.f32 %v267, %v74
      %v269 = vmul.f32 %v267, %v75
      %v270 = vadd.f32 %v222, %v268
      %v271 = vadd.f32 %v223, %v269
      %s272 = sld [smem:[#allocation2 + $0xf3]]
      %v273 = vstv %s272
      %v274 = vmul.f32 %v273, %v74
      %v275 = vmul.f32 %v273, %v75
      %v276 = vadd.f32 %v228, %v274
      %v277 = vadd.f32 %v229, %v275
      %s278 = sld [smem:[#allocation2 + $0x117]]
      %v279 = vstv %s278
      %v280 = vmul.f32 %v279, %v74
      %v281 = vmul.f32 %v279, %v75
      %v282 = vadd.f32 %v234, %v280
      %v283 = vadd.f32 %v235, %v281
      %s284 = sld [smem:[#allocation2 + $0x1]]
      %v285 = vstv %s284
      %v286 = vmul.f32 %v285, %v68
      %v287 = vmul.f32 %v285, %v69
      %290 = vrot.lane.b32.xlu0 %v286, 127
      %v291 = vpop.permute.xlu0 %290
      %292 = vrot.lane.b32.xlu0 %v287, 127
      %v293 = vpop.permute.xlu0 %292
      %v296 = vadd.f32 %v240, %v291
      %v297 = vadd.f32 %v241, %v293
      %s298 = sld [smem:[#allocation2 + $0x25]]
      %v299 = vstv %s298
      %v300 = vmul.f32 %v299, %v68
      %v301 = vmul.f32 %v299, %v69
      %304 = vrot.lane.b32.xlu0 %v300, 127
      %v305 = vpop.permute.xlu0 %304
      %306 = vrot.lane.b32.xlu0 %v301, 127
      %v307 = vpop.permute.xlu0 %306
      %v310 = vadd.f32 %v246, %v305
      %v311 = vadd.f32 %v247, %v307
      %s312 = sld [smem:[#allocation2 + $0x49]]
      %v313 = vstv %s312
      %v314 = vmul.f32 %v313, %v68
      %v315 = vmul.f32 %v313, %v69
      %318 = vrot.lane.b32.xlu0 %v314, 127
      %v319 = vpop.permute.xlu0 %318
      %320 = vrot.lane.b32.xlu0 %v315, 127
      %v321 = vpop.permute.xlu0 %320
      %v324 = vadd.f32 %v252, %v319
      %v325 = vadd.f32 %v253, %v321
      %s326 = sld [smem:[#allocation2 + $0x6d]]
      %v327 = vstv %s326
      %v328 = vmul.f32 %v327, %v68
      %v329 = vmul.f32 %v327, %v69
      %332 = vrot.lane.b32.xlu0 %v328, 127
      %v333 = vpop.permute.xlu0 %332
      %334 = vrot.lane.b32.xlu0 %v329, 127
      %v335 = vpop.permute.xlu0 %334
      %v338 = vadd.f32 %v258, %v333
      %v339 = vadd.f32 %v259, %v335
      %s340 = sld [smem:[#allocation2 + $0x91]]
      %v341 = vstv %s340
      %v342 = vmul.f32 %v341, %v68
      %v343 = vmul.f32 %v341, %v69
      %346 = vrot.lane.b32.xlu0 %v342, 127
      %v347 = vpop.permute.xlu0 %346
      %348 = vrot.lane.b32.xlu0 %v343, 127
      %v349 = vpop.permute.xlu0 %348
      %v352 = vadd.f32 %v264, %v347
      %v353 = vadd.f32 %v265, %v349
      %s354 = sld [smem:[#allocation2 + $0xb5]]
      %v355 = vstv %s354
      %v356 = vmul.f32 %v355, %v68
      %v357 = vmul.f32 %v355, %v69
      %360 = vrot.lane.b32.xlu0 %v356, 127
      %v361 = vpop.permute.xlu0 %360
      %362 = vrot.lane.b32.xlu0 %v357, 127
      %v363 = vpop.permute.xlu0 %362
      %v366 = vadd.f32 %v270, %v361
      %v367 = vadd.f32 %v271, %v363
      %s368 = sld [smem:[#allocation2 + $0xd9]]
      %v369 = vstv %s368
      %v370 = vmul.f32 %v369, %v68
      %v371 = vmul.f32 %v369, %v69
      %374 = vrot.lane.b32.xlu0 %v370, 127
      %v375 = vpop.permute.xlu0 %374
      %376 = vrot.lane.b32.xlu0 %v371, 127
      %v377 = vpop.permute.xlu0 %376
      %v380 = vadd.f32 %v276, %v375
      %v381 = vadd.f32 %v277, %v377
      %s382 = sld [smem:[#allocation2 + $0xfd]]
      %v383 = vstv %s382
      %v384 = vmul.f32 %v383, %v68
      %v385 = vmul.f32 %v383, %v69
      %388 = vrot.lane.b32.xlu0 %v384, 127
      %v389 = vpop.permute.xlu0 %388
      %390 = vrot.lane.b32.xlu0 %v385, 127
      %v391 = vpop.permute.xlu0 %390
      %v394 = vadd.f32 %v282, %v389
      %v395 = vadd.f32 %v283, %v391
      %s396 = sld [smem:[#allocation2 + $0xa]]
      %v397 = vstv %s396
      %v398 = vmul.f32 %v397, %v70
      %v399 = vmul.f32 %v397, %v71
      %402 = vrot.lane.b32.xlu0 %v398, 127
      %v403 = vpop.permute.xlu0 %402
      %404 = vrot.lane.b32.xlu0 %v399, 127
      %v405 = vpop.permute.xlu0 %404
      %v408 = vadd.f32 %v296, %v403
      %v409 = vadd.f32 %v297, %v405
      %s410 = sld [smem:[#allocation2 + $0x2e]]
      %v411 = vstv %s410
      %v412 = vmul.f32 %v411, %v70
      %v413 = vmul.f32 %v411, %v71
      %416 = vrot.lane.b32.xlu0 %v412, 127
      %v417 = vpop.permute.xlu0 %416
      %418 = vrot.lane.b32.xlu0 %v413, 127
      %v419 = vpop.permute.xlu0 %418
      %v422 = vadd.f32 %v310, %v417
      %v423 = vadd.f32 %v311, %v419
      %s424 = sld [smem:[#allocation2 + $0x52]]
      %v425 = vstv %s424
      %v426 = vmul.f32 %v425, %v70
      %v427 = vmul.f32 %v425, %v71
      %430 = vrot.lane.b32.xlu0 %v426, 127
      %v431 = vpop.permute.xlu0 %430
      %432 = vrot.lane.b32.xlu0 %v427, 127
      %v433 = vpop.permute.xlu0 %432
      %v436 = vadd.f32 %v324, %v431
      %v437 = vadd.f32 %v325, %v433
      %s438 = sld [smem:[#allocation2 + $0x76]]
      %v439 = vstv %s438
      %v440 = vmul.f32 %v439, %v70
      %v441 = vmul.f32 %v439, %v71
      %444 = vrot.lane.b32.xlu0 %v440, 127
      %v445 = vpop.permute.xlu0 %444
      %446 = vrot.lane.b32.xlu0 %v441, 127
      %v447 = vpop.permute.xlu0 %446
      %v450 = vadd.f32 %v338, %v445
      %v451 = vadd.f32 %v339, %v447
      %s452 = sld [smem:[#allocation2 + $0x9a]]
      %v453 = vstv %s452
      %v454 = vmul.f32 %v453, %v70
      %v455 = vmul.f32 %v453, %v71
      %458 = vrot.lane.b32.xlu0 %v454, 127
      %v459 = vpop.permute.xlu0 %458
      %460 = vrot.lane.b32.xlu0 %v455, 127
      %v461 = vpop.permute.xlu0 %460
      %v464 = vadd.f32 %v352, %v459
      %v465 = vadd.f32 %v353, %v461
      %s466 = sld [smem:[#allocation2 + $0xbe]]
      %v467 = vstv %s466
      %v468 = vmul.f32 %v467, %v70
      %v469 = vmul.f32 %v467, %v71
      %472 = vrot.lane.b32.xlu0 %v468, 127
      %v473 = vpop.permute.xlu0 %472
      %474 = vrot.lane.b32.xlu0 %v469, 127
      %v475 = vpop.permute.xlu0 %474
      %v478 = vadd.f32 %v366, %v473
      %v479 = vadd.f32 %v367, %v475
      %s480 = sld [smem:[#allocation2 + $0xe2]]
      %v481 = vstv %s480
      %v482 = vmul.f32 %v481, %v70
      %v483 = vmul.f32 %v481, %v71
      %486 = vrot.lane.b32.xlu0 %v482, 127
      %v487 = vpop.permute.xlu0 %486
      %488 = vrot.lane.b32.xlu0 %v483, 127
      %v489 = vpop.permute.xlu0 %488
      %v492 = vadd.f32 %v380, %v487
      %v493 = vadd.f32 %v381, %v489
      %s494 = sld [smem:[#allocation2 + $0x106]]
      %v495 = vstv %s494
      %v496 = vmul.f32 %v495, %v70
      %v497 = vmul.f32 %v495, %v71
      %500 = vrot.lane.b32.xlu0 %v496, 127
      %v501 = vpop.permute.xlu0 %500
      %502 = vrot.lane.b32.xlu0 %v497, 127
      %v503 = vpop.permute.xlu0 %502
      %v506 = vadd.f32 %v394, %v501
      %v507 = vadd.f32 %v395, %v503
      %s508 = sld [smem:[#allocation2 + $0x13]]
      %v509 = vstv %s508
      %v510 = vmul.f32 %v509, %v72
      %v511 = vmul.f32 %v509, %v73
      %514 = vrot.lane.b32.xlu0 %v510, 127
      %v515 = vpop.permute.xlu0 %514
      %516 = vrot.lane.b32.xlu0 %v511, 127
      %v517 = vpop.permute.xlu0 %516
      %v520 = vadd.f32 %v408, %v515
      %v521 = vadd.f32 %v409, %v517
      %s522 = sld [smem:[#allocation2 + $0x37]]
      %v523 = vstv %s522
      %v524 = vmul.f32 %v523, %v72
      %v525 = vmul.f32 %v523, %v73
      %528 = vrot.lane.b32.xlu0 %v524, 127
      %v529 = vpop.permute.xlu0 %528
      %530 = vrot.lane.b32.xlu0 %v525, 127
      %v531 = vpop.permute.xlu0 %530
      %v534 = vadd.f32 %v422, %v529
      %v535 = vadd.f32 %v423, %v531
      %s536 = sld [smem:[#allocation2 + $0x5b]]
      %v537 = vstv %s536
      %v538 = vmul.f32 %v537, %v72
      %v539 = vmul.f32 %v537, %v73
      %542 = vrot.lane.b32.xlu0 %v538, 127
      %v543 = vpop.permute.xlu0 %542
      %544 = vrot.lane.b32.xlu0 %v539, 127
      %v545 = vpop.permute.xlu0 %544
      %v548 = vadd.f32 %v436, %v543
      %v549 = vadd.f32 %v437, %v545
      %s550 = sld [smem:[#allocation2 + $0x7f]]
      %v551 = vstv %s550
      %v552 = vmul.f32 %v551, %v72
      %v553 = vmul.f32 %v551, %v73
      %556 = vrot.lane.b32.xlu0 %v552, 127
      %v557 = vpop.permute.xlu0 %556
      %558 = vrot.lane.b32.xlu0 %v553, 127
      %v559 = vpop.permute.xlu0 %558
      %v562 = vadd.f32 %v450, %v557
      %v563 = vadd.f32 %v451, %v559
      %s564 = sld [smem:[#allocation2 + $0xa3]]
      %v565 = vstv %s564
      %v566 = vmul.f32 %v565, %v72
      %v567 = vmul.f32 %v565, %v73
      %570 = vrot.lane.b32.xlu0 %v566, 127
      %v571 = vpop.permute.xlu0 %570
      %572 = vrot.lane.b32.xlu0 %v567, 127
      %v573 = vpop.permute.xlu0 %572
      %v576 = vadd.f32 %v464, %v571
      %v577 = vadd.f32 %v465, %v573
      %s578 = sld [smem:[#allocation2 + $0xc7]]
      %v579 = vstv %s578
      %v580 = vmul.f32 %v579, %v72
      %v581 = vmul.f32 %v579, %v73
      %584 = vrot.lane.b32.xlu0 %v580, 127
      %v585 = vpop.permute.xlu0 %584
      %586 = vrot.lane.b32.xlu0 %v581, 127
      %v587 = vpop.permute.xlu0 %586
      %v590 = vadd.f32 %v478, %v585
      %v591 = vadd.f32 %v479, %v587
      %s592 = sld [smem:[#allocation2 + $0xeb]]
      %v593 = vstv %s592
      %v594 = vmul.f32 %v593, %v72
      %v595 = vmul.f32 %v593, %v73
      %598 = vrot.lane.b32.xlu0 %v594, 127
      %v599 = vpop.permute.xlu0 %598
      %600 = vrot.lane.b32.xlu0 %v595, 127
      %v601 = vpop.permute.xlu0 %600
      %v604 = vadd.f32 %v492, %v599
      %v605 = vadd.f32 %v493, %v601
      %s606 = sld [smem:[#allocation2 + $0x10f]]
      %v607 = vstv %s606
      %v608 = vmul.f32 %v607, %v72
      %v609 = vmul.f32 %v607, %v73
      %612 = vrot.lane.b32.xlu0 %v608, 127
      %v613 = vpop.permute.xlu0 %612
      %614 = vrot.lane.b32.xlu0 %v609, 127
      %v615 = vpop.permute.xlu0 %614
      %v618 = vadd.f32 %v506, %v613
      %v619 = vadd.f32 %v507, %v615
      %s620 = sld [smem:[#allocation2 + $0x1c]]
      %v621 = vstv %s620
      %v622 = vmul.f32 %v621, %v74
      %v623 = vmul.f32 %v621, %v75
      %626 = vrot.lane.b32.xlu0 %v622, 127
      %v627 = vpop.permute.xlu0 %626
      %628 = vrot.lane.b32.xlu0 %v623, 127
      %v629 = vpop.permute.xlu0 %628
      %v632 = vadd.f32 %v520, %v627
      %v633 = vadd.f32 %v521, %v629
      %s634 = sld [smem:[#allocation2 + $0x40]]
      %v635 = vstv %s634
      %v636 = vmul.f32 %v635, %v74
      %v637 = vmul.f32 %v635, %v75
      %640 = vrot.lane.b32.xlu0 %v636, 127
      %v641 = vpop.permute.xlu0 %640
      %642 = vrot.lane.b32.xlu0 %v637, 127
      %v643 = vpop.permute.xlu0 %642
      %v646 = vadd.f32 %v534, %v641
      %v647 = vadd.f32 %v535, %v643
      %s648 = sld [smem:[#allocation2 + $0x64]]
      %v649 = vstv %s648
      %v650 = vmul.f32 %v649, %v74
      %v651 = vmul.f32 %v649, %v75
      %654 = vrot.lane.b32.xlu0 %v650, 127
      %v655 = vpop.permute.xlu0 %654
      %656 = vrot.lane.b32.xlu0 %v651, 127
      %v657 = vpop.permute.xlu0 %656
      %v660 = vadd.f32 %v548, %v655
      %v661 = vadd.f32 %v549, %v657
      %s662 = sld [smem:[#allocation2 + $0x88]]
      %v663 = vstv %s662
      %v664 = vmul.f32 %v663, %v74
      %v665 = vmul.f32 %v663, %v75
      %668 = vrot.lane.b32.xlu0 %v664, 127
      %v669 = vpop.permute.xlu0 %668
      %670 = vrot.lane.b32.xlu0 %v665, 127
      %v671 = vpop.permute.xlu0 %670
      %v674 = vadd.f32 %v562, %v669
      %v675 = vadd.f32 %v563, %v671
      %s676 = sld [smem:[#allocation2 + $0xac]]
      %v677 = vstv %s676
      %v678 = vmul.f32 %v677, %v74
      %v679 = vmul.f32 %v677, %v75
      %682 = vrot.lane.b32.xlu0 %v678, 127
      %v683 = vpop.permute.xlu0 %682
      %684 = vrot.lane.b32.xlu0 %v679, 127
      %v685 = vpop.permute.xlu0 %684
      %v688 = vadd.f32 %v576, %v683
      %v689 = vadd.f32 %v577, %v685
      %s690 = sld [smem:[#allocation2 + $0xd0]]
      %v691 = vstv %s690
      %v692 = vmul.f32 %v691, %v74
      %v693 = vmul.f32 %v691, %v75
      %696 = vrot.lane.b32.xlu0 %v692, 127
      %v697 = vpop.permute.xlu0 %696
      %698 = vrot.lane.b32.xlu0 %v693, 127
      %v699 = vpop.permute.xlu0 %698
      %v702 = vadd.f32 %v590, %v697
      %v703 = vadd.f32 %v591, %v699
      %s704 = sld [smem:[#allocation2 + $0xf4]]
      %v705 = vstv %s704
      %v706 = vmul.f32 %v705, %v74
      %v707 = vmul.f32 %v705, %v75
      %710 = vrot.lane.b32.xlu0 %v706, 127
      %v711 = vpop.permute.xlu0 %710
      %712 = vrot.lane.b32.xlu0 %v707, 127
      %v713 = vpop.permute.xlu0 %712
      %v716 = vadd.f32 %v604, %v711
      %v717 = vadd.f32 %v605, %v713
      %s718 = sld [smem:[#allocation2 + $0x118]]
      %v719 = vstv %s718
      %v720 = vmul.f32 %v719, %v74
      %v721 = vmul.f32 %v719, %v75
      %724 = vrot.lane.b32.xlu0 %v720, 127
      %v725 = vpop.permute.xlu0 %724
      %726 = vrot.lane.b32.xlu0 %v721, 127
      %v727 = vpop.permute.xlu0 %726
      %v730 = vadd.f32 %v618, %v725
      %v731 = vadd.f32 %v619, %v727
      %s732 = sld [smem:[#allocation2 + $0x2]]
      %v733 = vstv %s732
      %v734 = vmul.f32 %v733, %v68
      %v735 = vmul.f32 %v733, %v69
      %738 = vrot.lane.b32.xlu0 %v734, 126
      %v739 = vpop.permute.xlu0 %738
      %740 = vrot.lane.b32.xlu0 %v735, 126
      %v741 = vpop.permute.xlu0 %740
      %v744 = vadd.f32 %v632, %v739
      %v745 = vadd.f32 %v633, %v741
      %s746 = sld [smem:[#allocation2 + $0x26]]
      %v747 = vstv %s746
      %v748 = vmul.f32 %v747, %v68
      %v749 = vmul.f32 %v747, %v69
      %752 = vrot.lane.b32.xlu0 %v748, 126
      %v753 = vpop.permute.xlu0 %752
      %754 = vrot.lane.b32.xlu0 %v749, 126
      %v755 = vpop.permute.xlu0 %754
      %v758 = vadd.f32 %v646, %v753
      %v759 = vadd.f32 %v647, %v755
      %s760 = sld [smem:[#allocation2 + $0x4a]]
      %v761 = vstv %s760
      %v762 = vmul.f32 %v761, %v68
      %v763 = vmul.f32 %v761, %v69
      %766 = vrot.lane.b32.xlu0 %v762, 126
      %v767 = vpop.permute.xlu0 %766
      %768 = vrot.lane.b32.xlu0 %v763, 126
      %v769 = vpop.permute.xlu0 %768
      %v772 = vadd.f32 %v660, %v767
      %v773 = vadd.f32 %v661, %v769
      %s774 = sld [smem:[#allocation2 + $0x6e]]
      %v775 = vstv %s774
      %v776 = vmul.f32 %v775, %v68
      %v777 = vmul.f32 %v775, %v69
      %780 = vrot.lane.b32.xlu0 %v776, 126
      %v781 = vpop.permute.xlu0 %780
      %782 = vrot.lane.b32.xlu0 %v777, 126
      %v783 = vpop.permute.xlu0 %782
      %v786 = vadd.f32 %v674, %v781
      %v787 = vadd.f32 %v675, %v783
      %s788 = sld [smem:[#allocation2 + $0x92]]
      %v789 = vstv %s788
      %v790 = vmul.f32 %v789, %v68
      %v791 = vmul.f32 %v789, %v69
      %794 = vrot.lane.b32.xlu0 %v790, 126
      %v795 = vpop.permute.xlu0 %794
      %796 = vrot.lane.b32.xlu0 %v791, 126
      %v797 = vpop.permute.xlu0 %796
      %v800 = vadd.f32 %v688, %v795
      %v801 = vadd.f32 %v689, %v797
      %s802 = sld [smem:[#allocation2 + $0xb6]]
      %v803 = vstv %s802
      %v804 = vmul.f32 %v803, %v68
      %v805 = vmul.f32 %v803, %v69
      %808 = vrot.lane.b32.xlu0 %v804, 126
      %v809 = vpop.permute.xlu0 %808
      %810 = vrot.lane.b32.xlu0 %v805, 126
      %v811 = vpop.permute.xlu0 %810
      %v814 = vadd.f32 %v702, %v809
      %v815 = vadd.f32 %v703, %v811
      %s816 = sld [smem:[#allocation2 + $0xda]]
      %v817 = vstv %s816
      %v818 = vmul.f32 %v817, %v68
      %v819 = vmul.f32 %v817, %v69
      %822 = vrot.lane.b32.xlu0 %v818, 126
      %v823 = vpop.permute.xlu0 %822
      %824 = vrot.lane.b32.xlu0 %v819, 126
      %v825 = vpop.permute.xlu0 %824
      %v828 = vadd.f32 %v716, %v823
      %v829 = vadd.f32 %v717, %v825
      %s830 = sld [smem:[#allocation2 + $0xfe]]
      %v831 = vstv %s830
      %v832 = vmul.f32 %v831, %v68
      %v833 = vmul.f32 %v831, %v69
      %836 = vrot.lane.b32.xlu0 %v832, 126
      %v837 = vpop.permute.xlu0 %836
      %838 = vrot.lane.b32.xlu0 %v833, 126
      %v839 = vpop.permute.xlu0 %838
      %v842 = vadd.f32 %v730, %v837
      %v843 = vadd.f32 %v731, %v839
      %s844 = sld [smem:[#allocation2 + $0xb]]
      %v845 = vstv %s844
      %v846 = vmul.f32 %v845, %v70
      %v847 = vmul.f32 %v845, %v71
      %850 = vrot.lane.b32.xlu0 %v846, 126
      %v851 = vpop.permute.xlu0 %850
      %852 = vrot.lane.b32.xlu0 %v847, 126
      %v853 = vpop.permute.xlu0 %852
      %v856 = vadd.f32 %v744, %v851
      %v857 = vadd.f32 %v745, %v853
      %s858 = sld [smem:[#allocation2 + $0x2f]]
      %v859 = vstv %s858
      %v860 = vmul.f32 %v859, %v70
      %v861 = vmul.f32 %v859, %v71
      %864 = vrot.lane.b32.xlu0 %v860, 126
      %v865 = vpop.permute.xlu0 %864
      %866 = vrot.lane.b32.xlu0 %v861, 126
      %v867 = vpop.permute.xlu0 %866
      %v870 = vadd.f32 %v758, %v865
      %v871 = vadd.f32 %v759, %v867
      %s872 = sld [smem:[#allocation2 + $0x53]]
      %v873 = vstv %s872
      %v874 = vmul.f32 %v873, %v70
      %v875 = vmul.f32 %v873, %v71
      %878 = vrot.lane.b32.xlu0 %v874, 126
      %v879 = vpop.permute.xlu0 %878
      %880 = vrot.lane.b32.xlu0 %v875, 126
      %v881 = vpop.permute.xlu0 %880
      %v884 = vadd.f32 %v772, %v879
      %v885 = vadd.f32 %v773, %v881
      %s886 = sld [smem:[#allocation2 + $0x77]]
      %v887 = vstv %s886
      %v888 = vmul.f32 %v887, %v70
      %v889 = vmul.f32 %v887, %v71
      %892 = vrot.lane.b32.xlu0 %v888, 126
      %v893 = vpop.permute.xlu0 %892
      %894 = vrot.lane.b32.xlu0 %v889, 126
      %v895 = vpop.permute.xlu0 %894
      %v898 = vadd.f32 %v786, %v893
      %v899 = vadd.f32 %v787, %v895
      %s900 = sld [smem:[#allocation2 + $0x9b]]
      %v901 = vstv %s900
      %v902 = vmul.f32 %v901, %v70
      %v903 = vmul.f32 %v901, %v71
      %906 = vrot.lane.b32.xlu0 %v902, 126
      %v907 = vpop.permute.xlu0 %906
      %908 = vrot.lane.b32.xlu0 %v903, 126
      %v909 = vpop.permute.xlu0 %908
      %v912 = vadd.f32 %v800, %v907
      %v913 = vadd.f32 %v801, %v909
      %s914 = sld [smem:[#allocation2 + $0xbf]]
      %v915 = vstv %s914
      %v916 = vmul.f32 %v915, %v70
      %v917 = vmul.f32 %v915, %v71
      %920 = vrot.lane.b32.xlu0 %v916, 126
      %v921 = vpop.permute.xlu0 %920
      %922 = vrot.lane.b32.xlu0 %v917, 126
      %v923 = vpop.permute.xlu0 %922
      %v926 = vadd.f32 %v814, %v921
      %v927 = vadd.f32 %v815, %v923
      %s928 = sld [smem:[#allocation2 + $0xe3]]
      %v929 = vstv %s928
      %v930 = vmul.f32 %v929, %v70
      %v931 = vmul.f32 %v929, %v71
      %934 = vrot.lane.b32.xlu0 %v930, 126
      %v935 = vpop.permute.xlu0 %934
      %936 = vrot.lane.b32.xlu0 %v931, 126
      %v937 = vpop.permute.xlu0 %936
      %v940 = vadd.f32 %v828, %v935
      %v941 = vadd.f32 %v829, %v937
      %s942 = sld [smem:[#allocation2 + $0x107]]
      %v943 = vstv %s942
      %v944 = vmul.f32 %v943, %v70
      %v945 = vmul.f32 %v943, %v71
      %948 = vrot.lane.b32.xlu0 %v944, 126
      %v949 = vpop.permute.xlu0 %948
      %950 = vrot.lane.b32.xlu0 %v945, 126
      %v951 = vpop.permute.xlu0 %950
      %v954 = vadd.f32 %v842, %v949
      %v955 = vadd.f32 %v843, %v951
      %s956 = sld [smem:[#allocation2 + $0x14]]
      %v957 = vstv %s956
      %v958 = vmul.f32 %v957, %v72
      %v959 = vmul.f32 %v957, %v73
      %962 = vrot.lane.b32.xlu0 %v958, 126
      %v963 = vpop.permute.xlu0 %962
      %964 = vrot.lane.b32.xlu0 %v959, 126
      %v965 = vpop.permute.xlu0 %964
      %v968 = vadd.f32 %v856, %v963
      %v969 = vadd.f32 %v857, %v965
      %s970 = sld [smem:[#allocation2 + $0x38]]
      %v971 = vstv %s970
      %v972 = vmul.f32 %v971, %v72
      %v973 = vmul.f32 %v971, %v73
      %976 = vrot.lane.b32.xlu0 %v972, 126
      %v977 = vpop.permute.xlu0 %976
      %978 = vrot.lane.b32.xlu0 %v973, 126
      %v979 = vpop.permute.xlu0 %978
      %v982 = vadd.f32 %v870, %v977
      %v983 = vadd.f32 %v871, %v979
      %s984 = sld [smem:[#allocation2 + $0x5c]]
      %v985 = vstv %s984
      %v986 = vmul.f32 %v985, %v72
      %v987 = vmul.f32 %v985, %v73
      %990 = vrot.lane.b32.xlu0 %v986, 126
      %v991 = vpop.permute.xlu0 %990
      %992 = vrot.lane.b32.xlu0 %v987, 126
      %v993 = vpop.permute.xlu0 %992
      %v996 = vadd.f32 %v884, %v991
      %v997 = vadd.f32 %v885, %v993
      %s998 = sld [smem:[#allocation2 + $0x80]]
      %v999 = vstv %s998
      %v1000 = vmul.f32 %v999, %v72
      %v1001 = vmul.f32 %v999, %v73
      %1004 = vrot.lane.b32.xlu0 %v1000, 126
      %v1005 = vpop.permute.xlu0 %1004
      %1006 = vrot.lane.b32.xlu0 %v1001, 126
      %v1007 = vpop.permute.xlu0 %1006
      %v1010 = vadd.f32 %v898, %v1005
      %v1011 = vadd.f32 %v899, %v1007
      %s1012 = sld [smem:[#allocation2 + $0xa4]]
      %v1013 = vstv %s1012
      %v1014 = vmul.f32 %v1013, %v72
      %v1015 = vmul.f32 %v1013, %v73
      %1018 = vrot.lane.b32.xlu0 %v1014, 126
      %v1019 = vpop.permute.xlu0 %1018
      %1020 = vrot.lane.b32.xlu0 %v1015, 126
      %v1021 = vpop.permute.xlu0 %1020
      %v1024 = vadd.f32 %v912, %v1019
      %v1025 = vadd.f32 %v913, %v1021
      %s1026 = sld [smem:[#allocation2 + $0xc8]]
      %v1027 = vstv %s1026
      %v1028 = vmul.f32 %v1027, %v72
      %v1029 = vmul.f32 %v1027, %v73
      %1032 = vrot.lane.b32.xlu0 %v1028, 126
      %v1033 = vpop.permute.xlu0 %1032
      %1034 = vrot.lane.b32.xlu0 %v1029, 126
      %v1035 = vpop.permute.xlu0 %1034
      %v1038 = vadd.f32 %v926, %v1033
      %v1039 = vadd.f32 %v927, %v1035
      %s1040 = sld [smem:[#allocation2 + $0xec]]
      %v1041 = vstv %s1040
      %v1042 = vmul.f32 %v1041, %v72
      %v1043 = vmul.f32 %v1041, %v73
      %1046 = vrot.lane.b32.xlu0 %v1042, 126
      %v1047 = vpop.permute.xlu0 %1046
      %1048 = vrot.lane.b32.xlu0 %v1043, 126
      %v1049 = vpop.permute.xlu0 %1048
      %v1052 = vadd.f32 %v940, %v1047
      %v1053 = vadd.f32 %v941, %v1049
      %s1054 = sld [smem:[#allocation2 + $0x110]]
      %v1055 = vstv %s1054
      %v1056 = vmul.f32 %v1055, %v72
      %v1057 = vmul.f32 %v1055, %v73
      %1060 = vrot.lane.b32.xlu0 %v1056, 126
      %v1061 = vpop.permute.xlu0 %1060
      %1062 = vrot.lane.b32.xlu0 %v1057, 126
      %v1063 = vpop.permute.xlu0 %1062
      %v1066 = vadd.f32 %v954, %v1061
      %v1067 = vadd.f32 %v955, %v1063
      %s1068 = sld [smem:[#allocation2 + $0x1d]]
      %v1069 = vstv %s1068
      %v1070 = vmul.f32 %v1069, %v74
      %v1071 = vmul.f32 %v1069, %v75
      %1074 = vrot.lane.b32.xlu0 %v1070, 126
      %v1075 = vpop.permute.xlu0 %1074
      %1076 = vrot.lane.b32.xlu0 %v1071, 126
      %v1077 = vpop.permute.xlu0 %1076
      %v1080 = vadd.f32 %v968, %v1075
      %v1081 = vadd.f32 %v969, %v1077
      %s1082 = sld [smem:[#allocation2 + $0x41]]
      %v1083 = vstv %s1082
      %v1084 = vmul.f32 %v1083, %v74
      %v1085 = vmul.f32 %v1083, %v75
      %1088 = vrot.lane.b32.xlu0 %v1084, 126
      %v1089 = vpop.permute.xlu0 %1088
      %1090 = vrot.lane.b32.xlu0 %v1085, 126
      %v1091 = vpop.permute.xlu0 %1090
      %v1094 = vadd.f32 %v982, %v1089
      %v1095 = vadd.f32 %v983, %v1091
      %s1096 = sld [smem:[#allocation2 + $0x65]]
      %v1097 = vstv %s1096
      %v1098 = vmul.f32 %v1097, %v74
      %v1099 = vmul.f32 %v1097, %v75
      %1102 = vrot.lane.b32.xlu0 %v1098, 126
      %v1103 = vpop.permute.xlu0 %1102
      %1104 = vrot.lane.b32.xlu0 %v1099, 126
      %v1105 = vpop.permute.xlu0 %1104
      %v1108 = vadd.f32 %v996, %v1103
      %v1109 = vadd.f32 %v997, %v1105
      %s1110 = sld [smem:[#allocation2 + $0x89]]
      %v1111 = vstv %s1110
      %v1112 = vmul.f32 %v1111, %v74
      %v1113 = vmul.f32 %v1111, %v75
      %1116 = vrot.lane.b32.xlu0 %v1112, 126
      %v1117 = vpop.permute.xlu0 %1116
      %1118 = vrot.lane.b32.xlu0 %v1113, 126
      %v1119 = vpop.permute.xlu0 %1118
      %v1122 = vadd.f32 %v1010, %v1117
      %v1123 = vadd.f32 %v1011, %v1119
      %s1124 = sld [smem:[#allocation2 + $0xad]]
      %v1125 = vstv %s1124
      %v1126 = vmul.f32 %v1125, %v74
      %v1127 = vmul.f32 %v1125, %v75
      %1130 = vrot.lane.b32.xlu0 %v1126, 126
      %v1131 = vpop.permute.xlu0 %1130
      %1132 = vrot.lane.b32.xlu0 %v1127, 126
      %v1133 = vpop.permute.xlu0 %1132
      %v1136 = vadd.f32 %v1024, %v1131
      %v1137 = vadd.f32 %v1025, %v1133
      %s1138 = sld [smem:[#allocation2 + $0xd1]]
      %v1139 = vstv %s1138
      %v1140 = vmul.f32 %v1139, %v74
      %v1141 = vmul.f32 %v1139, %v75
      %1144 = vrot.lane.b32.xlu0 %v1140, 126
      %v1145 = vpop.permute.xlu0 %1144
      %1146 = vrot.lane.b32.xlu0 %v1141, 126
      %v1147 = vpop.permute.xlu0 %1146
      %v1150 = vadd.f32 %v1038, %v1145
      %v1151 = vadd.f32 %v1039, %v1147
      %s1152 = sld [smem:[#allocation2 + $0xf5]]
      %v1153 = vstv %s1152
      %v1154 = vmul.f32 %v1153, %v74
      %v1155 = vmul.f32 %v1153, %v75
      %1158 = vrot.lane.b32.xlu0 %v1154, 126
      %v1159 = vpop.permute.xlu0 %1158
      %1160 = vrot.lane.b32.xlu0 %v1155, 126
      %v1161 = vpop.permute.xlu0 %1160
      %v1164 = vadd.f32 %v1052, %v1159
      %v1165 = vadd.f32 %v1053, %v1161
      %s1166 = sld [smem:[#allocation2 + $0x119]]
      %v1167 = vstv %s1166
      %v1168 = vmul.f32 %v1167, %v74
      %v1169 = vmul.f32 %v1167, %v75
      %1172 = vrot.lane.b32.xlu0 %v1168, 126
      %v1173 = vpop.permute.xlu0 %1172
      %1174 = vrot.lane.b32.xlu0 %v1169, 126
      %v1175 = vpop.permute.xlu0 %1174
      %v1178 = vadd.f32 %v1066, %v1173
      %v1179 = vadd.f32 %v1067, %v1175
      %s1180 = sld [smem:[#allocation2 + $0x3]]
      %v1181 = vstv %s1180
      %v1182 = vmul.f32 %v1181, %v68
      %v1183 = vmul.f32 %v1181, %v69
      %vm1186 = vcmask 1046528
      %v1187 = vrot.slane %v1182, 1
      %v1188 = vrot.slane %v1183, 1
      %v1189 = vsel %vm1186, %v1187, %v1188
      %v1192 = vadd.f32 %v1080, %v1189
      %v1193 = vadd.f32 %v1081, %v1188
      %s1194 = sld [smem:[#allocation2 + $0x27]]
      %v1195 = vstv %s1194
      %v1196 = vmul.f32 %v1195, %v68
      %v1197 = vmul.f32 %v1195, %v69
      %v1200 = vrot.slane %v1196, 1
      %v1201 = vrot.slane %v1197, 1
      %v1202 = vsel %vm1186, %v1200, %v1201
      %v1205 = vadd.f32 %v1094, %v1202
      %v1206 = vadd.f32 %v1095, %v1201
      %s1207 = sld [smem:[#allocation2 + $0x4b]]
      %v1208 = vstv %s1207
      %v1209 = vmul.f32 %v1208, %v68
      %v1210 = vmul.f32 %v1208, %v69
      %v1213 = vrot.slane %v1209, 1
      %v1214 = vrot.slane %v1210, 1
      %v1215 = vsel %vm1186, %v1213, %v1214
      %v1218 = vadd.f32 %v1108, %v1215
      %v1219 = vadd.f32 %v1109, %v1214
      %s1220 = sld [smem:[#allocation2 + $0x6f]]
      %v1221 = vstv %s1220
      %v1222 = vmul.f32 %v1221, %v68
      %v1223 = vmul.f32 %v1221, %v69
      %v1226 = vrot.slane %v1222, 1
      %v1227 = vrot.slane %v1223, 1
      %v1228 = vsel %vm1186, %v1226, %v1227
      %v1231 = vadd.f32 %v1122, %v1228
      %v1232 = vadd.f32 %v1123, %v1227
      %s1233 = sld [smem:[#allocation2 + $0x93]]
      %v1234 = vstv %s1233
      %v1235 = vmul.f32 %v1234, %v68
      %v1236 = vmul.f32 %v1234, %v69
      %v1239 = vrot.slane %v1235, 1
      %v1240 = vrot.slane %v1236, 1
      %v1241 = vsel %vm1186, %v1239, %v1240
      %v1244 = vadd.f32 %v1136, %v1241
      %v1245 = vadd.f32 %v1137, %v1240
      %s1246 = sld [smem:[#allocation2 + $0xb7]]
      %v1247 = vstv %s1246
      %v1248 = vmul.f32 %v1247, %v68
      %v1249 = vmul.f32 %v1247, %v69
      %v1252 = vrot.slane %v1248, 1
      %v1253 = vrot.slane %v1249, 1
      %v1254 = vsel %vm1186, %v1252, %v1253
      %v1257 = vadd.f32 %v1150, %v1254
      %v1258 = vadd.f32 %v1151, %v1253
      %s1259 = sld [smem:[#allocation2 + $0xdb]]
      %v1260 = vstv %s1259
      %v1261 = vmul.f32 %v1260, %v68
      %v1262 = vmul.f32 %v1260, %v69
      %v1265 = vrot.slane %v1261, 1
      %v1266 = vrot.slane %v1262, 1
      %v1267 = vsel %vm1186, %v1265, %v1266
      %v1270 = vadd.f32 %v1164, %v1267
      %v1271 = vadd.f32 %v1165, %v1266
      %s1272 = sld [smem:[#allocation2 + $0xff]]
      %v1273 = vstv %s1272
      %v1274 = vmul.f32 %v1273, %v68
      %v1275 = vmul.f32 %v1273, %v69
      %v1278 = vrot.slane %v1274, 1
      %v1279 = vrot.slane %v1275, 1
      %v1280 = vsel %vm1186, %v1278, %v1279
      %v1283 = vadd.f32 %v1178, %v1280
      %v1284 = vadd.f32 %v1179, %v1279
      %s1285 = sld [smem:[#allocation2 + $0xc]]
      %v1286 = vstv %s1285
      %v1287 = vmul.f32 %v1286, %v70
      %v1288 = vmul.f32 %v1286, %v71
      %v1291 = vrot.slane %v1287, 1
      %v1292 = vrot.slane %v1288, 1
      %v1293 = vsel %vm1186, %v1291, %v1292
      %v1296 = vadd.f32 %v1192, %v1293
      %v1297 = vadd.f32 %v1193, %v1292
      %s1298 = sld [smem:[#allocation2 + $0x30]]
      %v1299 = vstv %s1298
      %v1300 = vmul.f32 %v1299, %v70
      %v1301 = vmul.f32 %v1299, %v71
      %v1304 = vrot.slane %v1300, 1
      %v1305 = vrot.slane %v1301, 1
      %v1306 = vsel %vm1186, %v1304, %v1305
      %v1309 = vadd.f32 %v1205, %v1306
      %v1310 = vadd.f32 %v1206, %v1305
      %s1311 = sld [smem:[#allocation2 + $0x54]]
      %v1312 = vstv %s1311
      %v1313 = vmul.f32 %v1312, %v70
      %v1314 = vmul.f32 %v1312, %v71
      %v1317 = vrot.slane %v1313, 1
      %v1318 = vrot.slane %v1314, 1
      %v1319 = vsel %vm1186, %v1317, %v1318
      %v1322 = vadd.f32 %v1218, %v1319
      %v1323 = vadd.f32 %v1219, %v1318
      %s1324 = sld [smem:[#allocation2 + $0x78]]
      %v1325 = vstv %s1324
      %v1326 = vmul.f32 %v1325, %v70
      %v1327 = vmul.f32 %v1325, %v71
      %v1330 = vrot.slane %v1326, 1
      %v1331 = vrot.slane %v1327, 1
      %v1332 = vsel %vm1186, %v1330, %v1331
      %v1335 = vadd.f32 %v1231, %v1332
      %v1336 = vadd.f32 %v1232, %v1331
      %s1337 = sld [smem:[#allocation2 + $0x9c]]
      %v1338 = vstv %s1337
      %v1339 = vmul.f32 %v1338, %v70
      %v1340 = vmul.f32 %v1338, %v71
      %v1343 = vrot.slane %v1339, 1
      %v1344 = vrot.slane %v1340, 1
      %v1345 = vsel %vm1186, %v1343, %v1344
      %v1348 = vadd.f32 %v1244, %v1345
      %v1349 = vadd.f32 %v1245, %v1344
      %s1350 = sld [smem:[#allocation2 + $0xc0]]
      %v1351 = vstv %s1350
      %v1352 = vmul.f32 %v1351, %v70
      %v1353 = vmul.f32 %v1351, %v71
      %v1356 = vrot.slane %v1352, 1
      %v1357 = vrot.slane %v1353, 1
      %v1358 = vsel %vm1186, %v1356, %v1357
      %v1361 = vadd.f32 %v1257, %v1358
      %v1362 = vadd.f32 %v1258, %v1357
      %s1363 = sld [smem:[#allocation2 + $0xe4]]
      %v1364 = vstv %s1363
      %v1365 = vmul.f32 %v1364, %v70
      %v1366 = vmul.f32 %v1364, %v71
      %v1369 = vrot.slane %v1365, 1
      %v1370 = vrot.slane %v1366, 1
      %v1371 = vsel %vm1186, %v1369, %v1370
      %v1374 = vadd.f32 %v1270, %v1371
      %v1375 = vadd.f32 %v1271, %v1370
      %s1376 = sld [smem:[#allocation2 + $0x108]]
      %v1377 = vstv %s1376
      %v1378 = vmul.f32 %v1377, %v70
      %v1379 = vmul.f32 %v1377, %v71
      %v1382 = vrot.slane %v1378, 1
      %v1383 = vrot.slane %v1379, 1
      %v1384 = vsel %vm1186, %v1382, %v1383
      %v1387 = vadd.f32 %v1283, %v1384
      %v1388 = vadd.f32 %v1284, %v1383
      %s1389 = sld [smem:[#allocation2 + $0x15]]
      %v1390 = vstv %s1389
      %v1391 = vmul.f32 %v1390, %v72
      %v1392 = vmul.f32 %v1390, %v73
      %v1395 = vrot.slane %v1391, 1
      %v1396 = vrot.slane %v1392, 1
      %v1397 = vsel %vm1186, %v1395, %v1396
      %v1400 = vadd.f32 %v1296, %v1397
      %v1401 = vadd.f32 %v1297, %v1396
      %s1402 = sld [smem:[#allocation2 + $0x39]]
      %v1403 = vstv %s1402
      %v1404 = vmul.f32 %v1403, %v72
      %v1405 = vmul.f32 %v1403, %v73
      %v1408 = vrot.slane %v1404, 1
      %v1409 = vrot.slane %v1405, 1
      %v1410 = vsel %vm1186, %v1408, %v1409
      %v1413 = vadd.f32 %v1309, %v1410
      %v1414 = vadd.f32 %v1310, %v1409
      %s1415 = sld [smem:[#allocation2 + $0x5d]]
      %v1416 = vstv %s1415
      %v1417 = vmul.f32 %v1416, %v72
      %v1418 = vmul.f32 %v1416, %v73
      %v1421 = vrot.slane %v1417, 1
      %v1422 = vrot.slane %v1418, 1
      %v1423 = vsel %vm1186, %v1421, %v1422
      %v1426 = vadd.f32 %v1322, %v1423
      %v1427 = vadd.f32 %v1323, %v1422
      %s1428 = sld [smem:[#allocation2 + $0x81]]
      %v1429 = vstv %s1428
      %v1430 = vmul.f32 %v1429, %v72
      %v1431 = vmul.f32 %v1429, %v73
      %v1434 = vrot.slane %v1430, 1
      %v1435 = vrot.slane %v1431, 1
      %v1436 = vsel %vm1186, %v1434, %v1435
      %v1439 = vadd.f32 %v1335, %v1436
      %v1440 = vadd.f32 %v1336, %v1435
      %s1441 = sld [smem:[#allocation2 + $0xa5]]
      %v1442 = vstv %s1441
      %v1443 = vmul.f32 %v1442, %v72
      %v1444 = vmul.f32 %v1442, %v73
      %v1447 = vrot.slane %v1443, 1
      %v1448 = vrot.slane %v1444, 1
      %v1449 = vsel %vm1186, %v1447, %v1448
      %v1452 = vadd.f32 %v1348, %v1449
      %v1453 = vadd.f32 %v1349, %v1448
      %s1454 = sld [smem:[#allocation2 + $0xc9]]
      %v1455 = vstv %s1454
      %v1456 = vmul.f32 %v1455, %v72
      %v1457 = vmul.f32 %v1455, %v73
      %v1460 = vrot.slane %v1456, 1
      %v1461 = vrot.slane %v1457, 1
      %v1462 = vsel %vm1186, %v1460, %v1461
      %v1465 = vadd.f32 %v1361, %v1462
      %v1466 = vadd.f32 %v1362, %v1461
      %s1467 = sld [smem:[#allocation2 + $0xed]]
      %v1468 = vstv %s1467
      %v1469 = vmul.f32 %v1468, %v72
      %v1470 = vmul.f32 %v1468, %v73
      %v1473 = vrot.slane %v1469, 1
      %v1474 = vrot.slane %v1470, 1
      %v1475 = vsel %vm1186, %v1473, %v1474
      %v1478 = vadd.f32 %v1374, %v1475
      %v1479 = vadd.f32 %v1375, %v1474
      %s1480 = sld [smem:[#allocation2 + $0x111]]
      %v1481 = vstv %s1480
      %v1482 = vmul.f32 %v1481, %v72
      %v1483 = vmul.f32 %v1481, %v73
      %v1486 = vrot.slane %v1482, 1
      %v1487 = vrot.slane %v1483, 1
      %v1488 = vsel %vm1186, %v1486, %v1487
      %v1491 = vadd.f32 %v1387, %v1488
      %v1492 = vadd.f32 %v1388, %v1487
      %s1493 = sld [smem:[#allocation2 + $0x1e]]
      %v1494 = vstv %s1493
      %v1495 = vmul.f32 %v1494, %v74
      %v1496 = vmul.f32 %v1494, %v75
      %v1499 = vrot.slane %v1495, 1
      %v1500 = vrot.slane %v1496, 1
      %v1501 = vsel %vm1186, %v1499, %v1500
      %v1504 = vadd.f32 %v1400, %v1501
      %v1505 = vadd.f32 %v1401, %v1500
      %s1506 = sld [smem:[#allocation2 + $0x42]]
      %v1507 = vstv %s1506
      %v1508 = vmul.f32 %v1507, %v74
      %v1509 = vmul.f32 %v1507, %v75
      %v1512 = vrot.slane %v1508, 1
      %v1513 = vrot.slane %v1509, 1
      %v1514 = vsel %vm1186, %v1512, %v1513
      %v1517 = vadd.f32 %v1413, %v1514
      %v1518 = vadd.f32 %v1414, %v1513
      %s1519 = sld [smem:[#allocation2 + $0x66]]
      %v1520 = vstv %s1519
      %v1521 = vmul.f32 %v1520, %v74
      %v1522 = vmul.f32 %v1520, %v75
      %v1525 = vrot.slane %v1521, 1
      %v1526 = vrot.slane %v1522, 1
      %v1527 = vsel %vm1186, %v1525, %v1526
      %v1530 = vadd.f32 %v1426, %v1527
      %v1531 = vadd.f32 %v1427, %v1526
      %s1532 = sld [smem:[#allocation2 + $0x8a]]
      %v1533 = vstv %s1532
      %v1534 = vmul.f32 %v1533, %v74
      %v1535 = vmul.f32 %v1533, %v75
      %v1538 = vrot.slane %v1534, 1
      %v1539 = vrot.slane %v1535, 1
      %v1540 = vsel %vm1186, %v1538, %v1539
      %v1543 = vadd.f32 %v1439, %v1540
      %v1544 = vadd.f32 %v1440, %v1539
      %s1545 = sld [smem:[#allocation2 + $0xae]]
      %v1546 = vstv %s1545
      %v1547 = vmul.f32 %v1546, %v74
      %v1548 = vmul.f32 %v1546, %v75
      %v1551 = vrot.slane %v1547, 1
      %v1552 = vrot.slane %v1548, 1
      %v1553 = vsel %vm1186, %v1551, %v1552
      %v1556 = vadd.f32 %v1452, %v1553
      %v1557 = vadd.f32 %v1453, %v1552
      %s1558 = sld [smem:[#allocation2 + $0xd2]]
      %v1559 = vstv %s1558
      %v1560 = vmul.f32 %v1559, %v74
      %v1561 = vmul.f32 %v1559, %v75
      %v1564 = vrot.slane %v1560, 1
      %v1565 = vrot.slane %v1561, 1
      %v1566 = vsel %vm1186, %v1564, %v1565
      %v1569 = vadd.f32 %v1465, %v1566
      %v1570 = vadd.f32 %v1466, %v1565
      %s1571 = sld [smem:[#allocation2 + $0xf6]]
      %v1572 = vstv %s1571
      %v1573 = vmul.f32 %v1572, %v74
      %v1574 = vmul.f32 %v1572, %v75
      %v1577 = vrot.slane %v1573, 1
      %v1578 = vrot.slane %v1574, 1
      %v1579 = vsel %vm1186, %v1577, %v1578
      %v1582 = vadd.f32 %v1478, %v1579
      %v1583 = vadd.f32 %v1479, %v1578
      %s1584 = sld [smem:[#allocation2 + $0x11a]]
      %v1585 = vstv %s1584
      %v1586 = vmul.f32 %v1585, %v74
      %v1587 = vmul.f32 %v1585, %v75
      %v1590 = vrot.slane %v1586, 1
      %v1591 = vrot.slane %v1587, 1
      %v1592 = vsel %vm1186, %v1590, %v1591
      %v1595 = vadd.f32 %v1491, %v1592
      %v1596 = vadd.f32 %v1492, %v1591
      %s1597 = sld [smem:[#allocation2 + $0x4]]
      %v1598 = vstv %s1597
      %v1599 = vmul.f32 %v1598, %v68
      %v1600 = vmul.f32 %v1598, %v69
      %v1603 = vrot.slane %v1599, 1
      %v1604 = vrot.slane %v1600, 1
      %v1605 = vsel %vm1186, %v1603, %v1604
      %1606 = vrot.lane.b32.xlu0 %v1605, 127
      %v1607 = vpop.permute.xlu0 %1606
      %1608 = vrot.lane.b32.xlu0 %v1604, 127
      %v1609 = vpop.permute.xlu0 %1608
      %v1612 = vadd.f32 %v1504, %v1607
      %v1613 = vadd.f32 %v1505, %v1609
      %s1614 = sld [smem:[#allocation2 + $0x28]]
      %v1615 = vstv %s1614
      %v1616 = vmul.f32 %v1615, %v68
      %v1617 = vmul.f32 %v1615, %v69
      %v1620 = vrot.slane %v1616, 1
      %v1621 = vrot.slane %v1617, 1
      %v1622 = vsel %vm1186, %v1620, %v1621
      %1623 = vrot.lane.b32.xlu0 %v1622, 127
      %v1624 = vpop.permute.xlu0 %1623
      %1625 = vrot.lane.b32.xlu0 %v1621, 127
      %v1626 = vpop.permute.xlu0 %1625
      %v1629 = vadd.f32 %v1517, %v1624
      %v1630 = vadd.f32 %v1518, %v1626
      %s1631 = sld [smem:[#allocation2 + $0x4c]]
      %v1632 = vstv %s1631
      %v1633 = vmul.f32 %v1632, %v68
      %v1634 = vmul.f32 %v1632, %v69
      %v1637 = vrot.slane %v1633, 1
      %v1638 = vrot.slane %v1634, 1
      %v1639 = vsel %vm1186, %v1637, %v1638
      %1640 = vrot.lane.b32.xlu0 %v1639, 127
      %v1641 = vpop.permute.xlu0 %1640
      %1642 = vrot.lane.b32.xlu0 %v1638, 127
      %v1643 = vpop.permute.xlu0 %1642
      %v1646 = vadd.f32 %v1530, %v1641
      %v1647 = vadd.f32 %v1531, %v1643
      %s1648 = sld [smem:[#allocation2 + $0x70]]
      %v1649 = vstv %s1648
      %v1650 = vmul.f32 %v1649, %v68
      %v1651 = vmul.f32 %v1649, %v69
      %v1654 = vrot.slane %v1650, 1
      %v1655 = vrot.slane %v1651, 1
      %v1656 = vsel %vm1186, %v1654, %v1655
      %1657 = vrot.lane.b32.xlu0 %v1656, 127
      %v1658 = vpop.permute.xlu0 %1657
      %1659 = vrot.lane.b32.xlu0 %v1655, 127
      %v1660 = vpop.permute.xlu0 %1659
      %v1663 = vadd.f32 %v1543, %v1658
      %v1664 = vadd.f32 %v1544, %v1660
      %s1665 = sld [smem:[#allocation2 + $0x94]]
      %v1666 = vstv %s1665
      %v1667 = vmul.f32 %v1666, %v68
      %v1668 = vmul.f32 %v1666, %v69
      %v1671 = vrot.slane %v1667, 1
      %v1672 = vrot.slane %v1668, 1
      %v1673 = vsel %vm1186, %v1671, %v1672
      %1674 = vrot.lane.b32.xlu0 %v1673, 127
      %v1675 = vpop.permute.xlu0 %1674
      %1676 = vrot.lane.b32.xlu0 %v1672, 127
      %v1677 = vpop.permute.xlu0 %1676
      %v1680 = vadd.f32 %v1556, %v1675
      %v1681 = vadd.f32 %v1557, %v1677
      %s1682 = sld [smem:[#allocation2 + $0xb8]]
      %v1683 = vstv %s1682
      %v1684 = vmul.f32 %v1683, %v68
      %v1685 = vmul.f32 %v1683, %v69
      %v1688 = vrot.slane %v1684, 1
      %v1689 = vrot.slane %v1685, 1
      %v1690 = vsel %vm1186, %v1688, %v1689
      %1691 = vrot.lane.b32.xlu0 %v1690, 127
      %v1692 = vpop.permute.xlu0 %1691
      %1693 = vrot.lane.b32.xlu0 %v1689, 127
      %v1694 = vpop.permute.xlu0 %1693
      %v1697 = vadd.f32 %v1569, %v1692
      %v1698 = vadd.f32 %v1570, %v1694
      %s1699 = sld [smem:[#allocation2 + $0xdc]]
      %v1700 = vstv %s1699
      %v1701 = vmul.f32 %v1700, %v68
      %v1702 = vmul.f32 %v1700, %v69
      %v1705 = vrot.slane %v1701, 1
      %v1706 = vrot.slane %v1702, 1
      %v1707 = vsel %vm1186, %v1705, %v1706
      %1708 = vrot.lane.b32.xlu0 %v1707, 127
      %v1709 = vpop.permute.xlu0 %1708
      %1710 = vrot.lane.b32.xlu0 %v1706, 127
      %v1711 = vpop.permute.xlu0 %1710
      %v1714 = vadd.f32 %v1582, %v1709
      %v1715 = vadd.f32 %v1583, %v1711
      %s1716 = sld [smem:[#allocation2 + $0x100]]
      %v1717 = vstv %s1716
      %v1718 = vmul.f32 %v1717, %v68
      %v1719 = vmul.f32 %v1717, %v69
      %v1722 = vrot.slane %v1718, 1
      %v1723 = vrot.slane %v1719, 1
      %v1724 = vsel %vm1186, %v1722, %v1723
      %1725 = vrot.lane.b32.xlu0 %v1724, 127
      %v1726 = vpop.permute.xlu0 %1725
      %1727 = vrot.lane.b32.xlu0 %v1723, 127
      %v1728 = vpop.permute.xlu0 %1727
      %v1731 = vadd.f32 %v1595, %v1726
      %v1732 = vadd.f32 %v1596, %v1728
      %s1733 = sld [smem:[#allocation2 + $0xd]]
      %v1734 = vstv %s1733
      %v1735 = vmul.f32 %v1734, %v70
      %v1736 = vmul.f32 %v1734, %v71
      %v1739 = vrot.slane %v1735, 1
      %v1740 = vrot.slane %v1736, 1
      %v1741 = vsel %vm1186, %v1739, %v1740
      %1742 = vrot.lane.b32.xlu0 %v1741, 127
      %v1743 = vpop.permute.xlu0 %1742
      %1744 = vrot.lane.b32.xlu0 %v1740, 127
      %v1745 = vpop.permute.xlu0 %1744
      %v1748 = vadd.f32 %v1612, %v1743
      %v1749 = vadd.f32 %v1613, %v1745
      %s1750 = sld [smem:[#allocation2 + $0x31]]
      %v1751 = vstv %s1750
      %v1752 = vmul.f32 %v1751, %v70
      %v1753 = vmul.f32 %v1751, %v71
      %v1756 = vrot.slane %v1752, 1
      %v1757 = vrot.slane %v1753, 1
      %v1758 = vsel %vm1186, %v1756, %v1757
      %1759 = vrot.lane.b32.xlu0 %v1758, 127
      %v1760 = vpop.permute.xlu0 %1759
      %1761 = vrot.lane.b32.xlu0 %v1757, 127
      %v1762 = vpop.permute.xlu0 %1761
      %v1765 = vadd.f32 %v1629, %v1760
      %v1766 = vadd.f32 %v1630, %v1762
      %s1767 = sld [smem:[#allocation2 + $0x55]]
      %v1768 = vstv %s1767
      %v1769 = vmul.f32 %v1768, %v70
      %v1770 = vmul.f32 %v1768, %v71
      %v1773 = vrot.slane %v1769, 1
      %v1774 = vrot.slane %v1770, 1
      %v1775 = vsel %vm1186, %v1773, %v1774
      %1776 = vrot.lane.b32.xlu0 %v1775, 127
      %v1777 = vpop.permute.xlu0 %1776
      %1778 = vrot.lane.b32.xlu0 %v1774, 127
      %v1779 = vpop.permute.xlu0 %1778
      %v1782 = vadd.f32 %v1646, %v1777
      %v1783 = vadd.f32 %v1647, %v1779
      %s1784 = sld [smem:[#allocation2 + $0x79]]
      %v1785 = vstv %s1784
      %v1786 = vmul.f32 %v1785, %v70
      %v1787 = vmul.f32 %v1785, %v71
      %v1790 = vrot.slane %v1786, 1
      %v1791 = vrot.slane %v1787, 1
      %v1792 = vsel %vm1186, %v1790, %v1791
      %1793 = vrot.lane.b32.xlu0 %v1792, 127
      %v1794 = vpop.permute.xlu0 %1793
      %1795 = vrot.lane.b32.xlu0 %v1791, 127
      %v1796 = vpop.permute.xlu0 %1795
      %v1799 = vadd.f32 %v1663, %v1794
      %v1800 = vadd.f32 %v1664, %v1796
      %s1801 = sld [smem:[#allocation2 + $0x9d]]
      %v1802 = vstv %s1801
      %v1803 = vmul.f32 %v1802, %v70
      %v1804 = vmul.f32 %v1802, %v71
      %v1807 = vrot.slane %v1803, 1
      %v1808 = vrot.slane %v1804, 1
      %v1809 = vsel %vm1186, %v1807, %v1808
      %1810 = vrot.lane.b32.xlu0 %v1809, 127
      %v1811 = vpop.permute.xlu0 %1810
      %1812 = vrot.lane.b32.xlu0 %v1808, 127
      %v1813 = vpop.permute.xlu0 %1812
      %v1816 = vadd.f32 %v1680, %v1811
      %v1817 = vadd.f32 %v1681, %v1813
      %s1818 = sld [smem:[#allocation2 + $0xc1]]
      %v1819 = vstv %s1818
      %v1820 = vmul.f32 %v1819, %v70
      %v1821 = vmul.f32 %v1819, %v71
      %v1824 = vrot.slane %v1820, 1
      %v1825 = vrot.slane %v1821, 1
      %v1826 = vsel %vm1186, %v1824, %v1825
      %1827 = vrot.lane.b32.xlu0 %v1826, 127
      %v1828 = vpop.permute.xlu0 %1827
      %1829 = vrot.lane.b32.xlu0 %v1825, 127
      %v1830 = vpop.permute.xlu0 %1829
      %v1833 = vadd.f32 %v1697, %v1828
      %v1834 = vadd.f32 %v1698, %v1830
      %s1835 = sld [smem:[#allocation2 + $0xe5]]
      %v1836 = vstv %s1835
      %v1837 = vmul.f32 %v1836, %v70
      %v1838 = vmul.f32 %v1836, %v71
      %v1841 = vrot.slane %v1837, 1
      %v1842 = vrot.slane %v1838, 1
      %v1843 = vsel %vm1186, %v1841, %v1842
      %1844 = vrot.lane.b32.xlu0 %v1843, 127
      %v1845 = vpop.permute.xlu0 %1844
      %1846 = vrot.lane.b32.xlu0 %v1842, 127
      %v1847 = vpop.permute.xlu0 %1846
      %v1850 = vadd.f32 %v1714, %v1845
      %v1851 = vadd.f32 %v1715, %v1847
      %s1852 = sld [smem:[#allocation2 + $0x109]]
      %v1853 = vstv %s1852
      %v1854 = vmul.f32 %v1853, %v70
      %v1855 = vmul.f32 %v1853, %v71
      %v1858 = vrot.slane %v1854, 1
      %v1859 = vrot.slane %v1855, 1
      %v1860 = vsel %vm1186, %v1858, %v1859
      %1861 = vrot.lane.b32.xlu0 %v1860, 127
      %v1862 = vpop.permute.xlu0 %1861
      %1863 = vrot.lane.b32.xlu0 %v1859, 127
      %v1864 = vpop.permute.xlu0 %1863
      %v1867 = vadd.f32 %v1731, %v1862
      %v1868 = vadd.f32 %v1732, %v1864
      %s1869 = sld [smem:[#allocation2 + $0x16]]
      %v1870 = vstv %s1869
      %v1871 = vmul.f32 %v1870, %v72
      %v1872 = vmul.f32 %v1870, %v73
      %v1875 = vrot.slane %v1871, 1
      %v1876 = vrot.slane %v1872, 1
      %v1877 = vsel %vm1186, %v1875, %v1876
      %1878 = vrot.lane.b32.xlu0 %v1877, 127
      %v1879 = vpop.permute.xlu0 %1878
      %1880 = vrot.lane.b32.xlu0 %v1876, 127
      %v1881 = vpop.permute.xlu0 %1880
      %v1884 = vadd.f32 %v1748, %v1879
      %v1885 = vadd.f32 %v1749, %v1881
      %s1886 = sld [smem:[#allocation2 + $0x3a]]
      %v1887 = vstv %s1886
      %v1888 = vmul.f32 %v1887, %v72
      %v1889 = vmul.f32 %v1887, %v73
      %v1892 = vrot.slane %v1888, 1
      %v1893 = vrot.slane %v1889, 1
      %v1894 = vsel %vm1186, %v1892, %v1893
      %1895 = vrot.lane.b32.xlu0 %v1894, 127
      %v1896 = vpop.permute.xlu0 %1895
      %1897 = vrot.lane.b32.xlu0 %v1893, 127
      %v1898 = vpop.permute.xlu0 %1897
      %v1901 = vadd.f32 %v1765, %v1896
      %v1902 = vadd.f32 %v1766, %v1898
      %s1903 = sld [smem:[#allocation2 + $0x5e]]
      %v1904 = vstv %s1903
      %v1905 = vmul.f32 %v1904, %v72
      %v1906 = vmul.f32 %v1904, %v73
      %v1909 = vrot.slane %v1905, 1
      %v1910 = vrot.slane %v1906, 1
      %v1911 = vsel %vm1186, %v1909, %v1910
      %1912 = vrot.lane.b32.xlu0 %v1911, 127
      %v1913 = vpop.permute.xlu0 %1912
      %1914 = vrot.lane.b32.xlu0 %v1910, 127
      %v1915 = vpop.permute.xlu0 %1914
      %v1918 = vadd.f32 %v1782, %v1913
      %v1919 = vadd.f32 %v1783, %v1915
      %s1920 = sld [smem:[#allocation2 + $0x82]]
      %v1921 = vstv %s1920
      %v1922 = vmul.f32 %v1921, %v72
      %v1923 = vmul.f32 %v1921, %v73
      %v1926 = vrot.slane %v1922, 1
      %v1927 = vrot.slane %v1923, 1
      %v1928 = vsel %vm1186, %v1926, %v1927
      %1929 = vrot.lane.b32.xlu0 %v1928, 127
      %v1930 = vpop.permute.xlu0 %1929
      %1931 = vrot.lane.b32.xlu0 %v1927, 127
      %v1932 = vpop.permute.xlu0 %1931
      %v1935 = vadd.f32 %v1799, %v1930
      %v1936 = vadd.f32 %v1800, %v1932
      %s1937 = sld [smem:[#allocation2 + $0xa6]]
      %v1938 = vstv %s1937
      %v1939 = vmul.f32 %v1938, %v72
      %v1940 = vmul.f32 %v1938, %v73
      %v1943 = vrot.slane %v1939, 1
      %v1944 = vrot.slane %v1940, 1
      %v1945 = vsel %vm1186, %v1943, %v1944
      %1946 = vrot.lane.b32.xlu0 %v1945, 127
      %v1947 = vpop.permute.xlu0 %1946
      %1948 = vrot.lane.b32.xlu0 %v1944, 127
      %v1949 = vpop.permute.xlu0 %1948
      %v1952 = vadd.f32 %v1816, %v1947
      %v1953 = vadd.f32 %v1817, %v1949
      %s1954 = sld [smem:[#allocation2 + $0xca]]
      %v1955 = vstv %s1954
      %v1956 = vmul.f32 %v1955, %v72
      %v1957 = vmul.f32 %v1955, %v73
      %v1960 = vrot.slane %v1956, 1
      %v1961 = vrot.slane %v1957, 1
      %v1962 = vsel %vm1186, %v1960, %v1961
      %1963 = vrot.lane.b32.xlu0 %v1962, 127
      %v1964 = vpop.permute.xlu0 %1963
      %1965 = vrot.lane.b32.xlu0 %v1961, 127
      %v1966 = vpop.permute.xlu0 %1965
      %v1969 = vadd.f32 %v1833, %v1964
      %v1970 = vadd.f32 %v1834, %v1966
      %s1971 = sld [smem:[#allocation2 + $0xee]]
      %v1972 = vstv %s1971
      %v1973 = vmul.f32 %v1972, %v72
      %v1974 = vmul.f32 %v1972, %v73
      %v1977 = vrot.slane %v1973, 1
      %v1978 = vrot.slane %v1974, 1
      %v1979 = vsel %vm1186, %v1977, %v1978
      %1980 = vrot.lane.b32.xlu0 %v1979, 127
      %v1981 = vpop.permute.xlu0 %1980
      %1982 = vrot.lane.b32.xlu0 %v1978, 127
      %v1983 = vpop.permute.xlu0 %1982
      %v1986 = vadd.f32 %v1850, %v1981
      %v1987 = vadd.f32 %v1851, %v1983
      %s1988 = sld [smem:[#allocation2 + $0x112]]
      %v1989 = vstv %s1988
      %v1990 = vmul.f32 %v1989, %v72
      %v1991 = vmul.f32 %v1989, %v73
      %v1994 = vrot.slane %v1990, 1
      %v1995 = vrot.slane %v1991, 1
      %v1996 = vsel %vm1186, %v1994, %v1995
      %1997 = vrot.lane.b32.xlu0 %v1996, 127
      %v1998 = vpop.permute.xlu0 %1997
      %1999 = vrot.lane.b32.xlu0 %v1995, 127
      %v2000 = vpop.permute.xlu0 %1999
      %v2003 = vadd.f32 %v1867, %v1998
      %v2004 = vadd.f32 %v1868, %v2000
      %s2005 = sld [smem:[#allocation2 + $0x1f]]
      %v2006 = vstv %s2005
      %v2007 = vmul.f32 %v2006, %v74
      %v2008 = vmul.f32 %v2006, %v75
      %v2011 = vrot.slane %v2007, 1
      %v2012 = vrot.slane %v2008, 1
      %v2013 = vsel %vm1186, %v2011, %v2012
      %2014 = vrot.lane.b32.xlu0 %v2013, 127
      %v2015 = vpop.permute.xlu0 %2014
      %2016 = vrot.lane.b32.xlu0 %v2012, 127
      %v2017 = vpop.permute.xlu0 %2016
      %v2020 = vadd.f32 %v1884, %v2015
      %v2021 = vadd.f32 %v1885, %v2017
      %s2022 = sld [smem:[#allocation2 + $0x43]]
      %v2023 = vstv %s2022
      %v2024 = vmul.f32 %v2023, %v74
      %v2025 = vmul.f32 %v2023, %v75
      %v2028 = vrot.slane %v2024, 1
      %v2029 = vrot.slane %v2025, 1
      %v2030 = vsel %vm1186, %v2028, %v2029
      %2031 = vrot.lane.b32.xlu0 %v2030, 127
      %v2032 = vpop.permute.xlu0 %2031
      %2033 = vrot.lane.b32.xlu0 %v2029, 127
      %v2034 = vpop.permute.xlu0 %2033
      %v2037 = vadd.f32 %v1901, %v2032
      %v2038 = vadd.f32 %v1902, %v2034
      %s2039 = sld [smem:[#allocation2 + $0x67]]
      %v2040 = vstv %s2039
      %v2041 = vmul.f32 %v2040, %v74
      %v2042 = vmul.f32 %v2040, %v75
      %v2045 = vrot.slane %v2041, 1
      %v2046 = vrot.slane %v2042, 1
      %v2047 = vsel %vm1186, %v2045, %v2046
      %2048 = vrot.lane.b32.xlu0 %v2047, 127
      %v2049 = vpop.permute.xlu0 %2048
      %2050 = vrot.lane.b32.xlu0 %v2046, 127
      %v2051 = vpop.permute.xlu0 %2050
      %v2054 = vadd.f32 %v1918, %v2049
      %v2055 = vadd.f32 %v1919, %v2051
      %s2056 = sld [smem:[#allocation2 + $0x8b]]
      %v2057 = vstv %s2056
      %v2058 = vmul.f32 %v2057, %v74
      %v2059 = vmul.f32 %v2057, %v75
      %v2062 = vrot.slane %v2058, 1
      %v2063 = vrot.slane %v2059, 1
      %v2064 = vsel %vm1186, %v2062, %v2063
      %2065 = vrot.lane.b32.xlu0 %v2064, 127
      %v2066 = vpop.permute.xlu0 %2065
      %2067 = vrot.lane.b32.xlu0 %v2063, 127
      %v2068 = vpop.permute.xlu0 %2067
      %v2071 = vadd.f32 %v1935, %v2066
      %v2072 = vadd.f32 %v1936, %v2068
      %s2073 = sld [smem:[#allocation2 + $0xaf]]
      %v2074 = vstv %s2073
      %v2075 = vmul.f32 %v2074, %v74
      %v2076 = vmul.f32 %v2074, %v75
      %v2079 = vrot.slane %v2075, 1
      %v2080 = vrot.slane %v2076, 1
      %v2081 = vsel %vm1186, %v2079, %v2080
      %2082 = vrot.lane.b32.xlu0 %v2081, 127
      %v2083 = vpop.permute.xlu0 %2082
      %2084 = vrot.lane.b32.xlu0 %v2080, 127
      %v2085 = vpop.permute.xlu0 %2084
      %v2088 = vadd.f32 %v1952, %v2083
      %v2089 = vadd.f32 %v1953, %v2085
      %s2090 = sld [smem:[#allocation2 + $0xd3]]
      %v2091 = vstv %s2090
      %v2092 = vmul.f32 %v2091, %v74
      %v2093 = vmul.f32 %v2091, %v75
      %v2096 = vrot.slane %v2092, 1
      %v2097 = vrot.slane %v2093, 1
      %v2098 = vsel %vm1186, %v2096, %v2097
      %2099 = vrot.lane.b32.xlu0 %v2098, 127
      %v2100 = vpop.permute.xlu0 %2099
      %2101 = vrot.lane.b32.xlu0 %v2097, 127
      %v2102 = vpop.permute.xlu0 %2101
      %v2105 = vadd.f32 %v1969, %v2100
      %v2106 = vadd.f32 %v1970, %v2102
      %s2107 = sld [smem:[#allocation2 + $0xf7]]
      %v2108 = vstv %s2107
      %v2109 = vmul.f32 %v2108, %v74
      %v2110 = vmul.f32 %v2108, %v75
      %v2113 = vrot.slane %v2109, 1
      %v2114 = vrot.slane %v2110, 1
      %v2115 = vsel %vm1186, %v2113, %v2114
      %2116 = vrot.lane.b32.xlu0 %v2115, 127
      %v2117 = vpop.permute.xlu0 %2116
      %2118 = vrot.lane.b32.xlu0 %v2114, 127
      %v2119 = vpop.permute.xlu0 %2118
      %v2122 = vadd.f32 %v1986, %v2117
      %v2123 = vadd.f32 %v1987, %v2119
      %s2124 = sld [smem:[#allocation2 + $0x11b]]
      %v2125 = vstv %s2124
      %v2126 = vmul.f32 %v2125, %v74
      %v2127 = vmul.f32 %v2125, %v75
      %v2130 = vrot.slane %v2126, 1
      %v2131 = vrot.slane %v2127, 1
      %v2132 = vsel %vm1186, %v2130, %v2131
      %2133 = vrot.lane.b32.xlu0 %v2132, 127
      %v2134 = vpop.permute.xlu0 %2133
      %2135 = vrot.lane.b32.xlu0 %v2131, 127
      %v2136 = vpop.permute.xlu0 %2135
      %v2139 = vadd.f32 %v2003, %v2134
      %v2140 = vadd.f32 %v2004, %v2136
      %s2141 = sld [smem:[#allocation2 + $0x5]]
      %v2142 = vstv %s2141
      %v2143 = vmul.f32 %v2142, %v68
      %v2144 = vmul.f32 %v2142, %v69
      %v2147 = vrot.slane %v2143, 1
      %v2148 = vrot.slane %v2144, 1
      %v2149 = vsel %vm1186, %v2147, %v2148
      %2150 = vrot.lane.b32.xlu0 %v2149, 126
      %v2151 = vpop.permute.xlu0 %2150
      %2152 = vrot.lane.b32.xlu0 %v2148, 126
      %v2153 = vpop.permute.xlu0 %2152
      %v2156 = vadd.f32 %v2020, %v2151
      %v2157 = vadd.f32 %v2021, %v2153
      %s2158 = sld [smem:[#allocation2 + $0x29]]
      %v2159 = vstv %s2158
      %v2160 = vmul.f32 %v2159, %v68
      %v2161 = vmul.f32 %v2159, %v69
      %v2164 = vrot.slane %v2160, 1
      %v2165 = vrot.slane %v2161, 1
      %v2166 = vsel %vm1186, %v2164, %v2165
      %2167 = vrot.lane.b32.xlu0 %v2166, 126
      %v2168 = vpop.permute.xlu0 %2167
      %2169 = vrot.lane.b32.xlu0 %v2165, 126
      %v2170 = vpop.permute.xlu0 %2169
      %v2173 = vadd.f32 %v2037, %v2168
      %v2174 = vadd.f32 %v2038, %v2170
      %s2175 = sld [smem:[#allocation2 + $0x4d]]
      %v2176 = vstv %s2175
      %v2177 = vmul.f32 %v2176, %v68
      %v2178 = vmul.f32 %v2176, %v69
      %v2181 = vrot.slane %v2177, 1
      %v2182 = vrot.slane %v2178, 1
      %v2183 = vsel %vm1186, %v2181, %v2182
      %2184 = vrot.lane.b32.xlu0 %v2183, 126
      %v2185 = vpop.permute.xlu0 %2184
      %2186 = vrot.lane.b32.xlu0 %v2182, 126
      %v2187 = vpop.permute.xlu0 %2186
      %v2190 = vadd.f32 %v2054, %v2185
      %v2191 = vadd.f32 %v2055, %v2187
      %s2192 = sld [smem:[#allocation2 + $0x71]]
      %v2193 = vstv %s2192
      %v2194 = vmul.f32 %v2193, %v68
      %v2195 = vmul.f32 %v2193, %v69
      %v2198 = vrot.slane %v2194, 1
      %v2199 = vrot.slane %v2195, 1
      %v2200 = vsel %vm1186, %v2198, %v2199
      %2201 = vrot.lane.b32.xlu0 %v2200, 126
      %v2202 = vpop.permute.xlu0 %2201
      %2203 = vrot.lane.b32.xlu0 %v2199, 126
      %v2204 = vpop.permute.xlu0 %2203
      %v2207 = vadd.f32 %v2071, %v2202
      %v2208 = vadd.f32 %v2072, %v2204
      %s2209 = sld [smem:[#allocation2 + $0x95]]
      %v2210 = vstv %s2209
      %v2211 = vmul.f32 %v2210, %v68
      %v2212 = vmul.f32 %v2210, %v69
      %v2215 = vrot.slane %v2211, 1
      %v2216 = vrot.slane %v2212, 1
      %v2217 = vsel %vm1186, %v2215, %v2216
      %2218 = vrot.lane.b32.xlu0 %v2217, 126
      %v2219 = vpop.permute.xlu0 %2218
      %2220 = vrot.lane.b32.xlu0 %v2216, 126
      %v2221 = vpop.permute.xlu0 %2220
      %v2224 = vadd.f32 %v2088, %v2219
      %v2225 = vadd.f32 %v2089, %v2221
      %s2226 = sld [smem:[#allocation2 + $0xb9]]
      %v2227 = vstv %s2226
      %v2228 = vmul.f32 %v2227, %v68
      %v2229 = vmul.f32 %v2227, %v69
      %v2232 = vrot.slane %v2228, 1
      %v2233 = vrot.slane %v2229, 1
      %v2234 = vsel %vm1186, %v2232, %v2233
      %2235 = vrot.lane.b32.xlu0 %v2234, 126
      %v2236 = vpop.permute.xlu0 %2235
      %2237 = vrot.lane.b32.xlu0 %v2233, 126
      %v2238 = vpop.permute.xlu0 %2237
      %v2241 = vadd.f32 %v2105, %v2236
      %v2242 = vadd.f32 %v2106, %v2238
      %s2243 = sld [smem:[#allocation2 + $0xdd]]
      %v2244 = vstv %s2243
      %v2245 = vmul.f32 %v2244, %v68
      %v2246 = vmul.f32 %v2244, %v69
      %v2249 = vrot.slane %v2245, 1
      %v2250 = vrot.slane %v2246, 1
      %v2251 = vsel %vm1186, %v2249, %v2250
      %2252 = vrot.lane.b32.xlu0 %v2251, 126
      %v2253 = vpop.permute.xlu0 %2252
      %2254 = vrot.lane.b32.xlu0 %v2250, 126
      %v2255 = vpop.permute.xlu0 %2254
      %v2258 = vadd.f32 %v2122, %v2253
      %v2259 = vadd.f32 %v2123, %v2255
      %s2260 = sld [smem:[#allocation2 + $0x101]]
      %v2261 = vstv %s2260
      %v2262 = vmul.f32 %v2261, %v68
      %v2263 = vmul.f32 %v2261, %v69
      %v2266 = vrot.slane %v2262, 1
      %v2267 = vrot.slane %v2263, 1
      %v2268 = vsel %vm1186, %v2266, %v2267
      %2269 = vrot.lane.b32.xlu0 %v2268, 126
      %v2270 = vpop.permute.xlu0 %2269
      %2271 = vrot.lane.b32.xlu0 %v2267, 126
      %v2272 = vpop.permute.xlu0 %2271
      %v2275 = vadd.f32 %v2139, %v2270
      %v2276 = vadd.f32 %v2140, %v2272
      %s2277 = sld [smem:[#allocation2 + $0xe]]
      %v2278 = vstv %s2277
      %v2279 = vmul.f32 %v2278, %v70
      %v2280 = vmul.f32 %v2278, %v71
      %v2283 = vrot.slane %v2279, 1
      %v2284 = vrot.slane %v2280, 1
      %v2285 = vsel %vm1186, %v2283, %v2284
      %2286 = vrot.lane.b32.xlu0 %v2285, 126
      %v2287 = vpop.permute.xlu0 %2286
      %2288 = vrot.lane.b32.xlu0 %v2284, 126
      %v2289 = vpop.permute.xlu0 %2288
      %v2292 = vadd.f32 %v2156, %v2287
      %v2293 = vadd.f32 %v2157, %v2289
      %s2294 = sld [smem:[#allocation2 + $0x32]]
      %v2295 = vstv %s2294
      %v2296 = vmul.f32 %v2295, %v70
      %v2297 = vmul.f32 %v2295, %v71
      %v2300 = vrot.slane %v2296, 1
      %v2301 = vrot.slane %v2297, 1
      %v2302 = vsel %vm1186, %v2300, %v2301
      %2303 = vrot.lane.b32.xlu0 %v2302, 126
      %v2304 = vpop.permute.xlu0 %2303
      %2305 = vrot.lane.b32.xlu0 %v2301, 126
      %v2306 = vpop.permute.xlu0 %2305
      %v2309 = vadd.f32 %v2173, %v2304
      %v2310 = vadd.f32 %v2174, %v2306
      %s2311 = sld [smem:[#allocation2 + $0x56]]
      %v2312 = vstv %s2311
      %v2313 = vmul.f32 %v2312, %v70
      %v2314 = vmul.f32 %v2312, %v71
      %v2317 = vrot.slane %v2313, 1
      %v2318 = vrot.slane %v2314, 1
      %v2319 = vsel %vm1186, %v2317, %v2318
      %2320 = vrot.lane.b32.xlu0 %v2319, 126
      %v2321 = vpop.permute.xlu0 %2320
      %2322 = vrot.lane.b32.xlu0 %v2318, 126
      %v2323 = vpop.permute.xlu0 %2322
      %v2326 = vadd.f32 %v2190, %v2321
      %v2327 = vadd.f32 %v2191, %v2323
      %s2328 = sld [smem:[#allocation2 + $0x7a]]
      %v2329 = vstv %s2328
      %v2330 = vmul.f32 %v2329, %v70
      %v2331 = vmul.f32 %v2329, %v71
      %v2334 = vrot.slane %v2330, 1
      %v2335 = vrot.slane %v2331, 1
      %v2336 = vsel %vm1186, %v2334, %v2335
      %2337 = vrot.lane.b32.xlu0 %v2336, 126
      %v2338 = vpop.permute.xlu0 %2337
      %2339 = vrot.lane.b32.xlu0 %v2335, 126
      %v2340 = vpop.permute.xlu0 %2339
      %v2343 = vadd.f32 %v2207, %v2338
      %v2344 = vadd.f32 %v2208, %v2340
      %s2345 = sld [smem:[#allocation2 + $0x9e]]
      %v2346 = vstv %s2345
      %v2347 = vmul.f32 %v2346, %v70
      %v2348 = vmul.f32 %v2346, %v71
      %v2351 = vrot.slane %v2347, 1
      %v2352 = vrot.slane %v2348, 1
      %v2353 = vsel %vm1186, %v2351, %v2352
      %2354 = vrot.lane.b32.xlu0 %v2353, 126
      %v2355 = vpop.permute.xlu0 %2354
      %2356 = vrot.lane.b32.xlu0 %v2352, 126
      %v2357 = vpop.permute.xlu0 %2356
      %v2360 = vadd.f32 %v2224, %v2355
      %v2361 = vadd.f32 %v2225, %v2357
      %s2362 = sld [smem:[#allocation2 + $0xc2]]
      %v2363 = vstv %s2362
      %v2364 = vmul.f32 %v2363, %v70
      %v2365 = vmul.f32 %v2363, %v71
      %v2368 = vrot.slane %v2364, 1
      %v2369 = vrot.slane %v2365, 1
      %v2370 = vsel %vm1186, %v2368, %v2369
      %2371 = vrot.lane.b32.xlu0 %v2370, 126
      %v2372 = vpop.permute.xlu0 %2371
      %2373 = vrot.lane.b32.xlu0 %v2369, 126
      %v2374 = vpop.permute.xlu0 %2373
      %v2377 = vadd.f32 %v2241, %v2372
      %v2378 = vadd.f32 %v2242, %v2374
      %s2379 = sld [smem:[#allocation2 + $0xe6]]
      %v2380 = vstv %s2379
      %v2381 = vmul.f32 %v2380, %v70
      %v2382 = vmul.f32 %v2380, %v71
      %v2385 = vrot.slane %v2381, 1
      %v2386 = vrot.slane %v2382, 1
      %v2387 = vsel %vm1186, %v2385, %v2386
      %2388 = vrot.lane.b32.xlu0 %v2387, 126
      %v2389 = vpop.permute.xlu0 %2388
      %2390 = vrot.lane.b32.xlu0 %v2386, 126
      %v2391 = vpop.permute.xlu0 %2390
      %v2394 = vadd.f32 %v2258, %v2389
      %v2395 = vadd.f32 %v2259, %v2391
      %s2396 = sld [smem:[#allocation2 + $0x10a]]
      %v2397 = vstv %s2396
      %v2398 = vmul.f32 %v2397, %v70
      %v2399 = vmul.f32 %v2397, %v71
      %v2402 = vrot.slane %v2398, 1
      %v2403 = vrot.slane %v2399, 1
      %v2404 = vsel %vm1186, %v2402, %v2403
      %2405 = vrot.lane.b32.xlu0 %v2404, 126
      %v2406 = vpop.permute.xlu0 %2405
      %2407 = vrot.lane.b32.xlu0 %v2403, 126
      %v2408 = vpop.permute.xlu0 %2407
      %v2411 = vadd.f32 %v2275, %v2406
      %v2412 = vadd.f32 %v2276, %v2408
      %s2413 = sld [smem:[#allocation2 + $0x17]]
      %v2414 = vstv %s2413
      %v2415 = vmul.f32 %v2414, %v72
      %v2416 = vmul.f32 %v2414, %v73
      %v2419 = vrot.slane %v2415, 1
      %v2420 = vrot.slane %v2416, 1
      %v2421 = vsel %vm1186, %v2419, %v2420
      %2422 = vrot.lane.b32.xlu0 %v2421, 126
      %v2423 = vpop.permute.xlu0 %2422
      %2424 = vrot.lane.b32.xlu0 %v2420, 126
      %v2425 = vpop.permute.xlu0 %2424
      %v2428 = vadd.f32 %v2292, %v2423
      %v2429 = vadd.f32 %v2293, %v2425
      %s2430 = sld [smem:[#allocation2 + $0x3b]]
      %v2431 = vstv %s2430
      %v2432 = vmul.f32 %v2431, %v72
      %v2433 = vmul.f32 %v2431, %v73
      %v2436 = vrot.slane %v2432, 1
      %v2437 = vrot.slane %v2433, 1
      %v2438 = vsel %vm1186, %v2436, %v2437
      %2439 = vrot.lane.b32.xlu0 %v2438, 126
      %v2440 = vpop.permute.xlu0 %2439
      %2441 = vrot.lane.b32.xlu0 %v2437, 126
      %v2442 = vpop.permute.xlu0 %2441
      %v2445 = vadd.f32 %v2309, %v2440
      %v2446 = vadd.f32 %v2310, %v2442
      %s2447 = sld [smem:[#allocation2 + $0x5f]]
      %v2448 = vstv %s2447
      %v2449 = vmul.f32 %v2448, %v72
      %v2450 = vmul.f32 %v2448, %v73
      %v2453 = vrot.slane %v2449, 1
      %v2454 = vrot.slane %v2450, 1
      %v2455 = vsel %vm1186, %v2453, %v2454
      %2456 = vrot.lane.b32.xlu0 %v2455, 126
      %v2457 = vpop.permute.xlu0 %2456
      %2458 = vrot.lane.b32.xlu0 %v2454, 126
      %v2459 = vpop.permute.xlu0 %2458
      %v2462 = vadd.f32 %v2326, %v2457
      %v2463 = vadd.f32 %v2327, %v2459
      %s2464 = sld [smem:[#allocation2 + $0x83]]
      %v2465 = vstv %s2464
      %v2466 = vmul.f32 %v2465, %v72
      %v2467 = vmul.f32 %v2465, %v73
      %v2470 = vrot.slane %v2466, 1
      %v2471 = vrot.slane %v2467, 1
      %v2472 = vsel %vm1186, %v2470, %v2471
      %2473 = vrot.lane.b32.xlu0 %v2472, 126
      %v2474 = vpop.permute.xlu0 %2473
      %2475 = vrot.lane.b32.xlu0 %v2471, 126
      %v2476 = vpop.permute.xlu0 %2475
      %v2479 = vadd.f32 %v2343, %v2474
      %v2480 = vadd.f32 %v2344, %v2476
      %s2481 = sld [smem:[#allocation2 + $0xa7]]
      %v2482 = vstv %s2481
      %v2483 = vmul.f32 %v2482, %v72
      %v2484 = vmul.f32 %v2482, %v73
      %v2487 = vrot.slane %v2483, 1
      %v2488 = vrot.slane %v2484, 1
      %v2489 = vsel %vm1186, %v2487, %v2488
      %2490 = vrot.lane.b32.xlu0 %v2489, 126
      %v2491 = vpop.permute.xlu0 %2490
      %2492 = vrot.lane.b32.xlu0 %v2488, 126
      %v2493 = vpop.permute.xlu0 %2492
      %v2496 = vadd.f32 %v2360, %v2491
      %v2497 = vadd.f32 %v2361, %v2493
      %s2498 = sld [smem:[#allocation2 + $0xcb]]
      %v2499 = vstv %s2498
      %v2500 = vmul.f32 %v2499, %v72
      %v2501 = vmul.f32 %v2499, %v73
      %v2504 = vrot.slane %v2500, 1
      %v2505 = vrot.slane %v2501, 1
      %v2506 = vsel %vm1186, %v2504, %v2505
      %2507 = vrot.lane.b32.xlu0 %v2506, 126
      %v2508 = vpop.permute.xlu0 %2507
      %2509 = vrot.lane.b32.xlu0 %v2505, 126
      %v2510 = vpop.permute.xlu0 %2509
      %v2513 = vadd.f32 %v2377, %v2508
      %v2514 = vadd.f32 %v2378, %v2510
      %s2515 = sld [smem:[#allocation2 + $0xef]]
      %v2516 = vstv %s2515
      %v2517 = vmul.f32 %v2516, %v72
      %v2518 = vmul.f32 %v2516, %v73
      %v2521 = vrot.slane %v2517, 1
      %v2522 = vrot.slane %v2518, 1
      %v2523 = vsel %vm1186, %v2521, %v2522
      %2524 = vrot.lane.b32.xlu0 %v2523, 126
      %v2525 = vpop.permute.xlu0 %2524
      %2526 = vrot.lane.b32.xlu0 %v2522, 126
      %v2527 = vpop.permute.xlu0 %2526
      %v2530 = vadd.f32 %v2394, %v2525
      %v2531 = vadd.f32 %v2395, %v2527
      %s2532 = sld [smem:[#allocation2 + $0x113]]
      %v2533 = vstv %s2532
      %v2534 = vmul.f32 %v2533, %v72
      %v2535 = vmul.f32 %v2533, %v73
      %v2538 = vrot.slane %v2534, 1
      %v2539 = vrot.slane %v2535, 1
      %v2540 = vsel %vm1186, %v2538, %v2539
      %2541 = vrot.lane.b32.xlu0 %v2540, 126
      %v2542 = vpop.permute.xlu0 %2541
      %2543 = vrot.lane.b32.xlu0 %v2539, 126
      %v2544 = vpop.permute.xlu0 %2543
      %v2547 = vadd.f32 %v2411, %v2542
      %v2548 = vadd.f32 %v2412, %v2544
      %s2549 = sld [smem:[#allocation2 + $0x20]]
      %v2550 = vstv %s2549
      %v2551 = vmul.f32 %v2550, %v74
      %v2552 = vmul.f32 %v2550, %v75
      %v2555 = vrot.slane %v2551, 1
      %v2556 = vrot.slane %v2552, 1
      %v2557 = vsel %vm1186, %v2555, %v2556
      %2558 = vrot.lane.b32.xlu0 %v2557, 126
      %v2559 = vpop.permute.xlu0 %2558
      %2560 = vrot.lane.b32.xlu0 %v2556, 126
      %v2561 = vpop.permute.xlu0 %2560
      %v2564 = vadd.f32 %v2428, %v2559
      %v2565 = vadd.f32 %v2429, %v2561
      %s2566 = sld [smem:[#allocation2 + $0x44]]
      %v2567 = vstv %s2566
      %v2568 = vmul.f32 %v2567, %v74
      %v2569 = vmul.f32 %v2567, %v75
      %v2572 = vrot.slane %v2568, 1
      %v2573 = vrot.slane %v2569, 1
      %v2574 = vsel %vm1186, %v2572, %v2573
      %2575 = vrot.lane.b32.xlu0 %v2574, 126
      %v2576 = vpop.permute.xlu0 %2575
      %2577 = vrot.lane.b32.xlu0 %v2573, 126
      %v2578 = vpop.permute.xlu0 %2577
      %v2581 = vadd.f32 %v2445, %v2576
      %v2582 = vadd.f32 %v2446, %v2578
      %s2583 = sld [smem:[#allocation2 + $0x68]]
      %v2584 = vstv %s2583
      %v2585 = vmul.f32 %v2584, %v74
      %v2586 = vmul.f32 %v2584, %v75
      %v2589 = vrot.slane %v2585, 1
      %v2590 = vrot.slane %v2586, 1
      %v2591 = vsel %vm1186, %v2589, %v2590
      %2592 = vrot.lane.b32.xlu0 %v2591, 126
      %v2593 = vpop.permute.xlu0 %2592
      %2594 = vrot.lane.b32.xlu0 %v2590, 126
      %v2595 = vpop.permute.xlu0 %2594
      %v2598 = vadd.f32 %v2462, %v2593
      %v2599 = vadd.f32 %v2463, %v2595
      %s2600 = sld [smem:[#allocation2 + $0x8c]]
      %v2601 = vstv %s2600
      %v2602 = vmul.f32 %v2601, %v74
      %v2603 = vmul.f32 %v2601, %v75
      %v2606 = vrot.slane %v2602, 1
      %v2607 = vrot.slane %v2603, 1
      %v2608 = vsel %vm1186, %v2606, %v2607
      %2609 = vrot.lane.b32.xlu0 %v2608, 126
      %v2610 = vpop.permute.xlu0 %2609
      %2611 = vrot.lane.b32.xlu0 %v2607, 126
      %v2612 = vpop.permute.xlu0 %2611
      %v2615 = vadd.f32 %v2479, %v2610
      %v2616 = vadd.f32 %v2480, %v2612
      %s2617 = sld [smem:[#allocation2 + $0xb0]]
      %v2618 = vstv %s2617
      %v2619 = vmul.f32 %v2618, %v74
      %v2620 = vmul.f32 %v2618, %v75
      %v2623 = vrot.slane %v2619, 1
      %v2624 = vrot.slane %v2620, 1
      %v2625 = vsel %vm1186, %v2623, %v2624
      %2626 = vrot.lane.b32.xlu0 %v2625, 126
      %v2627 = vpop.permute.xlu0 %2626
      %2628 = vrot.lane.b32.xlu0 %v2624, 126
      %v2629 = vpop.permute.xlu0 %2628
      %v2632 = vadd.f32 %v2496, %v2627
      %v2633 = vadd.f32 %v2497, %v2629
      %s2634 = sld [smem:[#allocation2 + $0xd4]]
      %v2635 = vstv %s2634
      %v2636 = vmul.f32 %v2635, %v74
      %v2637 = vmul.f32 %v2635, %v75
      %v2640 = vrot.slane %v2636, 1
      %v2641 = vrot.slane %v2637, 1
      %v2642 = vsel %vm1186, %v2640, %v2641
      %2643 = vrot.lane.b32.xlu0 %v2642, 126
      %v2644 = vpop.permute.xlu0 %2643
      %2645 = vrot.lane.b32.xlu0 %v2641, 126
      %v2646 = vpop.permute.xlu0 %2645
      %v2649 = vadd.f32 %v2513, %v2644
      %v2650 = vadd.f32 %v2514, %v2646
      %s2651 = sld [smem:[#allocation2 + $0xf8]]
      %v2652 = vstv %s2651
      %v2653 = vmul.f32 %v2652, %v74
      %v2654 = vmul.f32 %v2652, %v75
      %v2657 = vrot.slane %v2653, 1
      %v2658 = vrot.slane %v2654, 1
      %v2659 = vsel %vm1186, %v2657, %v2658
      %2660 = vrot.lane.b32.xlu0 %v2659, 126
      %v2661 = vpop.permute.xlu0 %2660
      %2662 = vrot.lane.b32.xlu0 %v2658, 126
      %v2663 = vpop.permute.xlu0 %2662
      %v2666 = vadd.f32 %v2530, %v2661
      %v2667 = vadd.f32 %v2531, %v2663
      %s2668 = sld [smem:[#allocation2 + $0x11c]]
      %v2669 = vstv %s2668
      %v2670 = vmul.f32 %v2669, %v74
      %v2671 = vmul.f32 %v2669, %v75
      %v2674 = vrot.slane %v2670, 1
      %v2675 = vrot.slane %v2671, 1
      %v2676 = vsel %vm1186, %v2674, %v2675
      %2677 = vrot.lane.b32.xlu0 %v2676, 126
      %v2678 = vpop.permute.xlu0 %2677
      %2679 = vrot.lane.b32.xlu0 %v2675, 126
      %v2680 = vpop.permute.xlu0 %2679
      %v2683 = vadd.f32 %v2547, %v2678
      %v2684 = vadd.f32 %v2548, %v2680
      %s2685 = sld [smem:[#allocation2 + $0x6]]
      %v2686 = vstv %s2685
      %v2687 = vmul.f32 %v2686, %v68
      %v2688 = vmul.f32 %v2686, %v69
      %vm2691 = vcmask 1045504
      %v2692 = vrot.slane %v2687, 2
      %v2693 = vrot.slane %v2688, 2
      %v2694 = vsel %vm2691, %v2692, %v2693
      %v2697 = vadd.f32 %v2564, %v2694
      %v2698 = vadd.f32 %v2565, %v2693
      %s2699 = sld [smem:[#allocation2 + $0x2a]]
      %v2700 = vstv %s2699
      %v2701 = vmul.f32 %v2700, %v68
      %v2702 = vmul.f32 %v2700, %v69
      %v2705 = vrot.slane %v2701, 2
      %v2706 = vrot.slane %v2702, 2
      %v2707 = vsel %vm2691, %v2705, %v2706
      %v2710 = vadd.f32 %v2581, %v2707
      %v2711 = vadd.f32 %v2582, %v2706
      %s2712 = sld [smem:[#allocation2 + $0x4e]]
      %v2713 = vstv %s2712
      %v2714 = vmul.f32 %v2713, %v68
      %v2715 = vmul.f32 %v2713, %v69
      %v2718 = vrot.slane %v2714, 2
      %v2719 = vrot.slane %v2715, 2
      %v2720 = vsel %vm2691, %v2718, %v2719
      %v2723 = vadd.f32 %v2598, %v2720
      %v2724 = vadd.f32 %v2599, %v2719
      %s2725 = sld [smem:[#allocation2 + $0x72]]
      %v2726 = vstv %s2725
      %v2727 = vmul.f32 %v2726, %v68
      %v2728 = vmul.f32 %v2726, %v69
      %v2731 = vrot.slane %v2727, 2
      %v2732 = vrot.slane %v2728, 2
      %v2733 = vsel %vm2691, %v2731, %v2732
      %v2736 = vadd.f32 %v2615, %v2733
      %v2737 = vadd.f32 %v2616, %v2732
      %s2738 = sld [smem:[#allocation2 + $0x96]]
      %v2739 = vstv %s2738
      %v2740 = vmul.f32 %v2739, %v68
      %v2741 = vmul.f32 %v2739, %v69
      %v2744 = vrot.slane %v2740, 2
      %v2745 = vrot.slane %v2741, 2
      %v2746 = vsel %vm2691, %v2744, %v2745
      %v2749 = vadd.f32 %v2632, %v2746
      %v2750 = vadd.f32 %v2633, %v2745
      %s2751 = sld [smem:[#allocation2 + $0xba]]
      %v2752 = vstv %s2751
      %v2753 = vmul.f32 %v2752, %v68
      %v2754 = vmul.f32 %v2752, %v69
      %v2757 = vrot.slane %v2753, 2
      %v2758 = vrot.slane %v2754, 2
      %v2759 = vsel %vm2691, %v2757, %v2758
      %v2762 = vadd.f32 %v2649, %v2759
      %v2763 = vadd.f32 %v2650, %v2758
      %s2764 = sld [smem:[#allocation2 + $0xde]]
      %v2765 = vstv %s2764
      %v2766 = vmul.f32 %v2765, %v68
      %v2767 = vmul.f32 %v2765, %v69
      %v2770 = vrot.slane %v2766, 2
      %v2771 = vrot.slane %v2767, 2
      %v2772 = vsel %vm2691, %v2770, %v2771
      %v2775 = vadd.f32 %v2666, %v2772
      %v2776 = vadd.f32 %v2667, %v2771
      %s2777 = sld [smem:[#allocation2 + $0x102]]
      %v2778 = vstv %s2777
      %v2779 = vmul.f32 %v2778, %v68
      %v2780 = vmul.f32 %v2778, %v69
      %v2783 = vrot.slane %v2779, 2
      %v2784 = vrot.slane %v2780, 2
      %v2785 = vsel %vm2691, %v2783, %v2784
      %v2788 = vadd.f32 %v2683, %v2785
      %v2789 = vadd.f32 %v2684, %v2784
      %s2790 = sld [smem:[#allocation2 + $0xf]]
      %v2791 = vstv %s2790
      %v2792 = vmul.f32 %v2791, %v70
      %v2793 = vmul.f32 %v2791, %v71
      %v2796 = vrot.slane %v2792, 2
      %v2797 = vrot.slane %v2793, 2
      %v2798 = vsel %vm2691, %v2796, %v2797
      %v2801 = vadd.f32 %v2697, %v2798
      %v2802 = vadd.f32 %v2698, %v2797
      %s2803 = sld [smem:[#allocation2 + $0x33]]
      %v2804 = vstv %s2803
      %v2805 = vmul.f32 %v2804, %v70
      %v2806 = vmul.f32 %v2804, %v71
      %v2809 = vrot.slane %v2805, 2
      %v2810 = vrot.slane %v2806, 2
      %v2811 = vsel %vm2691, %v2809, %v2810
      %v2814 = vadd.f32 %v2710, %v2811
      %v2815 = vadd.f32 %v2711, %v2810
      %s2816 = sld [smem:[#allocation2 + $0x57]]
      %v2817 = vstv %s2816
      %v2818 = vmul.f32 %v2817, %v70
      %v2819 = vmul.f32 %v2817, %v71
      %v2822 = vrot.slane %v2818, 2
      %v2823 = vrot.slane %v2819, 2
      %v2824 = vsel %vm2691, %v2822, %v2823
      %v2827 = vadd.f32 %v2723, %v2824
      %v2828 = vadd.f32 %v2724, %v2823
      %s2829 = sld [smem:[#allocation2 + $0x7b]]
      %v2830 = vstv %s2829
      %v2831 = vmul.f32 %v2830, %v70
      %v2832 = vmul.f32 %v2830, %v71
      %v2835 = vrot.slane %v2831, 2
      %v2836 = vrot.slane %v2832, 2
      %v2837 = vsel %vm2691, %v2835, %v2836
      %v2840 = vadd.f32 %v2736, %v2837
      %v2841 = vadd.f32 %v2737, %v2836
      %s2842 = sld [smem:[#allocation2 + $0x9f]]
      %v2843 = vstv %s2842
      %v2844 = vmul.f32 %v2843, %v70
      %v2845 = vmul.f32 %v2843, %v71
      %v2848 = vrot.slane %v2844, 2
      %v2849 = vrot.slane %v2845, 2
      %v2850 = vsel %vm2691, %v2848, %v2849
      %v2853 = vadd.f32 %v2749, %v2850
      %v2854 = vadd.f32 %v2750, %v2849
      %s2855 = sld [smem:[#allocation2 + $0xc3]]
      %v2856 = vstv %s2855
      %v2857 = vmul.f32 %v2856, %v70
      %v2858 = vmul.f32 %v2856, %v71
      %v2861 = vrot.slane %v2857, 2
      %v2862 = vrot.slane %v2858, 2
      %v2863 = vsel %vm2691, %v2861, %v2862
      %v2866 = vadd.f32 %v2762, %v2863
      %v2867 = vadd.f32 %v2763, %v2862
      %s2868 = sld [smem:[#allocation2 + $0xe7]]
      %v2869 = vstv %s2868
      %v2870 = vmul.f32 %v2869, %v70
      %v2871 = vmul.f32 %v2869, %v71
      %v2874 = vrot.slane %v2870, 2
      %v2875 = vrot.slane %v2871, 2
      %v2876 = vsel %vm2691, %v2874, %v2875
      %v2879 = vadd.f32 %v2775, %v2876
      %v2880 = vadd.f32 %v2776, %v2875
      %s2881 = sld [smem:[#allocation2 + $0x10b]]
      %v2882 = vstv %s2881
      %v2883 = vmul.f32 %v2882, %v70
      %v2884 = vmul.f32 %v2882, %v71
      %v2887 = vrot.slane %v2883, 2
      %v2888 = vrot.slane %v2884, 2
      %v2889 = vsel %vm2691, %v2887, %v2888
      %v2892 = vadd.f32 %v2788, %v2889
      %v2893 = vadd.f32 %v2789, %v2888
      %s2894 = sld [smem:[#allocation2 + $0x18]]
      %v2895 = vstv %s2894
      %v2896 = vmul.f32 %v2895, %v72
      %v2897 = vmul.f32 %v2895, %v73
      %v2900 = vrot.slane %v2896, 2
      %v2901 = vrot.slane %v2897, 2
      %v2902 = vsel %vm2691, %v2900, %v2901
      %v2905 = vadd.f32 %v2801, %v2902
      %v2906 = vadd.f32 %v2802, %v2901
      %s2907 = sld [smem:[#allocation2 + $0x3c]]
      %v2908 = vstv %s2907
      %v2909 = vmul.f32 %v2908, %v72
      %v2910 = vmul.f32 %v2908, %v73
      %v2913 = vrot.slane %v2909, 2
      %v2914 = vrot.slane %v2910, 2
      %v2915 = vsel %vm2691, %v2913, %v2914
      %v2918 = vadd.f32 %v2814, %v2915
      %v2919 = vadd.f32 %v2815, %v2914
      %s2920 = sld [smem:[#allocation2 + $0x60]]
      %v2921 = vstv %s2920
      %v2922 = vmul.f32 %v2921, %v72
      %v2923 = vmul.f32 %v2921, %v73
      %v2926 = vrot.slane %v2922, 2
      %v2927 = vrot.slane %v2923, 2
      %v2928 = vsel %vm2691, %v2926, %v2927
      %v2931 = vadd.f32 %v2827, %v2928
      %v2932 = vadd.f32 %v2828, %v2927
      %s2933 = sld [smem:[#allocation2 + $0x84]]
      %v2934 = vstv %s2933
      %v2935 = vmul.f32 %v2934, %v72
      %v2936 = vmul.f32 %v2934, %v73
      %v2939 = vrot.slane %v2935, 2
      %v2940 = vrot.slane %v2936, 2
      %v2941 = vsel %vm2691, %v2939, %v2940
      %v2944 = vadd.f32 %v2840, %v2941
      %v2945 = vadd.f32 %v2841, %v2940
      %s2946 = sld [smem:[#allocation2 + $0xa8]]
      %v2947 = vstv %s2946
      %v2948 = vmul.f32 %v2947, %v72
      %v2949 = vmul.f32 %v2947, %v73
      %v2952 = vrot.slane %v2948, 2
      %v2953 = vrot.slane %v2949, 2
      %v2954 = vsel %vm2691, %v2952, %v2953
      %v2957 = vadd.f32 %v2853, %v2954
      %v2958 = vadd.f32 %v2854, %v2953
      %s2959 = sld [smem:[#allocation2 + $0xcc]]
      %v2960 = vstv %s2959
      %v2961 = vmul.f32 %v2960, %v72
      %v2962 = vmul.f32 %v2960, %v73
      %v2965 = vrot.slane %v2961, 2
      %v2966 = vrot.slane %v2962, 2
      %v2967 = vsel %vm2691, %v2965, %v2966
      %v2970 = vadd.f32 %v2866, %v2967
      %v2971 = vadd.f32 %v2867, %v2966
      %s2972 = sld [smem:[#allocation2 + $0xf0]]
      %v2973 = vstv %s2972
      %v2974 = vmul.f32 %v2973, %v72
      %v2975 = vmul.f32 %v2973, %v73
      %v2978 = vrot.slane %v2974, 2
      %v2979 = vrot.slane %v2975, 2
      %v2980 = vsel %vm2691, %v2978, %v2979
      %v2983 = vadd.f32 %v2879, %v2980
      %v2984 = vadd.f32 %v2880, %v2979
      %s2985 = sld [smem:[#allocation2 + $0x114]]
      %v2986 = vstv %s2985
      %v2987 = vmul.f32 %v2986, %v72
      %v2988 = vmul.f32 %v2986, %v73
      %v2991 = vrot.slane %v2987, 2
      %v2992 = vrot.slane %v2988, 2
      %v2993 = vsel %vm2691, %v2991, %v2992
      %v2996 = vadd.f32 %v2892, %v2993
      %v2997 = vadd.f32 %v2893, %v2992
      %s2998 = sld [smem:[#allocation2 + $0x21]]
      %v2999 = vstv %s2998
      %v3000 = vmul.f32 %v2999, %v74
      %v3001 = vmul.f32 %v2999, %v75
      %v3004 = vrot.slane %v3000, 2
      %v3005 = vrot.slane %v3001, 2
      %v3006 = vsel %vm2691, %v3004, %v3005
      %v3009 = vadd.f32 %v2905, %v3006
      %v3010 = vadd.f32 %v2906, %v3005
      %s3011 = sld [smem:[#allocation2 + $0x45]]
      %v3012 = vstv %s3011
      %v3013 = vmul.f32 %v3012, %v74
      %v3014 = vmul.f32 %v3012, %v75
      %v3017 = vrot.slane %v3013, 2
      %v3018 = vrot.slane %v3014, 2
      %v3019 = vsel %vm2691, %v3017, %v3018
      %v3022 = vadd.f32 %v2918, %v3019
      %v3023 = vadd.f32 %v2919, %v3018
      %s3024 = sld [smem:[#allocation2 + $0x69]]
      %v3025 = vstv %s3024
      %v3026 = vmul.f32 %v3025, %v74
      %v3027 = vmul.f32 %v3025, %v75
      %v3030 = vrot.slane %v3026, 2
      %v3031 = vrot.slane %v3027, 2
      %v3032 = vsel %vm2691, %v3030, %v3031
      %v3035 = vadd.f32 %v2931, %v3032
      %v3036 = vadd.f32 %v2932, %v3031
      %s3037 = sld [smem:[#allocation2 + $0x8d]]
      %v3038 = vstv %s3037
      %v3039 = vmul.f32 %v3038, %v74
      %v3040 = vmul.f32 %v3038, %v75
      %v3043 = vrot.slane %v3039, 2
      %v3044 = vrot.slane %v3040, 2
      %v3045 = vsel %vm2691, %v3043, %v3044
      %v3048 = vadd.f32 %v2944, %v3045
      %v3049 = vadd.f32 %v2945, %v3044
      %s3050 = sld [smem:[#allocation2 + $0xb1]]
      %v3051 = vstv %s3050
      %v3052 = vmul.f32 %v3051, %v74
      %v3053 = vmul.f32 %v3051, %v75
      %v3056 = vrot.slane %v3052, 2
      %v3057 = vrot.slane %v3053, 2
      %v3058 = vsel %vm2691, %v3056, %v3057
      %v3061 = vadd.f32 %v2957, %v3058
      %v3062 = vadd.f32 %v2958, %v3057
      %s3063 = sld [smem:[#allocation2 + $0xd5]]
      %v3064 = vstv %s3063
      %v3065 = vmul.f32 %v3064, %v74
      %v3066 = vmul.f32 %v3064, %v75
      %v3069 = vrot.slane %v3065, 2
      %v3070 = vrot.slane %v3066, 2
      %v3071 = vsel %vm2691, %v3069, %v3070
      %v3074 = vadd.f32 %v2970, %v3071
      %v3075 = vadd.f32 %v2971, %v3070
      %s3076 = sld [smem:[#allocation2 + $0xf9]]
      %v3077 = vstv %s3076
      %v3078 = vmul.f32 %v3077, %v74
      %v3079 = vmul.f32 %v3077, %v75
      %v3082 = vrot.slane %v3078, 2
      %v3083 = vrot.slane %v3079, 2
      %v3084 = vsel %vm2691, %v3082, %v3083
      %v3087 = vadd.f32 %v2983, %v3084
      %v3088 = vadd.f32 %v2984, %v3083
      %s3089 = sld [smem:[#allocation2 + $0x11d]]
      %v3090 = vstv %s3089
      %v3091 = vmul.f32 %v3090, %v74
      %v3092 = vmul.f32 %v3090, %v75
      %v3095 = vrot.slane %v3091, 2
      %v3096 = vrot.slane %v3092, 2
      %v3097 = vsel %vm2691, %v3095, %v3096
      %v3100 = vadd.f32 %v2996, %v3097
      %v3101 = vadd.f32 %v2997, %v3096
      %s3102 = sld [smem:[#allocation2 + $0x7]]
      %v3103 = vstv %s3102
      %v3104 = vmul.f32 %v3103, %v68
      %v3105 = vmul.f32 %v3103, %v69
      %v3108 = vrot.slane %v3104, 2
      %v3109 = vrot.slane %v3105, 2
      %v3110 = vsel %vm2691, %v3108, %v3109
      %3111 = vrot.lane.b32.xlu0 %v3110, 127
      %v3112 = vpop.permute.xlu0 %3111
      %3113 = vrot.lane.b32.xlu0 %v3109, 127
      %v3114 = vpop.permute.xlu0 %3113
      %v3117 = vadd.f32 %v3009, %v3112
      %v3118 = vadd.f32 %v3010, %v3114
      %s3119 = sld [smem:[#allocation2 + $0x2b]]
      %v3120 = vstv %s3119
      %v3121 = vmul.f32 %v3120, %v68
      %v3122 = vmul.f32 %v3120, %v69
      %v3125 = vrot.slane %v3121, 2
      %v3126 = vrot.slane %v3122, 2
      %v3127 = vsel %vm2691, %v3125, %v3126
      %3128 = vrot.lane.b32.xlu0 %v3127, 127
      %v3129 = vpop.permute.xlu0 %3128
      %3130 = vrot.lane.b32.xlu0 %v3126, 127
      %v3131 = vpop.permute.xlu0 %3130
      %v3134 = vadd.f32 %v3022, %v3129
      %v3135 = vadd.f32 %v3023, %v3131
      %s3136 = sld [smem:[#allocation2 + $0x4f]]
      %v3137 = vstv %s3136
      %v3138 = vmul.f32 %v3137, %v68
      %v3139 = vmul.f32 %v3137, %v69
      %v3142 = vrot.slane %v3138, 2
      %v3143 = vrot.slane %v3139, 2
      %v3144 = vsel %vm2691, %v3142, %v3143
      %3145 = vrot.lane.b32.xlu0 %v3144, 127
      %v3146 = vpop.permute.xlu0 %3145
      %3147 = vrot.lane.b32.xlu0 %v3143, 127
      %v3148 = vpop.permute.xlu0 %3147
      %v3151 = vadd.f32 %v3035, %v3146
      %v3152 = vadd.f32 %v3036, %v3148
      %s3153 = sld [smem:[#allocation2 + $0x73]]
      %v3154 = vstv %s3153
      %v3155 = vmul.f32 %v3154, %v68
      %v3156 = vmul.f32 %v3154, %v69
      %v3159 = vrot.slane %v3155, 2
      %v3160 = vrot.slane %v3156, 2
      %v3161 = vsel %vm2691, %v3159, %v3160
      %3162 = vrot.lane.b32.xlu0 %v3161, 127
      %v3163 = vpop.permute.xlu0 %3162
      %3164 = vrot.lane.b32.xlu0 %v3160, 127
      %v3165 = vpop.permute.xlu0 %3164
      %v3168 = vadd.f32 %v3048, %v3163
      %v3169 = vadd.f32 %v3049, %v3165
      %s3170 = sld [smem:[#allocation2 + $0x97]]
      %v3171 = vstv %s3170
      %v3172 = vmul.f32 %v3171, %v68
      %v3173 = vmul.f32 %v3171, %v69
      %v3176 = vrot.slane %v3172, 2
      %v3177 = vrot.slane %v3173, 2
      %v3178 = vsel %vm2691, %v3176, %v3177
      %3179 = vrot.lane.b32.xlu0 %v3178, 127
      %v3180 = vpop.permute.xlu0 %3179
      %3181 = vrot.lane.b32.xlu0 %v3177, 127
      %v3182 = vpop.permute.xlu0 %3181
      %v3185 = vadd.f32 %v3061, %v3180
      %v3186 = vadd.f32 %v3062, %v3182
      %s3187 = sld [smem:[#allocation2 + $0xbb]]
      %v3188 = vstv %s3187
      %v3189 = vmul.f32 %v3188, %v68
      %v3190 = vmul.f32 %v3188, %v69
      %v3193 = vrot.slane %v3189, 2
      %v3194 = vrot.slane %v3190, 2
      %v3195 = vsel %vm2691, %v3193, %v3194
      %3196 = vrot.lane.b32.xlu0 %v3195, 127
      %v3197 = vpop.permute.xlu0 %3196
      %3198 = vrot.lane.b32.xlu0 %v3194, 127
      %v3199 = vpop.permute.xlu0 %3198
      %v3202 = vadd.f32 %v3074, %v3197
      %v3203 = vadd.f32 %v3075, %v3199
      %s3204 = sld [smem:[#allocation2 + $0xdf]]
      %v3205 = vstv %s3204
      %v3206 = vmul.f32 %v3205, %v68
      %v3207 = vmul.f32 %v3205, %v69
      %v3210 = vrot.slane %v3206, 2
      %v3211 = vrot.slane %v3207, 2
      %v3212 = vsel %vm2691, %v3210, %v3211
      %3213 = vrot.lane.b32.xlu0 %v3212, 127
      %v3214 = vpop.permute.xlu0 %3213
      %3215 = vrot.lane.b32.xlu0 %v3211, 127
      %v3216 = vpop.permute.xlu0 %3215
      %v3219 = vadd.f32 %v3087, %v3214
      %v3220 = vadd.f32 %v3088, %v3216
      %s3221 = sld [smem:[#allocation2 + $0x103]]
      %v3222 = vstv %s3221
      %v3223 = vmul.f32 %v3222, %v68
      %v3224 = vmul.f32 %v3222, %v69
      %v3227 = vrot.slane %v3223, 2
      %v3228 = vrot.slane %v3224, 2
      %v3229 = vsel %vm2691, %v3227, %v3228
      %3230 = vrot.lane.b32.xlu0 %v3229, 127
      %v3231 = vpop.permute.xlu0 %3230
      %3232 = vrot.lane.b32.xlu0 %v3228, 127
      %v3233 = vpop.permute.xlu0 %3232
      %v3236 = vadd.f32 %v3100, %v3231
      %v3237 = vadd.f32 %v3101, %v3233
      %s3238 = sld [smem:[#allocation2 + $0x10]]
      %v3239 = vstv %s3238
      %v3240 = vmul.f32 %v3239, %v70
      %v3241 = vmul.f32 %v3239, %v71
      %v3244 = vrot.slane %v3240, 2
      %v3245 = vrot.slane %v3241, 2
      %v3246 = vsel %vm2691, %v3244, %v3245
      %3247 = vrot.lane.b32.xlu0 %v3246, 127
      %v3248 = vpop.permute.xlu0 %3247
      %3249 = vrot.lane.b32.xlu0 %v3245, 127
      %v3250 = vpop.permute.xlu0 %3249
      %v3253 = vadd.f32 %v3117, %v3248
      %v3254 = vadd.f32 %v3118, %v3250
      %s3255 = sld [smem:[#allocation2 + $0x34]]
      %v3256 = vstv %s3255
      %v3257 = vmul.f32 %v3256, %v70
      %v3258 = vmul.f32 %v3256, %v71
      %v3261 = vrot.slane %v3257, 2
      %v3262 = vrot.slane %v3258, 2
      %v3263 = vsel %vm2691, %v3261, %v3262
      %3264 = vrot.lane.b32.xlu0 %v3263, 127
      %v3265 = vpop.permute.xlu0 %3264
      %3266 = vrot.lane.b32.xlu0 %v3262, 127
      %v3267 = vpop.permute.xlu0 %3266
      %v3270 = vadd.f32 %v3134, %v3265
      %v3271 = vadd.f32 %v3135, %v3267
      %s3272 = sld [smem:[#allocation2 + $0x58]]
      %v3273 = vstv %s3272
      %v3274 = vmul.f32 %v3273, %v70
      %v3275 = vmul.f32 %v3273, %v71
      %v3278 = vrot.slane %v3274, 2
      %v3279 = vrot.slane %v3275, 2
      %v3280 = vsel %vm2691, %v3278, %v3279
      %3281 = vrot.lane.b32.xlu0 %v3280, 127
      %v3282 = vpop.permute.xlu0 %3281
      %3283 = vrot.lane.b32.xlu0 %v3279, 127
      %v3284 = vpop.permute.xlu0 %3283
      %v3287 = vadd.f32 %v3151, %v3282
      %v3288 = vadd.f32 %v3152, %v3284
      %s3289 = sld [smem:[#allocation2 + $0x7c]]
      %v3290 = vstv %s3289
      %v3291 = vmul.f32 %v3290, %v70
      %v3292 = vmul.f32 %v3290, %v71
      %v3295 = vrot.slane %v3291, 2
      %v3296 = vrot.slane %v3292, 2
      %v3297 = vsel %vm2691, %v3295, %v3296
      %3298 = vrot.lane.b32.xlu0 %v3297, 127
      %v3299 = vpop.permute.xlu0 %3298
      %3300 = vrot.lane.b32.xlu0 %v3296, 127
      %v3301 = vpop.permute.xlu0 %3300
      %v3304 = vadd.f32 %v3168, %v3299
      %v3305 = vadd.f32 %v3169, %v3301
      %s3306 = sld [smem:[#allocation2 + $0xa0]]
      %v3307 = vstv %s3306
      %v3308 = vmul.f32 %v3307, %v70
      %v3309 = vmul.f32 %v3307, %v71
      %v3312 = vrot.slane %v3308, 2
      %v3313 = vrot.slane %v3309, 2
      %v3314 = vsel %vm2691, %v3312, %v3313
      %3315 = vrot.lane.b32.xlu0 %v3314, 127
      %v3316 = vpop.permute.xlu0 %3315
      %3317 = vrot.lane.b32.xlu0 %v3313, 127
      %v3318 = vpop.permute.xlu0 %3317
      %v3321 = vadd.f32 %v3185, %v3316
      %v3322 = vadd.f32 %v3186, %v3318
      %s3323 = sld [smem:[#allocation2 + $0xc4]]
      %v3324 = vstv %s3323
      %v3325 = vmul.f32 %v3324, %v70
      %v3326 = vmul.f32 %v3324, %v71
      %v3329 = vrot.slane %v3325, 2
      %v3330 = vrot.slane %v3326, 2
      %v3331 = vsel %vm2691, %v3329, %v3330
      %3332 = vrot.lane.b32.xlu0 %v3331, 127
      %v3333 = vpop.permute.xlu0 %3332
      %3334 = vrot.lane.b32.xlu0 %v3330, 127
      %v3335 = vpop.permute.xlu0 %3334
      %v3338 = vadd.f32 %v3202, %v3333
      %v3339 = vadd.f32 %v3203, %v3335
      %s3340 = sld [smem:[#allocation2 + $0xe8]]
      %v3341 = vstv %s3340
      %v3342 = vmul.f32 %v3341, %v70
      %v3343 = vmul.f32 %v3341, %v71
      %v3346 = vrot.slane %v3342, 2
      %v3347 = vrot.slane %v3343, 2
      %v3348 = vsel %vm2691, %v3346, %v3347
      %3349 = vrot.lane.b32.xlu0 %v3348, 127
      %v3350 = vpop.permute.xlu0 %3349
      %3351 = vrot.lane.b32.xlu0 %v3347, 127
      %v3352 = vpop.permute.xlu0 %3351
      %v3355 = vadd.f32 %v3219, %v3350
      %v3356 = vadd.f32 %v3220, %v3352
      %s3357 = sld [smem:[#allocation2 + $0x10c]]
      %v3358 = vstv %s3357
      %v3359 = vmul.f32 %v3358, %v70
      %v3360 = vmul.f32 %v3358, %v71
      %v3363 = vrot.slane %v3359, 2
      %v3364 = vrot.slane %v3360, 2
      %v3365 = vsel %vm2691, %v3363, %v3364
      %3366 = vrot.lane.b32.xlu0 %v3365, 127
      %v3367 = vpop.permute.xlu0 %3366
      %3368 = vrot.lane.b32.xlu0 %v3364, 127
      %v3369 = vpop.permute.xlu0 %3368
      %v3372 = vadd.f32 %v3236, %v3367
      %v3373 = vadd.f32 %v3237, %v3369
      %s3374 = sld [smem:[#allocation2 + $0x19]]
      %v3375 = vstv %s3374
      %v3376 = vmul.f32 %v3375, %v72
      %v3377 = vmul.f32 %v3375, %v73
      %v3380 = vrot.slane %v3376, 2
      %v3381 = vrot.slane %v3377, 2
      %v3382 = vsel %vm2691, %v3380, %v3381
      %3383 = vrot.lane.b32.xlu0 %v3382, 127
      %v3384 = vpop.permute.xlu0 %3383
      %3385 = vrot.lane.b32.xlu0 %v3381, 127
      %v3386 = vpop.permute.xlu0 %3385
      %v3389 = vadd.f32 %v3253, %v3384
      %v3390 = vadd.f32 %v3254, %v3386
      %s3391 = sld [smem:[#allocation2 + $0x3d]]
      %v3392 = vstv %s3391
      %v3393 = vmul.f32 %v3392, %v72
      %v3394 = vmul.f32 %v3392, %v73
      %v3397 = vrot.slane %v3393, 2
      %v3398 = vrot.slane %v3394, 2
      %v3399 = vsel %vm2691, %v3397, %v3398
      %3400 = vrot.lane.b32.xlu0 %v3399, 127
      %v3401 = vpop.permute.xlu0 %3400
      %3402 = vrot.lane.b32.xlu0 %v3398, 127
      %v3403 = vpop.permute.xlu0 %3402
      %v3406 = vadd.f32 %v3270, %v3401
      %v3407 = vadd.f32 %v3271, %v3403
      %s3408 = sld [smem:[#allocation2 + $0x61]]
      %v3409 = vstv %s3408
      %v3410 = vmul.f32 %v3409, %v72
      %v3411 = vmul.f32 %v3409, %v73
      %v3414 = vrot.slane %v3410, 2
      %v3415 = vrot.slane %v3411, 2
      %v3416 = vsel %vm2691, %v3414, %v3415
      %3417 = vrot.lane.b32.xlu0 %v3416, 127
      %v3418 = vpop.permute.xlu0 %3417
      %3419 = vrot.lane.b32.xlu0 %v3415, 127
      %v3420 = vpop.permute.xlu0 %3419
      %v3423 = vadd.f32 %v3287, %v3418
      %v3424 = vadd.f32 %v3288, %v3420
      %s3425 = sld [smem:[#allocation2 + $0x85]]
      %v3426 = vstv %s3425
      %v3427 = vmul.f32 %v3426, %v72
      %v3428 = vmul.f32 %v3426, %v73
      %v3431 = vrot.slane %v3427, 2
      %v3432 = vrot.slane %v3428, 2
      %v3433 = vsel %vm2691, %v3431, %v3432
      %3434 = vrot.lane.b32.xlu0 %v3433, 127
      %v3435 = vpop.permute.xlu0 %3434
      %3436 = vrot.lane.b32.xlu0 %v3432, 127
      %v3437 = vpop.permute.xlu0 %3436
      %v3440 = vadd.f32 %v3304, %v3435
      %v3441 = vadd.f32 %v3305, %v3437
      %s3442 = sld [smem:[#allocation2 + $0xa9]]
      %v3443 = vstv %s3442
      %v3444 = vmul.f32 %v3443, %v72
      %v3445 = vmul.f32 %v3443, %v73
      %v3448 = vrot.slane %v3444, 2
      %v3449 = vrot.slane %v3445, 2
      %v3450 = vsel %vm2691, %v3448, %v3449
      %3451 = vrot.lane.b32.xlu0 %v3450, 127
      %v3452 = vpop.permute.xlu0 %3451
      %3453 = vrot.lane.b32.xlu0 %v3449, 127
      %v3454 = vpop.permute.xlu0 %3453
      %v3457 = vadd.f32 %v3321, %v3452
      %v3458 = vadd.f32 %v3322, %v3454
      %s3459 = sld [smem:[#allocation2 + $0xcd]]
      %v3460 = vstv %s3459
      %v3461 = vmul.f32 %v3460, %v72
      %v3462 = vmul.f32 %v3460, %v73
      %v3465 = vrot.slane %v3461, 2
      %v3466 = vrot.slane %v3462, 2
      %v3467 = vsel %vm2691, %v3465, %v3466
      %3468 = vrot.lane.b32.xlu0 %v3467, 127
      %v3469 = vpop.permute.xlu0 %3468
      %3470 = vrot.lane.b32.xlu0 %v3466, 127
      %v3471 = vpop.permute.xlu0 %3470
      %v3474 = vadd.f32 %v3338, %v3469
      %v3475 = vadd.f32 %v3339, %v3471
      %s3476 = sld [smem:[#allocation2 + $0xf1]]
      %v3477 = vstv %s3476
      %v3478 = vmul.f32 %v3477, %v72
      %v3479 = vmul.f32 %v3477, %v73
      %v3482 = vrot.slane %v3478, 2
      %v3483 = vrot.slane %v3479, 2
      %v3484 = vsel %vm2691, %v3482, %v3483
      %3485 = vrot.lane.b32.xlu0 %v3484, 127
      %v3486 = vpop.permute.xlu0 %3485
      %3487 = vrot.lane.b32.xlu0 %v3483, 127
      %v3488 = vpop.permute.xlu0 %3487
      %v3491 = vadd.f32 %v3355, %v3486
      %v3492 = vadd.f32 %v3356, %v3488
      %s3493 = sld [smem:[#allocation2 + $0x115]]
      %v3494 = vstv %s3493
      %v3495 = vmul.f32 %v3494, %v72
      %v3496 = vmul.f32 %v3494, %v73
      %v3499 = vrot.slane %v3495, 2
      %v3500 = vrot.slane %v3496, 2
      %v3501 = vsel %vm2691, %v3499, %v3500
      %3502 = vrot.lane.b32.xlu0 %v3501, 127
      %v3503 = vpop.permute.xlu0 %3502
      %3504 = vrot.lane.b32.xlu0 %v3500, 127
      %v3505 = vpop.permute.xlu0 %3504
      %v3508 = vadd.f32 %v3372, %v3503
      %v3509 = vadd.f32 %v3373, %v3505
      %s3510 = sld [smem:[#allocation2 + $0x22]]
      %v3511 = vstv %s3510
      %v3512 = vmul.f32 %v3511, %v74
      %v3513 = vmul.f32 %v3511, %v75
      %v3516 = vrot.slane %v3512, 2
      %v3517 = vrot.slane %v3513, 2
      %v3518 = vsel %vm2691, %v3516, %v3517
      %3519 = vrot.lane.b32.xlu0 %v3518, 127
      %v3520 = vpop.permute.xlu0 %3519
      %3521 = vrot.lane.b32.xlu0 %v3517, 127
      %v3522 = vpop.permute.xlu0 %3521
      %v3525 = vadd.f32 %v3389, %v3520
      %v3526 = vadd.f32 %v3390, %v3522
      %s3527 = sld [smem:[#allocation2 + $0x46]]
      %v3528 = vstv %s3527
      %v3529 = vmul.f32 %v3528, %v74
      %v3530 = vmul.f32 %v3528, %v75
      %v3533 = vrot.slane %v3529, 2
      %v3534 = vrot.slane %v3530, 2
      %v3535 = vsel %vm2691, %v3533, %v3534
      %3536 = vrot.lane.b32.xlu0 %v3535, 127
      %v3537 = vpop.permute.xlu0 %3536
      %3538 = vrot.lane.b32.xlu0 %v3534, 127
      %v3539 = vpop.permute.xlu0 %3538
      %v3542 = vadd.f32 %v3406, %v3537
      %v3543 = vadd.f32 %v3407, %v3539
      %s3544 = sld [smem:[#allocation2 + $0x6a]]
      %v3545 = vstv %s3544
      %v3546 = vmul.f32 %v3545, %v74
      %v3547 = vmul.f32 %v3545, %v75
      %v3550 = vrot.slane %v3546, 2
      %v3551 = vrot.slane %v3547, 2
      %v3552 = vsel %vm2691, %v3550, %v3551
      %3553 = vrot.lane.b32.xlu0 %v3552, 127
      %v3554 = vpop.permute.xlu0 %3553
      %3555 = vrot.lane.b32.xlu0 %v3551, 127
      %v3556 = vpop.permute.xlu0 %3555
      %v3559 = vadd.f32 %v3423, %v3554
      %v3560 = vadd.f32 %v3424, %v3556
      %s3561 = sld [smem:[#allocation2 + $0x8e]]
      %v3562 = vstv %s3561
      %v3563 = vmul.f32 %v3562, %v74
      %v3564 = vmul.f32 %v3562, %v75
      %v3567 = vrot.slane %v3563, 2
      %v3568 = vrot.slane %v3564, 2
      %v3569 = vsel %vm2691, %v3567, %v3568
      %3570 = vrot.lane.b32.xlu0 %v3569, 127
      %v3571 = vpop.permute.xlu0 %3570
      %3572 = vrot.lane.b32.xlu0 %v3568, 127
      %v3573 = vpop.permute.xlu0 %3572
      %v3576 = vadd.f32 %v3440, %v3571
      %v3577 = vadd.f32 %v3441, %v3573
      %s3578 = sld [smem:[#allocation2 + $0xb2]]
      %v3579 = vstv %s3578
      %v3580 = vmul.f32 %v3579, %v74
      %v3581 = vmul.f32 %v3579, %v75
      %v3584 = vrot.slane %v3580, 2
      %v3585 = vrot.slane %v3581, 2
      %v3586 = vsel %vm2691, %v3584, %v3585
      %3587 = vrot.lane.b32.xlu0 %v3586, 127
      %v3588 = vpop.permute.xlu0 %3587
      %3589 = vrot.lane.b32.xlu0 %v3585, 127
      %v3590 = vpop.permute.xlu0 %3589
      %v3593 = vadd.f32 %v3457, %v3588
      %v3594 = vadd.f32 %v3458, %v3590
      %s3595 = sld [smem:[#allocation2 + $0xd6]]
      %v3596 = vstv %s3595
      %v3597 = vmul.f32 %v3596, %v74
      %v3598 = vmul.f32 %v3596, %v75
      %v3601 = vrot.slane %v3597, 2
      %v3602 = vrot.slane %v3598, 2
      %v3603 = vsel %vm2691, %v3601, %v3602
      %3604 = vrot.lane.b32.xlu0 %v3603, 127
      %v3605 = vpop.permute.xlu0 %3604
      %3606 = vrot.lane.b32.xlu0 %v3602, 127
      %v3607 = vpop.permute.xlu0 %3606
      %v3610 = vadd.f32 %v3474, %v3605
      %v3611 = vadd.f32 %v3475, %v3607
      %s3612 = sld [smem:[#allocation2 + $0xfa]]
      %v3613 = vstv %s3612
      %v3614 = vmul.f32 %v3613, %v74
      %v3615 = vmul.f32 %v3613, %v75
      %v3618 = vrot.slane %v3614, 2
      %v3619 = vrot.slane %v3615, 2
      %v3620 = vsel %vm2691, %v3618, %v3619
      %3621 = vrot.lane.b32.xlu0 %v3620, 127
      %v3622 = vpop.permute.xlu0 %3621
      %3623 = vrot.lane.b32.xlu0 %v3619, 127
      %v3624 = vpop.permute.xlu0 %3623
      %v3627 = vadd.f32 %v3491, %v3622
      %v3628 = vadd.f32 %v3492, %v3624
      %s3629 = sld [smem:[#allocation2 + $0x11e]]
      %v3630 = vstv %s3629
      %v3631 = vmul.f32 %v3630, %v74
      %v3632 = vmul.f32 %v3630, %v75
      %v3635 = vrot.slane %v3631, 2
      %v3636 = vrot.slane %v3632, 2
      %v3637 = vsel %vm2691, %v3635, %v3636
      %3638 = vrot.lane.b32.xlu0 %v3637, 127
      %v3639 = vpop.permute.xlu0 %3638
      %3640 = vrot.lane.b32.xlu0 %v3636, 127
      %v3641 = vpop.permute.xlu0 %3640
      %v3644 = vadd.f32 %v3508, %v3639
      %v3645 = vadd.f32 %v3509, %v3641
      %s3646 = sld [smem:[#allocation2 + $0x8]]
      %v3647 = vstv %s3646
      %v3648 = vmul.f32 %v3647, %v68
      %v3649 = vmul.f32 %v3647, %v69
      %v3652 = vrot.slane %v3648, 2
      %v3653 = vrot.slane %v3649, 2
      %v3654 = vsel %vm2691, %v3652, %v3653
      %3655 = vrot.lane.b32.xlu0 %v3654, 126
      %v3656 = vpop.permute.xlu0 %3655
      %3657 = vrot.lane.b32.xlu0 %v3653, 126
      %v3658 = vpop.permute.xlu0 %3657
      %v3661 = vadd.f32 %v3525, %v3656
      %v3662 = vadd.f32 %v3526, %v3658
      %s3663 = sld [smem:[#allocation2 + $0x2c]]
      %v3664 = vstv %s3663
      %v3665 = vmul.f32 %v3664, %v68
      %v3666 = vmul.f32 %v3664, %v69
      %v3669 = vrot.slane %v3665, 2
      %v3670 = vrot.slane %v3666, 2
      %v3671 = vsel %vm2691, %v3669, %v3670
      %3672 = vrot.lane.b32.xlu0 %v3671, 126
      %v3673 = vpop.permute.xlu0 %3672
      %3674 = vrot.lane.b32.xlu0 %v3670, 126
      %v3675 = vpop.permute.xlu0 %3674
      %v3678 = vadd.f32 %v3542, %v3673
      %v3679 = vadd.f32 %v3543, %v3675
      %s3680 = sld [smem:[#allocation2 + $0x50]]
      %v3681 = vstv %s3680
      %v3682 = vmul.f32 %v3681, %v68
      %v3683 = vmul.f32 %v3681, %v69
      %v3686 = vrot.slane %v3682, 2
      %v3687 = vrot.slane %v3683, 2
      %v3688 = vsel %vm2691, %v3686, %v3687
      %3689 = vrot.lane.b32.xlu0 %v3688, 126
      %v3690 = vpop.permute.xlu0 %3689
      %3691 = vrot.lane.b32.xlu0 %v3687, 126
      %v3692 = vpop.permute.xlu0 %3691
      %v3695 = vadd.f32 %v3559, %v3690
      %v3696 = vadd.f32 %v3560, %v3692
      %s3697 = sld [smem:[#allocation2 + $0x74]]
      %v3698 = vstv %s3697
      %v3699 = vmul.f32 %v3698, %v68
      %v3700 = vmul.f32 %v3698, %v69
      %v3703 = vrot.slane %v3699, 2
      %v3704 = vrot.slane %v3700, 2
      %v3705 = vsel %vm2691, %v3703, %v3704
      %3706 = vrot.lane.b32.xlu0 %v3705, 126
      %v3707 = vpop.permute.xlu0 %3706
      %3708 = vrot.lane.b32.xlu0 %v3704, 126
      %v3709 = vpop.permute.xlu0 %3708
      %v3712 = vadd.f32 %v3576, %v3707
      %v3713 = vadd.f32 %v3577, %v3709
      %s3714 = sld [smem:[#allocation2 + $0x98]]
      %v3715 = vstv %s3714
      %v3716 = vmul.f32 %v3715, %v68
      %v3717 = vmul.f32 %v3715, %v69
      %v3720 = vrot.slane %v3716, 2
      %v3721 = vrot.slane %v3717, 2
      %v3722 = vsel %vm2691, %v3720, %v3721
      %3723 = vrot.lane.b32.xlu0 %v3722, 126
      %v3724 = vpop.permute.xlu0 %3723
      %3725 = vrot.lane.b32.xlu0 %v3721, 126
      %v3726 = vpop.permute.xlu0 %3725
      %v3729 = vadd.f32 %v3593, %v3724
      %v3730 = vadd.f32 %v3594, %v3726
      %s3731 = sld [smem:[#allocation2 + $0xbc]]
      %v3732 = vstv %s3731
      %v3733 = vmul.f32 %v3732, %v68
      %v3734 = vmul.f32 %v3732, %v69
      %v3737 = vrot.slane %v3733, 2
      %v3738 = vrot.slane %v3734, 2
      %v3739 = vsel %vm2691, %v3737, %v3738
      %3740 = vrot.lane.b32.xlu0 %v3739, 126
      %v3741 = vpop.permute.xlu0 %3740
      %3742 = vrot.lane.b32.xlu0 %v3738, 126
      %v3743 = vpop.permute.xlu0 %3742
      %v3746 = vadd.f32 %v3610, %v3741
      %v3747 = vadd.f32 %v3611, %v3743
      %s3748 = sld [smem:[#allocation2 + $0xe0]]
      %v3749 = vstv %s3748
      %v3750 = vmul.f32 %v3749, %v68
      %v3751 = vmul.f32 %v3749, %v69
      %v3754 = vrot.slane %v3750, 2
      %v3755 = vrot.slane %v3751, 2
      %v3756 = vsel %vm2691, %v3754, %v3755
      %3757 = vrot.lane.b32.xlu0 %v3756, 126
      %v3758 = vpop.permute.xlu0 %3757
      %3759 = vrot.lane.b32.xlu0 %v3755, 126
      %v3760 = vpop.permute.xlu0 %3759
      %v3763 = vadd.f32 %v3627, %v3758
      %v3764 = vadd.f32 %v3628, %v3760
      %s3765 = sld [smem:[#allocation2 + $0x104]]
      %v3766 = vstv %s3765
      %v3767 = vmul.f32 %v3766, %v68
      %v3768 = vmul.f32 %v3766, %v69
      %v3771 = vrot.slane %v3767, 2
      %v3772 = vrot.slane %v3768, 2
      %v3773 = vsel %vm2691, %v3771, %v3772
      %3774 = vrot.lane.b32.xlu0 %v3773, 126
      %v3775 = vpop.permute.xlu0 %3774
      %3776 = vrot.lane.b32.xlu0 %v3772, 126
      %v3777 = vpop.permute.xlu0 %3776
      %v3780 = vadd.f32 %v3644, %v3775
      %v3781 = vadd.f32 %v3645, %v3777
      %s3782 = sld [smem:[#allocation2 + $0x11]]
      %v3783 = vstv %s3782
      %v3784 = vmul.f32 %v3783, %v70
      %v3785 = vmul.f32 %v3783, %v71
      %v3788 = vrot.slane %v3784, 2
      %v3789 = vrot.slane %v3785, 2
      %v3790 = vsel %vm2691, %v3788, %v3789
      %3791 = vrot.lane.b32.xlu0 %v3790, 126
      %v3792 = vpop.permute.xlu0 %3791
      %3793 = vrot.lane.b32.xlu0 %v3789, 126
      %v3794 = vpop.permute.xlu0 %3793
      %v3797 = vadd.f32 %v3661, %v3792
      %v3798 = vadd.f32 %v3662, %v3794
      %s3799 = sld [smem:[#allocation2 + $0x35]]
      %v3800 = vstv %s3799
      %v3801 = vmul.f32 %v3800, %v70
      %v3802 = vmul.f32 %v3800, %v71
      %v3805 = vrot.slane %v3801, 2
      %v3806 = vrot.slane %v3802, 2
      %v3807 = vsel %vm2691, %v3805, %v3806
      %3808 = vrot.lane.b32.xlu0 %v3807, 126
      %v3809 = vpop.permute.xlu0 %3808
      %3810 = vrot.lane.b32.xlu0 %v3806, 126
      %v3811 = vpop.permute.xlu0 %3810
      %v3814 = vadd.f32 %v3678, %v3809
      %v3815 = vadd.f32 %v3679, %v3811
      %s3816 = sld [smem:[#allocation2 + $0x59]]
      %v3817 = vstv %s3816
      %v3818 = vmul.f32 %v3817, %v70
      %v3819 = vmul.f32 %v3817, %v71
      %v3822 = vrot.slane %v3818, 2
      %v3823 = vrot.slane %v3819, 2
      %v3824 = vsel %vm2691, %v3822, %v3823
      %3825 = vrot.lane.b32.xlu0 %v3824, 126
      %v3826 = vpop.permute.xlu0 %3825
      %3827 = vrot.lane.b32.xlu0 %v3823, 126
      %v3828 = vpop.permute.xlu0 %3827
      %v3831 = vadd.f32 %v3695, %v3826
      %v3832 = vadd.f32 %v3696, %v3828
      %s3833 = sld [smem:[#allocation2 + $0x7d]]
      %v3834 = vstv %s3833
      %v3835 = vmul.f32 %v3834, %v70
      %v3836 = vmul.f32 %v3834, %v71
      %v3839 = vrot.slane %v3835, 2
      %v3840 = vrot.slane %v3836, 2
      %v3841 = vsel %vm2691, %v3839, %v3840
      %3842 = vrot.lane.b32.xlu0 %v3841, 126
      %v3843 = vpop.permute.xlu0 %3842
      %3844 = vrot.lane.b32.xlu0 %v3840, 126
      %v3845 = vpop.permute.xlu0 %3844
      %v3848 = vadd.f32 %v3712, %v3843
      %v3849 = vadd.f32 %v3713, %v3845
      %s3850 = sld [smem:[#allocation2 + $0xa1]]
      %v3851 = vstv %s3850
      %v3852 = vmul.f32 %v3851, %v70
      %v3853 = vmul.f32 %v3851, %v71
      %v3856 = vrot.slane %v3852, 2
      %v3857 = vrot.slane %v3853, 2
      %v3858 = vsel %vm2691, %v3856, %v3857
      %3859 = vrot.lane.b32.xlu0 %v3858, 126
      %v3860 = vpop.permute.xlu0 %3859
      %3861 = vrot.lane.b32.xlu0 %v3857, 126
      %v3862 = vpop.permute.xlu0 %3861
      %v3865 = vadd.f32 %v3729, %v3860
      %v3866 = vadd.f32 %v3730, %v3862
      %s3867 = sld [smem:[#allocation2 + $0xc5]]
      %v3868 = vstv %s3867
      %v3869 = vmul.f32 %v3868, %v70
      %v3870 = vmul.f32 %v3868, %v71
      %v3873 = vrot.slane %v3869, 2
      %v3874 = vrot.slane %v3870, 2
      %v3875 = vsel %vm2691, %v3873, %v3874
      %3876 = vrot.lane.b32.xlu0 %v3875, 126
      %v3877 = vpop.permute.xlu0 %3876
      %3878 = vrot.lane.b32.xlu0 %v3874, 126
      %v3879 = vpop.permute.xlu0 %3878
      %v3882 = vadd.f32 %v3746, %v3877
      %v3883 = vadd.f32 %v3747, %v3879
      %s3884 = sld [smem:[#allocation2 + $0xe9]]
      %v3885 = vstv %s3884
      %v3886 = vmul.f32 %v3885, %v70
      %v3887 = vmul.f32 %v3885, %v71
      %v3890 = vrot.slane %v3886, 2
      %v3891 = vrot.slane %v3887, 2
      %v3892 = vsel %vm2691, %v3890, %v3891
      %3893 = vrot.lane.b32.xlu0 %v3892, 126
      %v3894 = vpop.permute.xlu0 %3893
      %3895 = vrot.lane.b32.xlu0 %v3891, 126
      %v3896 = vpop.permute.xlu0 %3895
      %v3899 = vadd.f32 %v3763, %v3894
      %v3900 = vadd.f32 %v3764, %v3896
      %s3901 = sld [smem:[#allocation2 + $0x10d]]
      %v3902 = vstv %s3901
      %v3903 = vmul.f32 %v3902, %v70
      %v3904 = vmul.f32 %v3902, %v71
      %v3907 = vrot.slane %v3903, 2
      %v3908 = vrot.slane %v3904, 2
      %v3909 = vsel %vm2691, %v3907, %v3908
      %3910 = vrot.lane.b32.xlu0 %v3909, 126
      %v3911 = vpop.permute.xlu0 %3910
      %3912 = vrot.lane.b32.xlu0 %v3908, 126
      %v3913 = vpop.permute.xlu0 %3912
      %v3916 = vadd.f32 %v3780, %v3911
      %v3917 = vadd.f32 %v3781, %v3913
      %s3918 = sld [smem:[#allocation2 + $0x1a]]
      %v3919 = vstv %s3918
      %v3920 = vmul.f32 %v3919, %v72
      %v3921 = vmul.f32 %v3919, %v73
      %v3924 = vrot.slane %v3920, 2
      %v3925 = vrot.slane %v3921, 2
      %v3926 = vsel %vm2691, %v3924, %v3925
      %3927 = vrot.lane.b32.xlu0 %v3926, 126
      %v3928 = vpop.permute.xlu0 %3927
      %3929 = vrot.lane.b32.xlu0 %v3925, 126
      %v3930 = vpop.permute.xlu0 %3929
      %v3933 = vadd.f32 %v3797, %v3928
      %v3934 = vadd.f32 %v3798, %v3930
      %s3935 = sld [smem:[#allocation2 + $0x3e]]
      %v3936 = vstv %s3935
      %v3937 = vmul.f32 %v3936, %v72
      %v3938 = vmul.f32 %v3936, %v73
      %v3941 = vrot.slane %v3937, 2
      %v3942 = vrot.slane %v3938, 2
      %v3943 = vsel %vm2691, %v3941, %v3942
      %3944 = vrot.lane.b32.xlu0 %v3943, 126
      %v3945 = vpop.permute.xlu0 %3944
      %3946 = vrot.lane.b32.xlu0 %v3942, 126
      %v3947 = vpop.permute.xlu0 %3946
      %v3950 = vadd.f32 %v3814, %v3945
      %v3951 = vadd.f32 %v3815, %v3947
      %s3952 = sld [smem:[#allocation2 + $0x62]]
      %v3953 = vstv %s3952
      %v3954 = vmul.f32 %v3953, %v72
      %v3955 = vmul.f32 %v3953, %v73
      %v3958 = vrot.slane %v3954, 2
      %v3959 = vrot.slane %v3955, 2
      %v3960 = vsel %vm2691, %v3958, %v3959
      %3961 = vrot.lane.b32.xlu0 %v3960, 126
      %v3962 = vpop.permute.xlu0 %3961
      %3963 = vrot.lane.b32.xlu0 %v3959, 126
      %v3964 = vpop.permute.xlu0 %3963
      %v3967 = vadd.f32 %v3831, %v3962
      %v3968 = vadd.f32 %v3832, %v3964
      %s3969 = sld [smem:[#allocation2 + $0x86]]
      %v3970 = vstv %s3969
      %v3971 = vmul.f32 %v3970, %v72
      %v3972 = vmul.f32 %v3970, %v73
      %v3975 = vrot.slane %v3971, 2
      %v3976 = vrot.slane %v3972, 2
      %v3977 = vsel %vm2691, %v3975, %v3976
      %3978 = vrot.lane.b32.xlu0 %v3977, 126
      %v3979 = vpop.permute.xlu0 %3978
      %3980 = vrot.lane.b32.xlu0 %v3976, 126
      %v3981 = vpop.permute.xlu0 %3980
      %v3984 = vadd.f32 %v3848, %v3979
      %v3985 = vadd.f32 %v3849, %v3981
      %s3986 = sld [smem:[#allocation2 + $0xaa]]
      %v3987 = vstv %s3986
      %v3988 = vmul.f32 %v3987, %v72
      %v3989 = vmul.f32 %v3987, %v73
      %v3992 = vrot.slane %v3988, 2
      %v3993 = vrot.slane %v3989, 2
      %v3994 = vsel %vm2691, %v3992, %v3993
      %3995 = vrot.lane.b32.xlu0 %v3994, 126
      %v3996 = vpop.permute.xlu0 %3995
      %3997 = vrot.lane.b32.xlu0 %v3993, 126
      %v3998 = vpop.permute.xlu0 %3997
      %v4001 = vadd.f32 %v3865, %v3996
      %v4002 = vadd.f32 %v3866, %v3998
      %s4003 = sld [smem:[#allocation2 + $0xce]]
      %v4004 = vstv %s4003
      %v4005 = vmul.f32 %v4004, %v72
      %v4006 = vmul.f32 %v4004, %v73
      %v4009 = vrot.slane %v4005, 2
      %v4010 = vrot.slane %v4006, 2
      %v4011 = vsel %vm2691, %v4009, %v4010
      %4012 = vrot.lane.b32.xlu0 %v4011, 126
      %v4013 = vpop.permute.xlu0 %4012
      %4014 = vrot.lane.b32.xlu0 %v4010, 126
      %v4015 = vpop.permute.xlu0 %4014
      %v4018 = vadd.f32 %v3882, %v4013
      %v4019 = vadd.f32 %v3883, %v4015
      %s4020 = sld [smem:[#allocation2 + $0xf2]]
      %v4021 = vstv %s4020
      %v4022 = vmul.f32 %v4021, %v72
      %v4023 = vmul.f32 %v4021, %v73
      %v4026 = vrot.slane %v4022, 2
      %v4027 = vrot.slane %v4023, 2
      %v4028 = vsel %vm2691, %v4026, %v4027
      %4029 = vrot.lane.b32.xlu0 %v4028, 126
      %v4030 = vpop.permute.xlu0 %4029
      %4031 = vrot.lane.b32.xlu0 %v4027, 126
      %v4032 = vpop.permute.xlu0 %4031
      %v4035 = vadd.f32 %v3899, %v4030
      %v4036 = vadd.f32 %v3900, %v4032
      %s4037 = sld [smem:[#allocation2 + $0x116]]
      %v4038 = vstv %s4037
      %v4039 = vmul.f32 %v4038, %v72
      %v4040 = vmul.f32 %v4038, %v73
      %v4043 = vrot.slane %v4039, 2
      %v4044 = vrot.slane %v4040, 2
      %v4045 = vsel %vm2691, %v4043, %v4044
      %4046 = vrot.lane.b32.xlu0 %v4045, 126
      %v4047 = vpop.permute.xlu0 %4046
      %4048 = vrot.lane.b32.xlu0 %v4044, 126
      %v4049 = vpop.permute.xlu0 %4048
      %v4052 = vadd.f32 %v3916, %v4047
      %v4053 = vadd.f32 %v3917, %v4049
      %s4054 = sld [smem:[#allocation2 + $0x23]]
      %v4055 = vstv %s4054
      %v4056 = vmul.f32 %v4055, %v74
      %v4057 = vmul.f32 %v4055, %v75
      %v4060 = vrot.slane %v4056, 2
      %v4061 = vrot.slane %v4057, 2
      %v4062 = vsel %vm2691, %v4060, %v4061
      %4063 = vrot.lane.b32.xlu0 %v4062, 126
      %v4064 = vpop.permute.xlu0 %4063
      %4065 = vrot.lane.b32.xlu0 %v4061, 126
      %v4066 = vpop.permute.xlu0 %4065
      %v4069 = vadd.f32 %v3933, %v4064
      %v4070 = vadd.f32 %v3934, %v4066
      %s4071 = sld [smem:[#allocation2 + $0x47]]
      %v4072 = vstv %s4071
      %v4073 = vmul.f32 %v4072, %v74
      %v4074 = vmul.f32 %v4072, %v75
      %v4077 = vrot.slane %v4073, 2
      %v4078 = vrot.slane %v4074, 2
      %v4079 = vsel %vm2691, %v4077, %v4078
      %4080 = vrot.lane.b32.xlu0 %v4079, 126
      %v4081 = vpop.permute.xlu0 %4080
      %4082 = vrot.lane.b32.xlu0 %v4078, 126
      %v4083 = vpop.permute.xlu0 %4082
      %v4086 = vadd.f32 %v3950, %v4081
      %v4087 = vadd.f32 %v3951, %v4083
      %s4088 = sld [smem:[#allocation2 + $0x6b]]
      %v4089 = vstv %s4088
      %v4090 = vmul.f32 %v4089, %v74
      %v4091 = vmul.f32 %v4089, %v75
      %v4094 = vrot.slane %v4090, 2
      %v4095 = vrot.slane %v4091, 2
      %v4096 = vsel %vm2691, %v4094, %v4095
      %4097 = vrot.lane.b32.xlu0 %v4096, 126
      %v4098 = vpop.permute.xlu0 %4097
      %4099 = vrot.lane.b32.xlu0 %v4095, 126
      %v4100 = vpop.permute.xlu0 %4099
      %v4103 = vadd.f32 %v3967, %v4098
      %v4104 = vadd.f32 %v3968, %v4100
      %s4105 = sld [smem:[#allocation2 + $0x8f]]
      %v4106 = vstv %s4105
      %v4107 = vmul.f32 %v4106, %v74
      %v4108 = vmul.f32 %v4106, %v75
      %v4111 = vrot.slane %v4107, 2
      %v4112 = vrot.slane %v4108, 2
      %v4113 = vsel %vm2691, %v4111, %v4112
      %4114 = vrot.lane.b32.xlu0 %v4113, 126
      %v4115 = vpop.permute.xlu0 %4114
      %4116 = vrot.lane.b32.xlu0 %v4112, 126
      %v4117 = vpop.permute.xlu0 %4116
      %v4120 = vadd.f32 %v3984, %v4115
      %v4121 = vadd.f32 %v3985, %v4117
      %s4122 = sld [smem:[#allocation2 + $0xb3]]
      %v4123 = vstv %s4122
      %v4124 = vmul.f32 %v4123, %v74
      %v4125 = vmul.f32 %v4123, %v75
      %v4128 = vrot.slane %v4124, 2
      %v4129 = vrot.slane %v4125, 2
      %v4130 = vsel %vm2691, %v4128, %v4129
      %4131 = vrot.lane.b32.xlu0 %v4130, 126
      %v4132 = vpop.permute.xlu0 %4131
      %4133 = vrot.lane.b32.xlu0 %v4129, 126
      %v4134 = vpop.permute.xlu0 %4133
      %v4137 = vadd.f32 %v4001, %v4132
      %v4138 = vadd.f32 %v4002, %v4134
      %s4139 = sld [smem:[#allocation2 + $0xd7]]
      %v4140 = vstv %s4139
      %v4141 = vmul.f32 %v4140, %v74
      %v4142 = vmul.f32 %v4140, %v75
      %v4145 = vrot.slane %v4141, 2
      %v4146 = vrot.slane %v4142, 2
      %v4147 = vsel %vm2691, %v4145, %v4146
      %4148 = vrot.lane.b32.xlu0 %v4147, 126
      %v4149 = vpop.permute.xlu0 %4148
      %4150 = vrot.lane.b32.xlu0 %v4146, 126
      %v4151 = vpop.permute.xlu0 %4150
      %v4154 = vadd.f32 %v4018, %v4149
      %v4155 = vadd.f32 %v4019, %v4151
      %s4156 = sld [smem:[#allocation2 + $0xfb]]
      %v4157 = vstv %s4156
      %v4158 = vmul.f32 %v4157, %v74
      %v4159 = vmul.f32 %v4157, %v75
      %v4162 = vrot.slane %v4158, 2
      %v4163 = vrot.slane %v4159, 2
      %v4164 = vsel %vm2691, %v4162, %v4163
      %4165 = vrot.lane.b32.xlu0 %v4164, 126
      %v4166 = vpop.permute.xlu0 %4165
      %4167 = vrot.lane.b32.xlu0 %v4163, 126
      %v4168 = vpop.permute.xlu0 %4167
      %v4171 = vadd.f32 %v4035, %v4166
      %v4172 = vadd.f32 %v4036, %v4168
      %s4173 = sld [smem:[#allocation2 + $0x11f]]
      %v4174 = vstv %s4173
      %v4175 = vmul.f32 %v4174, %v74
      %v4176 = vmul.f32 %v4174, %v75
      %v4179 = vrot.slane %v4175, 2
      %v4180 = vrot.slane %v4176, 2
      %v4181 = vsel %vm2691, %v4179, %v4180
      %4182 = vrot.lane.b32.xlu0 %v4181, 126
      %v4183 = vpop.permute.xlu0 %4182
      %4184 = vrot.lane.b32.xlu0 %v4180, 126
      %v4185 = vpop.permute.xlu0 %4184
      %v4188 = vadd.f32 %v4052, %v4183
      %v4189 = vadd.f32 %v4053, %v4185
      %vm4190 = vcmask 113664
      %v4192 = vsel %vm4190, %v4137, 0
      %v4195 = vsel %vm4190, %v4138, 0
      %v4198 = vsel %vm2691, %v59, 0
      %4200 = vmatprep.subr.mxu0 0.0
      %4201 = vmatpush1.msra.mxu0 %v58
      %4202 = vmatprep.subr.mxu0 0.0
      %4203 = vmatpush1.msra.mxu0 %v4198
      %4204 = vmatprep.subr.mxu0 0.0
      %4205 = vmatpush1.msra.mxu0 0.0
      %4206 = vmatprep.subr.mxu0 0.0
      %4207 = vmatpush1.msra.mxu0 0.0
      %4208 = vmatprep.subr.mxu0 0.0
      %4209 = vmatpush1.msra.mxu0 0.0
      %4210 = vmatprep.subr.mxu0 0.0
      %4211 = vmatpush1.msra.mxu0 0.0
      %4212 = vmatprep.subr.mxu0 0.0
      %4213 = vmatpush1.msra.mxu0 0.0
      %4214 = vmatprep.subr.mxu0 0.0
      %4215 = vmatpush1.msra.mxu0 0.0
      %4216 = vmatprep.subr.mxu0 0.0
      %4217 = vmatpush1.msra.mxu0 0.0
      %4218 = vmatprep.subr.mxu0 0.0
      %4219 = vmatpush1.msra.mxu0 0.0
      %4220 = vmatprep.subr.mxu0 0.0
      %4221 = vmatpush1.msra.mxu0 0.0
      %4222 = vmatprep.subr.mxu0 0.0
      %4223 = vmatpush1.msra.mxu0 0.0
      %4224 = vmatprep.subr.mxu0 0.0
      %4225 = vmatpush1.msra.mxu0 0.0
      %4226 = vmatprep.subr.mxu0 0.0
      %4227 = vmatpush1.msra.mxu0 0.0
      %4228 = vmatprep.subr.mxu0 0.0
      %4229 = vmatpush1.msra.mxu0 0.0
      %4230 = vmatprep.subr.mxu0 0.0
      %4231 = vmatpush1.msra.mxu0 0.0
      %4232 = vmatprep.subr.mxu0 0.0
      %4233 = vmatpush1.msra.mxu0 0.0
      %4234 = vmatprep.subr.mxu0 0.0
      %4235 = vmatpush1.msra.mxu0 0.0
      %4236 = vmatprep.subr.mxu0 0.0
      %4237 = vmatpush1.msra.mxu0 0.0
      %4238 = vmatprep.subr.mxu0 0.0
      %4239 = vmatpush1.msra.mxu0 0.0
      %4240 = vmatprep.subr.mxu0 0.0
      %4241 = vmatpush1.msra.mxu0 0.0
      %4242 = vmatprep.subr.mxu0 0.0
      %4243 = vmatpush1.msra.mxu0 0.0
      %4244 = vmatprep.subr.mxu0 0.0
      %4245 = vmatpush1.msra.mxu0 0.0
      %4246 = vmatprep.subr.mxu0 0.0
      %4247 = vmatpush1.msra.mxu0 0.0
      %4248 = vmatprep.subr.mxu0 0.0
      %4249 = vmatpush1.msra.mxu0 0.0
      %4250 = vmatprep.subr.mxu0 0.0
      %4251 = vmatpush1.msra.mxu0 0.0
      %4252 = vmatprep.subr.mxu0 0.0
      %4253 = vmatpush1.msra.mxu0 0.0
      %4254 = vmatprep.subr.mxu0 0.0
      %4255 = vmatpush1.msra.mxu0 0.0
      %4256 = vmatprep.subr.mxu0 0.0
      %4257 = vmatpush1.msra.mxu0 0.0
      %4258 = vmatprep.subr.mxu0 0.0
      %4259 = vmatpush1.msra.mxu0 0.0
      %4260 = vmatprep.subr.mxu0 0.0
      %4261 = vmatpush1.msra.mxu0 0.0
      %4262 = vmatprep.subr.mxu0 0.0
      %4263 = vmatpush1.msra.mxu0 0.0
      %4264 = vmatprep.mubr.f32.mxu0 0.0
      %4265 = vmatmul.mubr.f32.gmra.mrb[0].mxu0 %v4192
      %v4266 = vpop.f32.mrb[0].mxu0
      %v4267 = vadd.f32 0.0, %v4266
      %v4268 = vpop.f32.mrb[0].mxu0
      %4269 = vmatprep.mubr.f32.mxu0 0.0
      %4270 = vmatmul.mubr.f32.gmra.mrb[0].mxu0 %v4195
      %v4271 = vpop.f32.mrb[0].mxu0
      %v4272 = vadd.f32 0.0, %v4271
      %v4273 = vpop.f32.mrb[0].mxu0
      %4274 = vdwg.mxu0
      %v4276 = vsel %vm4190, %v4069, 0
      %v4279 = vsel %vm4190, %v4070, 0
      %v4282 = vsel %vm2691, %v51, 0
      %4284 = vmatprep.subr.mxu0 0.0
      %4285 = vmatpush1.msra.mxu0 %v50
      %4286 = vmatprep.subr.mxu0 0.0
      %4287 = vmatpush1.msra.mxu0 %v4282
      %4288 = vmatprep.subr.mxu0 0.0
      %4289 = vmatpush1.msra.mxu0 0.0
      %4290 = vmatprep.subr.mxu0 0.0
      %4291 = vmatpush1.msra.mxu0 0.0
      %4292 = vmatprep.subr.mxu0 0.0
      %4293 = vmatpush1.msra.mxu0 0.0
      %4294 = vmatprep.subr.mxu0 0.0
      %4295 = vmatpush1.msra.mxu0 0.0
      %4296 = vmatprep.subr.mxu0 0.0
      %4297 = vmatpush1.msra.mxu0 0.0
      %4298 = vmatprep.subr.mxu0 0.0
      %4299 = vmatpush1.msra.mxu0 0.0
      %4300 = vmatprep.subr.mxu0 0.0
      %4301 = vmatpush1.msra.mxu0 0.0
      %4302 = vmatprep.subr.mxu0 0.0
      %4303 = vmatpush1.msra.mxu0 0.0
      %4304 = vmatprep.subr.mxu0 0.0
      %4305 = vmatpush1.msra.mxu0 0.0
      %4306 = vmatprep.subr.mxu0 0.0
      %4307 = vmatpush1.msra.mxu0 0.0
      %4308 = vmatprep.subr.mxu0 0.0
      %4309 = vmatpush1.msra.mxu0 0.0
      %4310 = vmatprep.subr.mxu0 0.0
      %4311 = vmatpush1.msra.mxu0 0.0
      %4312 = vmatprep.subr.mxu0 0.0
      %4313 = vmatpush1.msra.mxu0 0.0
      %4314 = vmatprep.subr.mxu0 0.0
      %4315 = vmatpush1.msra.mxu0 0.0
      %4316 = vmatprep.subr.mxu0 0.0
      %4317 = vmatpush1.msra.mxu0 0.0
      %4318 = vmatprep.subr.mxu0 0.0
      %4319 = vmatpush1.msra.mxu0 0.0
      %4320 = vmatprep.subr.mxu0 0.0
      %4321 = vmatpush1.msra.mxu0 0.0
      %4322 = vmatprep.subr.mxu0 0.0
      %4323 = vmatpush1.msra.mxu0 0.0
      %4324 = vmatprep.subr.mxu0 0.0
      %4325 = vmatpush1.msra.mxu0 0.0
      %4326 = vmatprep.subr.mxu0 0.0
      %4327 = vmatpush1.msra.mxu0 0.0
      %4328 = vmatprep.subr.mxu0 0.0
      %4329 = vmatpush1.msra.mxu0 0.0
      %4330 = vmatprep.subr.mxu0 0.0
      %4331 = vmatpush1.msra.mxu0 0.0
      %4332 = vmatprep.subr.mxu0 0.0
      %4333 = vmatpush1.msra.mxu0 0.0
      %4334 = vmatprep.subr.mxu0 0.0
      %4335 = vmatpush1.msra.mxu0 0.0
      %4336 = vmatprep.subr.mxu0 0.0
      %4337 = vmatpush1.msra.mxu0 0.0
      %4338 = vmatprep.subr.mxu0 0.0
      %4339 = vmatpush1.msra.mxu0 0.0
      %4340 = vmatprep.subr.mxu0 0.0
      %4341 = vmatpush1.msra.mxu0 0.0
      %4342 = vmatprep.subr.mxu0 0.0
      %4343 = vmatpush1.msra.mxu0 0.0
      %4344 = vmatprep.subr.mxu0 0.0
      %4345 = vmatpush1.msra.mxu0 0.0
      %4346 = vmatprep.subr.mxu0 0.0
      %4347 = vmatpush1.msra.mxu0 0.0
      %4348 = vmatprep.mubr.f32.mxu0 0.0
      %4349 = vmatmul.mubr.f32.gmra.mrb[0].mxu0 %v4276
      %v4350 = vpop.f32.mrb[0].mxu0
      %v4351 = vadd.f32 %v4267, %v4350
      %v4352 = vpop.f32.mrb[0].mxu0
      %4353 = vmatprep.mubr.f32.mxu0 0.0
      %4354 = vmatmul.mubr.f32.gmra.mrb[0].mxu0 %v4279
      %v4355 = vpop.f32.mrb[0].mxu0
      %v4356 = vadd.f32 %v4272, %v4355
      %v4357 = vpop.f32.mrb[0].mxu0
      %4358 = vdwg.mxu0
      %v4360 = vsel %vm4190, %v4154, 0
      %v4363 = vsel %vm4190, %v4155, 0
      %4365 = vmatprep.subr.mxu0 0.0
      %4366 = vmatpush1.msra.mxu0 %v58
      %4367 = vmatprep.subr.mxu0 0.0
      %4368 = vmatpush1.msra.mxu0 %v4198
      %4369 = vmatprep.subr.mxu0 0.0
      %4370 = vmatpush1.msra.mxu0 0.0
      %4371 = vmatprep.subr.mxu0 0.0
      %4372 = vmatpush1.msra.mxu0 0.0
      %4373 = vmatprep.subr.mxu0 0.0
      %4374 = vmatpush1.msra.mxu0 0.0
      %4375 = vmatprep.subr.mxu0 0.0
      %4376 = vmatpush1.msra.mxu0 0.0
      %4377 = vmatprep.subr.mxu0 0.0
      %4378 = vmatpush1.msra.mxu0 0.0
      %4379 = vmatprep.subr.mxu0 0.0
      %4380 = vmatpush1.msra.mxu0 0.0
      %4381 = vmatprep.subr.mxu0 0.0
      %4382 = vmatpush1.msra.mxu0 0.0
      %4383 = vmatprep.subr.mxu0 0.0
      %4384 = vmatpush1.msra.mxu0 0.0
      %4385 = vmatprep.subr.mxu0 0.0
      %4386 = vmatpush1.msra.mxu0 0.0
      %4387 = vmatprep.subr.mxu0 0.0
      %4388 = vmatpush1.msra.mxu0 0.0
      %4389 = vmatprep.subr.mxu0 0.0
      %4390 = vmatpush1.msra.mxu0 0.0
      %4391 = vmatprep.subr.mxu0 0.0
      %4392 = vmatpush1.msra.mxu0 0.0
      %4393 = vmatprep.subr.mxu0 0.0
      %4394 = vmatpush1.msra.mxu0 0.0
      %4395 = vmatprep.subr.mxu0 0.0
      %4396 = vmatpush1.msra.mxu0 0.0
      %4397 = vmatprep.subr.mxu0 0.0
      %4398 = vmatpush1.msra.mxu0 0.0
      %4399 = vmatprep.subr.mxu0 0.0
      %4400 = vmatpush1.msra.mxu0 0.0
      %4401 = vmatprep.subr.mxu0 0.0
      %4402 = vmatpush1.msra.mxu0 0.0
      %4403 = vmatprep.subr.mxu0 0.0
      %4404 = vmatpush1.msra.mxu0 0.0
      %4405 = vmatprep.subr.mxu0 0.0
      %4406 = vmatpush1.msra.mxu0 0.0
      %4407 = vmatprep.subr.mxu0 0.0
      %4408 = vmatpush1.msra.mxu0 0.0
      %4409 = vmatprep.subr.mxu0 0.0
      %4410 = vmatpush1.msra.mxu0 0.0
      %4411 = vmatprep.subr.mxu0 0.0
      %4412 = vmatpush1.msra.mxu0 0.0
      %4413 = vmatprep.subr.mxu0 0.0
      %4414 = vmatpush1.msra.mxu0 0.0
      %4415 = vmatprep.subr.mxu0 0.0
      %4416 = vmatpush1.msra.mxu0 0.0
      %4417 = vmatprep.subr.mxu0 0.0
      %4418 = vmatpush1.msra.mxu0 0.0
      %4419 = vmatprep.subr.mxu0 0.0
      %4420 = vmatpush1.msra.mxu0 0.0
      %4421 = vmatprep.subr.mxu0 0.0
      %4422 = vmatpush1.msra.mxu0 0.0
      %4423 = vmatprep.subr.mxu0 0.0
      %4424 = vmatpush1.msra.mxu0 0.0
      %4425 = vmatprep.subr.mxu0 0.0
      %4426 = vmatpush1.msra.mxu0 0.0
      %4427 = vmatprep.subr.mxu0 0.0
      %4428 = vmatpush1.msra.mxu0 0.0
      %4429 = vmatprep.mubr.f32.mxu0 0.0
      %4430 = vmatmul.mubr.f32.gmra.mrb[0].mxu0 %v4360
      %v4431 = vpop.f32.mrb[0].mxu0
      %v4432 = vadd.f32 0.0, %v4431
      %v4433 = vpop.f32.mrb[0].mxu0
      %4434 = vmatprep.mubr.f32.mxu0 0.0
      %4435 = vmatmul.mubr.f32.gmra.mrb[0].mxu0 %v4363
      %v4436 = vpop.f32.mrb[0].mxu0
      %v4437 = vadd.f32 0.0, %v4436
      %v4438 = vpop.f32.mrb[0].mxu0
      %4439 = vdwg.mxu0
      %v4441 = vsel %vm4190, %v4086, 0
      %v4444 = vsel %vm4190, %v4087, 0
      %4446 = vmatprep.subr.mxu0 0.0
      %4447 = vmatpush1.msra.mxu0 %v50
      %4448 = vmatprep.subr.mxu0 0.0
      %4449 = vmatpush1.msra.mxu0 %v4282
      %4450 = vmatprep.subr.mxu0 0.0
      %4451 = vmatpush1.msra.mxu0 0.0
      %4452 = vmatprep.subr.mxu0 0.0
      %4453 = vmatpush1.msra.mxu0 0.0
      %4454 = vmatprep.subr.mxu0 0.0
      %4455 = vmatpush1.msra.mxu0 0.0
      %4456 = vmatprep.subr.mxu0 0.0
      %4457 = vmatpush1.msra.mxu0 0.0
      %4458 = vmatprep.subr.mxu0 0.0
      %4459 = vmatpush1.msra.mxu0 0.0
      %4460 = vmatprep.subr.mxu0 0.0
      %4461 = vmatpush1.msra.mxu0 0.0
      %4462 = vmatprep.subr.mxu0 0.0
      %4463 = vmatpush1.msra.mxu0 0.0
      %4464 = vmatprep.subr.mxu0 0.0
      %4465 = vmatpush1.msra.mxu0 0.0
      %4466 = vmatprep.subr.mxu0 0.0
      %4467 = vmatpush1.msra.mxu0 0.0
      %4468 = vmatprep.subr.mxu0 0.0
      %4469 = vmatpush1.msra.mxu0 0.0
      %4470 = vmatprep.subr.mxu0 0.0
      %4471 = vmatpush1.msra.mxu0 0.0
      %4472 = vmatprep.subr.mxu0 0.0
      %4473 = vmatpush1.msra.mxu0 0.0
      %4474 = vmatprep.subr.mxu0 0.0
      %4475 = vmatpush1.msra.mxu0 0.0
      %4476 = vmatprep.subr.mxu0 0.0
      %4477 = vmatpush1.msra.mxu0 0.0
      %4478 = vmatprep.subr.mxu0 0.0
      %4479 = vmatpush1.msra.mxu0 0.0
      %4480 = vmatprep.subr.mxu0 0.0
      %4481 = vmatpush1.msra.mxu0 0.0
      %4482 = vmatprep.subr.mxu0 0.0
      %4483 = vmatpush1.msra.mxu0 0.0
      %4484 = vmatprep.subr.mxu0 0.0
      %4485 = vmatpush1.msra.mxu0 0.0
      %4486 = vmatprep.subr.mxu0 0.0
      %4487 = vmatpush1.msra.mxu0 0.0
      %4488 = vmatprep.subr.mxu0 0.0
      %4489 = vmatpush1.msra.mxu0 0.0
      %4490 = vmatprep.subr.mxu0 0.0
      %4491 = vmatpush1.msra.mxu0 0.0
      %4492 = vmatprep.subr.mxu0 0.0
      %4493 = vmatpush1.msra.mxu0 0.0
      %4494 = vmatprep.subr.mxu0 0.0
      %4495 = vmatpush1.msra.mxu0 0.0
      %4496 = vmatprep.subr.mxu0 0.0
      %4497 = vmatpush1.msra.mxu0 0.0
      %4498 = vmatprep.subr.mxu0 0.0
      %4499 = vmatpush1.msra.mxu0 0.0
      %4500 = vmatprep.subr.mxu0 0.0
      %4501 = vmatpush1.msra.mxu0 0.0
      %4502 = vmatprep.subr.mxu0 0.0
      %4503 = vmatpush1.msra.mxu0 0.0
      %4504 = vmatprep.subr.mxu0 0.0
      %4505 = vmatpush1.msra.mxu0 0.0
      %4506 = vmatprep.subr.mxu0 0.0
      %4507 = vmatpush1.msra.mxu0 0.0
      %4508 = vmatprep.subr.mxu0 0.0
      %4509 = vmatpush1.msra.mxu0 0.0
      %4510 = vmatprep.mubr.f32.mxu0 0.0
      %4511 = vmatmul.mubr.f32.gmra.mrb[0].mxu0 %v4441
      %v4512 = vpop.f32.mrb[0].mxu0
      %v4513 = vadd.f32 %v4432, %v4512
      %v4514 = vpop.f32.mrb[0].mxu0
      %4515 = vmatprep.mubr.f32.mxu0 0.0
      %4516 = vmatmul.mubr.f32.gmra.mrb[0].mxu0 %v4444
      %v4517 = vpop.f32.mrb[0].mxu0
      %v4518 = vadd.f32 %v4437, %v4517
      %v4519 = vpop.f32.mrb[0].mxu0
      %4520 = vdwg.mxu0
      %v4522 = vsel %vm4190, %v4171, 0
      %v4525 = vsel %vm4190, %v4172, 0
      %4527 = vmatprep.subr.mxu0 0.0
      %4528 = vmatpush1.msra.mxu0 %v58
      %4529 = vmatprep.subr.mxu0 0.0
      %4530 = vmatpush1.msra.mxu0 %v4198
      %4531 = vmatprep.subr.mxu0 0.0
      %4532 = vmatpush1.msra.mxu0 0.0
      %4533 = vmatprep.subr.mxu0 0.0
      %4534 = vmatpush1.msra.mxu0 0.0
      %4535 = vmatprep.subr.mxu0 0.0
      %4536 = vmatpush1.msra.mxu0 0.0
      %4537 = vmatprep.subr.mxu0 0.0
      %4538 = vmatpush1.msra.mxu0 0.0
      %4539 = vmatprep.subr.mxu0 0.0
      %4540 = vmatpush1.msra.mxu0 0.0
      %4541 = vmatprep.subr.mxu0 0.0
      %4542 = vmatpush1.msra.mxu0 0.0
      %4543 = vmatprep.subr.mxu0 0.0
      %4544 = vmatpush1.msra.mxu0 0.0
      %4545 = vmatprep.subr.mxu0 0.0
      %4546 = vmatpush1.msra.mxu0 0.0
      %4547 = vmatprep.subr.mxu0 0.0
      %4548 = vmatpush1.msra.mxu0 0.0
      %4549 = vmatprep.subr.mxu0 0.0
      %4550 = vmatpush1.msra.mxu0 0.0
      %4551 = vmatprep.subr.mxu0 0.0
      %4552 = vmatpush1.msra.mxu0 0.0
      %4553 = vmatprep.subr.mxu0 0.0
      %4554 = vmatpush1.msra.mxu0 0.0
      %4555 = vmatprep.subr.mxu0 0.0
      %4556 = vmatpush1.msra.mxu0 0.0
      %4557 = vmatprep.subr.mxu0 0.0
      %4558 = vmatpush1.msra.mxu0 0.0
      %4559 = vmatprep.subr.mxu0 0.0
      %4560 = vmatpush1.msra.mxu0 0.0
      %4561 = vmatprep.subr.mxu0 0.0
      %4562 = vmatpush1.msra.mxu0 0.0
      %4563 = vmatprep.subr.mxu0 0.0
      %4564 = vmatpush1.msra.mxu0 0.0
      %4565 = vmatprep.subr.mxu0 0.0
      %4566 = vmatpush1.msra.mxu0 0.0
      %4567 = vmatprep.subr.mxu0 0.0
      %4568 = vmatpush1.msra.mxu0 0.0
      %4569 = vmatprep.subr.mxu0 0.0
      %4570 = vmatpush1.msra.mxu0 0.0
      %4571 = vmatprep.subr.mxu0 0.0
      %4572 = vmatpush1.msra.mxu0 0.0
      %4573 = vmatprep.subr.mxu0 0.0
      %4574 = vmatpush1.msra.mxu0 0.0
      %4575 = vmatprep.subr.mxu0 0.0
      %4576 = vmatpush1.msra.mxu0 0.0
      %4577 = vmatprep.subr.mxu0 0.0
      %4578 = vmatpush1.msra.mxu0 0.0
      %4579 = vmatprep.subr.mxu0 0.0
      %4580 = vmatpush1.msra.mxu0 0.0
      %4581 = vmatprep.subr.mxu0 0.0
      %4582 = vmatpush1.msra.mxu0 0.0
      %4583 = vmatprep.subr.mxu0 0.0
      %4584 = vmatpush1.msra.mxu0 0.0
      %4585 = vmatprep.subr.mxu0 0.0
      %4586 = vmatpush1.msra.mxu0 0.0
      %4587 = vmatprep.subr.mxu0 0.0
      %4588 = vmatpush1.msra.mxu0 0.0
      %4589 = vmatprep.subr.mxu0 0.0
      %4590 = vmatpush1.msra.mxu0 0.0
      %4591 = vmatprep.mubr.f32.mxu0 0.0
      %4592 = vmatmul.mubr.f32.gmra.mrb[0].mxu0 %v4522
      %v4593 = vpop.f32.mrb[0].mxu0
      %v4594 = vadd.f32 0.0, %v4593
      %v4595 = vpop.f32.mrb[0].mxu0
      %4596 = vmatprep.mubr.f32.mxu0 0.0
      %4597 = vmatmul.mubr.f32.gmra.mrb[0].mxu0 %v4525
      %v4598 = vpop.f32.mrb[0].mxu0
      %v4599 = vadd.f32 0.0, %v4598
      %v4600 = vpop.f32.mrb[0].mxu0
      %4601 = vdwg.mxu0
      %v4603 = vsel %vm4190, %v4103, 0
      %v4606 = vsel %vm4190, %v4104, 0
      %4608 = vmatprep.subr.mxu0 0.0
      %4609 = vmatpush1.msra.mxu0 %v50
      %4610 = vmatprep.subr.mxu0 0.0
      %4611 = vmatpush1.msra.mxu0 %v4282
      %4612 = vmatprep.subr.mxu0 0.0
      %4613 = vmatpush1.msra.mxu0 0.0
      %4614 = vmatprep.subr.mxu0 0.0
      %4615 = vmatpush1.msra.mxu0 0.0
      %4616 = vmatprep.subr.mxu0 0.0
      %4617 = vmatpush1.msra.mxu0 0.0
      %4618 = vmatprep.subr.mxu0 0.0
      %4619 = vmatpush1.msra.mxu0 0.0
      %4620 = vmatprep.subr.mxu0 0.0
      %4621 = vmatpush1.msra.mxu0 0.0
      %4622 = vmatprep.subr.mxu0 0.0
      %4623 = vmatpush1.msra.mxu0 0.0
      %4624 = vmatprep.subr.mxu0 0.0
      %4625 = vmatpush1.msra.mxu0 0.0
      %4626 = vmatprep.subr.mxu0 0.0
      %4627 = vmatpush1.msra.mxu0 0.0
      %4628 = vmatprep.subr.mxu0 0.0
      %4629 = vmatpush1.msra.mxu0 0.0
      %4630 = vmatprep.subr.mxu0 0.0
      %4631 = vmatpush1.msra.mxu0 0.0
      %4632 = vmatprep.subr.mxu0 0.0
      %4633 = vmatpush1.msra.mxu0 0.0
      %4634 = vmatprep.subr.mxu0 0.0
      %4635 = vmatpush1.msra.mxu0 0.0
      %4636 = vmatprep.subr.mxu0 0.0
      %4637 = vmatpush1.msra.mxu0 0.0
      %4638 = vmatprep.subr.mxu0 0.0
      %4639 = vmatpush1.msra.mxu0 0.0
      %4640 = vmatprep.subr.mxu0 0.0
      %4641 = vmatpush1.msra.mxu0 0.0
      %4642 = vmatprep.subr.mxu0 0.0
      %4643 = vmatpush1.msra.mxu0 0.0
      %4644 = vmatprep.subr.mxu0 0.0
      %4645 = vmatpush1.msra.mxu0 0.0
      %4646 = vmatprep.subr.mxu0 0.0
      %4647 = vmatpush1.msra.mxu0 0.0
      %4648 = vmatprep.subr.mxu0 0.0
      %4649 = vmatpush1.msra.mxu0 0.0
      %4650 = vmatprep.subr.mxu0 0.0
      %4651 = vmatpush1.msra.mxu0 0.0
      %4652 = vmatprep.subr.mxu0 0.0
      %4653 = vmatpush1.msra.mxu0 0.0
      %4654 = vmatprep.subr.mxu0 0.0
      %4655 = vmatpush1.msra.mxu0 0.0
      %4656 = vmatprep.subr.mxu0 0.0
      %4657 = vmatpush1.msra.mxu0 0.0
      %4658 = vmatprep.subr.mxu0 0.0
      %4659 = vmatpush1.msra.mxu0 0.0
      %4660 = vmatprep.subr.mxu0 0.0
      %4661 = vmatpush1.msra.mxu0 0.0
      %4662 = vmatprep.subr.mxu0 0.0
      %4663 = vmatpush1.msra.mxu0 0.0
      %4664 = vmatprep.subr.mxu0 0.0
      %4665 = vmatpush1.msra.mxu0 0.0
      %4666 = vmatprep.subr.mxu0 0.0
      %4667 = vmatpush1.msra.mxu0 0.0
      %4668 = vmatprep.subr.mxu0 0.0
      %4669 = vmatpush1.msra.mxu0 0.0
      %4670 = vmatprep.subr.mxu0 0.0
      %4671 = vmatpush1.msra.mxu0 0.0
      %4672 = vmatprep.mubr.f32.mxu0 0.0
      %4673 = vmatmul.mubr.f32.gmra.mrb[0].mxu0 %v4603
      %v4674 = vpop.f32.mrb[0].mxu0
      %v4675 = vadd.f32 %v4594, %v4674
      %v4676 = vpop.f32.mrb[0].mxu0
      %4677 = vmatprep.mubr.f32.mxu0 0.0
      %4678 = vmatmul.mubr.f32.gmra.mrb[0].mxu0 %v4606
      %v4679 = vpop.f32.mrb[0].mxu0
      %v4680 = vadd.f32 %v4599, %v4679
      %v4681 = vpop.f32.mrb[0].mxu0
      %4682 = vdwg.mxu0
      %v4684 = vsel %vm4190, %v4188, 0
      %v4687 = vsel %vm4190, %v4189, 0
      %4689 = vmatprep.subr.mxu0 0.0
      %4690 = vmatpush1.msra.mxu0 %v58
      %4691 = vmatprep.subr.mxu0 0.0
      %4692 = vmatpush1.msra.mxu0 %v4198
      %4693 = vmatprep.subr.mxu0 0.0
      %4694 = vmatpush1.msra.mxu0 0.0
      %4695 = vmatprep.subr.mxu0 0.0
      %4696 = vmatpush1.msra.mxu0 0.0
      %4697 = vmatprep.subr.mxu0 0.0
      %4698 = vmatpush1.msra.mxu0 0.0
      %4699 = vmatprep.subr.mxu0 0.0
      %4700 = vmatpush1.msra.mxu0 0.0
      %4701 = vmatprep.subr.mxu0 0.0
      %4702 = vmatpush1.msra.mxu0 0.0
      %4703 = vmatprep.subr.mxu0 0.0
      %4704 = vmatpush1.msra.mxu0 0.0
      %4705 = vmatprep.subr.mxu0 0.0
      %4706 = vmatpush1.msra.mxu0 0.0
      %4707 = vmatprep.subr.mxu0 0.0
      %4708 = vmatpush1.msra.mxu0 0.0
      %4709 = vmatprep.subr.mxu0 0.0
      %4710 = vmatpush1.msra.mxu0 0.0
      %4711 = vmatprep.subr.mxu0 0.0
      %4712 = vmatpush1.msra.mxu0 0.0
      %4713 = vmatprep.subr.mxu0 0.0
      %4714 = vmatpush1.msra.mxu0 0.0
      %4715 = vmatprep.subr.mxu0 0.0
      %4716 = vmatpush1.msra.mxu0 0.0
      %4717 = vmatprep.subr.mxu0 0.0
      %4718 = vmatpush1.msra.mxu0 0.0
      %4719 = vmatprep.subr.mxu0 0.0
      %4720 = vmatpush1.msra.mxu0 0.0
      %4721 = vmatprep.subr.mxu0 0.0
      %4722 = vmatpush1.msra.mxu0 0.0
      %4723 = vmatprep.subr.mxu0 0.0
      %4724 = vmatpush1.msra.mxu0 0.0
      %4725 = vmatprep.subr.mxu0 0.0
      %4726 = vmatpush1.msra.mxu0 0.0
      %4727 = vmatprep.subr.mxu0 0.0
      %4728 = vmatpush1.msra.mxu0 0.0
      %4729 = vmatprep.subr.mxu0 0.0
      %4730 = vmatpush1.msra.mxu0 0.0
      %4731 = vmatprep.subr.mxu0 0.0
      %4732 = vmatpush1.msra.mxu0 0.0
      %4733 = vmatprep.subr.mxu0 0.0
      %4734 = vmatpush1.msra.mxu0 0.0
      %4735 = vmatprep.subr.mxu0 0.0
      %4736 = vmatpush1.msra.mxu0 0.0
      %4737 = vmatprep.subr.mxu0 0.0
      %4738 = vmatpush1.msra.mxu0 0.0
      %4739 = vmatprep.subr.mxu0 0.0
      %4740 = vmatpush1.msra.mxu0 0.0
      %4741 = vmatprep.subr.mxu0 0.0
      %4742 = vmatpush1.msra.mxu0 0.0
      %4743 = vmatprep.subr.mxu0 0.0
      %4744 = vmatpush1.msra.mxu0 0.0
      %4745 = vmatprep.subr.mxu0 0.0
      %4746 = vmatpush1.msra.mxu0 0.0
      %4747 = vmatprep.subr.mxu0 0.0
      %4748 = vmatpush1.msra.mxu0 0.0
      %4749 = vmatprep.subr.mxu0 0.0
      %4750 = vmatpush1.msra.mxu0 0.0
      %4751 = vmatprep.subr.mxu0 0.0
      %4752 = vmatpush1.msra.mxu0 0.0
      %4753 = vmatprep.mubr.f32.mxu0 0.0
      %4754 = vmatmul.mubr.f32.gmra.mrb[0].mxu0 %v4684
      %v4755 = vpop.f32.mrb[0].mxu0
      %v4756 = vadd.f32 0.0, %v4755
      %v4757 = vpop.f32.mrb[0].mxu0
      %4758 = vmatprep.mubr.f32.mxu0 0.0
      %4759 = vmatmul.mubr.f32.gmra.mrb[0].mxu0 %v4687
      %v4760 = vpop.f32.mrb[0].mxu0
      %v4761 = vadd.f32 0.0, %v4760
      %v4762 = vpop.f32.mrb[0].mxu0
      %4763 = vdwg.mxu0
      %v4765 = vsel %vm4190, %v4120, 0
      %v4768 = vsel %vm4190, %v4121, 0
      %4770 = vmatprep.subr.mxu0 0.0
      %4771 = vmatpush1.msra.mxu0 %v50
      %4772 = vmatprep.subr.mxu0 0.0
      %4773 = vmatpush1.msra.mxu0 %v4282
      %4774 = vmatprep.subr.mxu0 0.0
      %4775 = vmatpush1.msra.mxu0 0.0
      %4776 = vmatprep.subr.mxu0 0.0
      %4777 = vmatpush1.msra.mxu0 0.0
      %4778 = vmatprep.subr.mxu0 0.0
      %4779 = vmatpush1.msra.mxu0 0.0
      %4780 = vmatprep.subr.mxu0 0.0
      %4781 = vmatpush1.msra.mxu0 0.0
      %4782 = vmatprep.subr.mxu0 0.0
      %4783 = vmatpush1.msra.mxu0 0.0
      %4784 = vmatprep.subr.mxu0 0.0
      %4785 = vmatpush1.msra.mxu0 0.0
      %4786 = vmatprep.subr.mxu0 0.0
      %4787 = vmatpush1.msra.mxu0 0.0
      %4788 = vmatprep.subr.mxu0 0.0
      %4789 = vmatpush1.msra.mxu0 0.0
      %4790 = vmatprep.subr.mxu0 0.0
      %4791 = vmatpush1.msra.mxu0 0.0
      %4792 = vmatprep.subr.mxu0 0.0
      %4793 = vmatpush1.msra.mxu0 0.0
      %4794 = vmatprep.subr.mxu0 0.0
      %4795 = vmatpush1.msra.mxu0 0.0
      %4796 = vmatprep.subr.mxu0 0.0
      %4797 = vmatpush1.msra.mxu0 0.0
      %4798 = vmatprep.subr.mxu0 0.0
      %4799 = vmatpush1.msra.mxu0 0.0
      %4800 = vmatprep.subr.mxu0 0.0
      %4801 = vmatpush1.msra.mxu0 0.0
      %4802 = vmatprep.subr.mxu0 0.0
      %4803 = vmatpush1.msra.mxu0 0.0
      %4804 = vmatprep.subr.mxu0 0.0
      %4805 = vmatpush1.msra.mxu0 0.0
      %4806 = vmatprep.subr.mxu0 0.0
      %4807 = vmatpush1.msra.mxu0 0.0
      %4808 = vmatprep.subr.mxu0 0.0
      %4809 = vmatpush1.msra.mxu0 0.0
      %4810 = vmatprep.subr.mxu0 0.0
      %4811 = vmatpush1.msra.mxu0 0.0
      %4812 = vmatprep.subr.mxu0 0.0
      %4813 = vmatpush1.msra.mxu0 0.0
      %4814 = vmatprep.subr.mxu0 0.0
      %4815 = vmatpush1.msra.mxu0 0.0
      %4816 = vmatprep.subr.mxu0 0.0
      %4817 = vmatpush1.msra.mxu0 0.0
      %4818 = vmatprep.subr.mxu0 0.0
      %4819 = vmatpush1.msra.mxu0 0.0
      %4820 = vmatprep.subr.mxu0 0.0
      %4821 = vmatpush1.msra.mxu0 0.0
      %4822 = vmatprep.subr.mxu0 0.0
      %4823 = vmatpush1.msra.mxu0 0.0
      %4824 = vmatprep.subr.mxu0 0.0
      %4825 = vmatpush1.msra.mxu0 0.0
      %4826 = vmatprep.subr.mxu0 0.0
      %4827 = vmatpush1.msra.mxu0 0.0
      %4828 = vmatprep.subr.mxu0 0.0
      %4829 = vmatpush1.msra.mxu0 0.0
      %4830 = vmatprep.subr.mxu0 0.0
      %4831 = vmatpush1.msra.mxu0 0.0
      %4832 = vmatprep.subr.mxu0 0.0
      %4833 = vmatpush1.msra.mxu0 0.0
      %4834 = vmatprep.mubr.f32.mxu0 0.0
      %4835 = vmatmul.mubr.f32.gmra.mrb[0].mxu0 %v4765
      %v4836 = vpop.f32.mrb[0].mxu0
      %v4837 = vadd.f32 %v4756, %v4836
      %v4838 = vpop.f32.mrb[0].mxu0
      %4839 = vmatprep.mubr.f32.mxu0 0.0
      %4840 = vmatmul.mubr.f32.gmra.mrb[0].mxu0 %v4768
      %v4841 = vpop.f32.mrb[0].mxu0
      %v4842 = vadd.f32 %v4761, %v4841
      %v4843 = vpop.f32.mrb[0].mxu0
      %4844 = vdwg.mxu0
      %s4845 = scalar_lea.vmem %s3, %s66
      %vm4846 = vcmask 228352
      %4847 = vst.msk [vmem:[%s4845] sm:$0xff] %vm4846, %v4351
      %vm4848 = vcmask 226304
      %4849 = vst.msk [vmem:[%s4845 + $0x8] sm:$0x3f] %vm4848, %v4356
      %4850 = vst.msk [vmem:[%s4845 + $0x10] sm:$0xff] %vm4846, %v4513
      %4851 = vst.msk [vmem:[%s4845 + $0x18] sm:$0x3f] %vm4848, %v4518
      %4852 = vst.msk [vmem:[%s4845 + $0x20] sm:$0xff] %vm4846, %v4675
      %4853 = vst.msk [vmem:[%s4845 + $0x28] sm:$0x3f] %vm4848, %v4680
      %4854 = vst.msk [vmem:[%s4845 + $0x30] sm:$0xff] %vm4846, %v4837
      %4855 = vst.msk [vmem:[%s4845 + $0x38] sm:$0x3f] %vm4848, %v4842
    $region26: #{sp_conv_transpose2d.1} parent=1 // loop_footer
      %s65 = sadd.s32 1, %s61
    $region27: #{sp_conv_transpose2d.1} parent=1 // loop_footer_branch
      %60 = sbr.rel target = $region23
    $region28: #{sp_conv_transpose2d.1} parent=1 // loop_exit
      _
    // Predicated region
    $region29: #{sp_conv_transpose2d.1} parent=1 // pred_check
      _
    $region30: #{sp_conv_transpose2d.1} parent=1 // pred_check_branch
      %4857 = sbr.rel (0) target = $region32
    $region31: #{sp_conv_transpose2d.1} parent=1 // pred_region
      _
    $region32: #{sp_conv_transpose2d.1} parent=1 // pred_fallthru
      _
    // Predicated region
    $region33: #{sp_conv_transpose2d.1} parent=1 // pred_check
      _
    $region34: #{sp_conv_transpose2d.1} parent=1 // pred_check_branch
      %4859 = sbr.rel (0) target = $region36
    $region35: #{sp_conv_transpose2d.1} parent=1 // pred_region
      _
    $region36: #{sp_conv_transpose2d.1} parent=1 // pred_fallthru
      _
    %4860 = vsyncpa [#allocation3], 1
    %4861 = vsyncpa [#allocation5], 1

</llo_original>
